<compile_context>
chip_gen: v7x
topology: tpu7x:2x2x1
jax: 0.10.0
libtpu: 0.0.40
codegen_flags: <defaults>
</compile_context>

<pallas_src>
import functools
import math

import jax
import jax.numpy as jnp
from jax.experimental import pallas as pl
from jax.experimental.pallas import tpu as pltpu


PARAM_ORDER = [
    "W_ein", "b_ein", "W_eout", "b_eout", "b_iah", "b_oah",
    "Wi", "bi", "Wh", "bh",
    "Wq1", "Wk1", "Wq2", "Wk2",
    "Ww", "bw",
]


# ------------------------------- Pallas kernel -------------------------------
def _ls_agg_kernel(gnn_step, exact_softmax,
                   A_ref, h_ref, s_ref, mask_ref,
                   W_e, b_e, Wi_in, Wi_out, Wh, bi, bh,
                   Wqk1, Wqk2, Ww_h, Ww_s, bw,
                   out_h_ref, out_s_ref):
    f32 = jnp.float32
    Bt, N, D = h_ref.shape
    M = Bt * N
    cdt = W_e.dtype                           # MXU input dtype (bf16 default, f32 optional)
    inv_sqrt_d = 1.0 / math.sqrt(D)

    def mm(x, w):                             # MXU dot with f32 accumulation
        return jnp.dot(x, w, preferred_element_type=f32)

    # A_ref is (2, Bt, N, N) = [A_in batches | A_out batches]; merging the two leading dims is
    # layout-trivial (tiled dims unchanged) and lets the adjacency contraction run as one
    # 2*Bt-batch dot_general.
    A2 = A_ref[...].reshape(2 * Bt, N, N)

    # (Bt, N, D) -> (Bt*N, D): batch-packed so node-wise matmuls fill the MXU M dim.
    # Layout-trivial because N is padded to a multiple of 16 in the wrapper.
    hidden0 = h_ref[...].reshape(M, D)        # f32
    hidden0_c = hidden0.astype(cdt)           # single cast, reused for the final blend
    s3 = s_ref[...]                           # (Bt, 1, D) f32 star node
    mask3 = mask_ref[...]                     # (Bt, N, 1) f32 (0 = masked)

    sate = hidden0
    sate_c = hidden0_c
    for _ in range(gnn_step):                 # static unroll (gnn_step is small)
        # ------------------------- GGNN GRU cell -------------------------
        # Fused edge linear: columns [0,D) = linear_edge_in, [D,2D) = linear_edge_out.
        edge = mm(sate_c, W_e[...]) + b_e[...]                     # (M, 2D) f32
        gh = mm(sate_c, Wh[...]) + bh[...]                         # (M, 3D) f32

        e_in = edge[:, :D].astype(cdt).reshape(Bt, N, D)
        e_out = edge[:, D:].astype(cdt).reshape(Bt, N, D)
        e_cat = jnp.concatenate([e_in, e_out], axis=0)             # (2Bt, N, D)
        # Single batched (N,N)@(N,D) contraction for both directions.
        # TODO(synk): for very small N a VPU broadcast-multiply-accumulate would avoid the
        # per-batch MXU weight swaps entirely.
        inp = jax.lax.dot_general(A2, e_cat, (((2,), (1,)), ((0,), (0,))),
                                  preferred_element_type=f32)      # (2Bt, N, D)
        in_c = inp[:Bt].reshape(M, D).astype(cdt)
        out_c = inp[Bt:].reshape(M, D).astype(cdt)

        # Wide gate matmuls; b_iah/b_oah are folded into bi in the wrapper.
        gi = mm(in_c, Wi_in[...]) + mm(out_c, Wi_out[...]) + bi[...]   # (M, 3D) f32
        sg = jax.nn.sigmoid(gi + gh)          # slot r = reset, slot i = update, slot n unused
        reset_gate = sg[:, :D]
        update_gate = sg[:, D:2 * D]
        new_gate = jnp.tanh(reset_gate * gh[:, 2 * D:] + gi[:, 2 * D:])
        hs = (1.0 - update_gate) * sate + update_gate * new_gate

        # F.normalize(p=2, dim=-1, eps=1e-12) + residual:
        #   x / max(||x||, eps) == x * rsqrt(max(sum(x^2), eps^2))   (single EUP op)
        sumsq = jnp.sum(hs * hs, axis=-1, keepdims=True)
        sate = sate + hs * jax.lax.rsqrt(jnp.maximum(sumsq, 1e-24))

        # ------------------------------ PGAT ------------------------------
        # query_1/key_1 (and key_2/query_2) fused in the wrapper:
        #   q_items @ k_star.T == sate @ (Wq1 @ Wk1.T) @ star.T
        sate_c = sate.astype(cdt)
        qk1 = mm(sate_c, Wqk1[...]).reshape(Bt, N, D)              # f32
        attn = jnp.sum(qk1 * s3, axis=-1, keepdims=True) * inv_sqrt_d     # (Bt, N, 1)
        sate3 = (1.0 - attn) * sate.reshape(Bt, N, D) + attn * s3
        sate = sate3.reshape(M, D)
        sate_c = sate.astype(cdt)             # reused by qk2, the next iteration, and the blend

        qk2 = mm(sate_c, Wqk2[...]).reshape(Bt, N, D)
        logits = jnp.sum(qk2 * s3, axis=-1, keepdims=True) * inv_sqrt_d   # (Bt, N, 1)
        # NOTE: a fully-masked row yields NaN here, matching the PyTorch module exactly.
        logits = jnp.where(mask3 == 0.0, -jnp.inf, logits)
        mmax = jnp.max(logits, axis=1, keepdims=True)                     # (Bt, 1, 1)
        e = jnp.exp(logits - mmax)
        denom = jnp.sum(e, axis=1, keepdims=True)
        if exact_softmax:
            attn_s = e / denom
        else:
            attn_s = e * pl.reciprocal(denom, approx=True)
        s3 = jnp.sum(attn_s * sate3, axis=1, keepdims=True)               # (Bt, 1, D)

    # ---------------------- final sigmoid-gated blend ----------------------
    weight = jax.nn.sigmoid(mm(hidden0_c, Ww_h[...]) + mm(sate_c, Ww_s[...]) + bw[...])
    out = weight * hidden0 + (1.0 - weight) * sate
    out_h_ref[...] = out.reshape(Bt, N, D).astype(out_h_ref.dtype)
    out_s_ref[...] = s3.astype(out_s_ref.dtype)


# ------------------------------ wrapper helpers ------------------------------
def _ceil_to(x, m):
    return -(-int(x) // int(m)) * int(m)


def _padded_bytes(shape, itemsize):
    """VMEM footprint of one block, including (sublane, lane) tile padding."""
    shape = tuple(int(d) for d in shape)
    if len(shape) == 0:
        shape = (1, 1)
    elif len(shape) == 1:
        shape = (1,) + shape
    lead = 1
    for d in shape[:-2]:
        lead *= d
    sub_tile = 8 * max(1, 4 // itemsize)          # bf16 packs 16 sublanes per tile
    return lead * _ceil_to(shape[-2], sub_tile) * _ceil_to(shape[-1], 128) * itemsize


def _vmem_capacity_bytes():
    try:
        return int(pltpu.get_tpu_info().vmem_capacity_bytes)
    except Exception:
        pass
    try:
        kind = jax.devices()[0].device_kind.lower()
        if "v7" not in kind and "7x" not in kind:
            return 128 * 2**20
    except Exception:
        pass
    return 64 * 2**20                              # conservative default (v7x-sized)


def _tensorcores_per_chip():
    try:
        kind = jax.devices()[0].device_kind.lower()
        if "v7" in kind or "7x" in kind:
            return 2
    except Exception:
        pass
    return 1


def _vmem_limit_bytes(capacity):
    # ~96 MiB on 128 MiB parts (v5e/v6e), ~48 MiB on 64 MiB parts (v7x).
    return int(max(min(capacity - (16 << 20), 96 << 20), 24 << 20))


def _per_batch_bytes(Np, D, mxu_bytes):
    f32b = 4
    # Pipeline blocks (Pallas double-buffers every input/output block), per packed batch.
    blocks = (_padded_bytes((2, 1, Np, Np), mxu_bytes)     # A (in|out)
              + _padded_bytes((1, Np, D), f32b)            # hidden
              + _padded_bytes((1, 1, D), f32b)             # s_node
              + _padded_bytes((1, Np, 1), f32b)            # item_mask (lane-pads to 128)
              + _padded_bytes((1, Np, D), f32b)            # out_h
              + _padded_bytes((1, 1, D), f32b))            # out_s
    # Live in-kernel f32 intermediates (rough): ~10 D-wide, ~3 2D-wide, ~4 3D-wide (M, xD)
    # arrays per packed batch, all lane-padded.
    live = Np * (10 * _ceil_to(D, 128) + 3 * _ceil_to(2 * D, 128)
                 + 4 * _ceil_to(3 * D, 128)) * f32b
    return 2 * blocks + live


def _choose_bt(B, Np, D, mxu_bytes, param_bytes, vmem_limit, two_cores, min_rows=1024):
    """Batches packed per grid step: largest Bt that fits the honest VMEM estimate, targeting
    Bt*Np >= min_rows, capped at B (and at B//2 on 2-core chips so the grid has >= 2 blocks)."""
    fixed = 2 * param_bytes + (2 << 20)            # params are double-buffered + scratch margin
    budget = int(vmem_limit * 0.8) - fixed
    per_batch = _per_batch_bytes(Np, D, mxu_bytes)
    cap = max(1, budget // max(per_batch, 1))
    want = max(1, -(-min_rows // Np))
    bt = max(1, min(cap, want, B))
    if two_cores and B >= 2:
        bt = min(bt, max(1, B // 2))               # >= 2 grid blocks for megacore sharding
        g = -(-B // bt)
        if g > 1 and g % 2 == 1:
            bt = max(1, -(-B // (g + 1)))          # prefer an even number of grid blocks
    return bt


def _prepare_params(params, D, mxu_dtype):
    """Pre-fuse / pre-split the module parameters so the kernel issues wide matmuls and never
    slices weights: fused edge weight, per-half GRU gate weights, folded b_iah/b_oah, fused
    PGAT QK products, split blend weight."""
    f32 = jnp.float32

    def wcast(x):
        return x.astype(mxu_dtype)

    Wi = params["Wi"].astype(f32)                                  # (2D, 3D): rows [in | out]
    W_e = jnp.concatenate([params["W_ein"], params["W_eout"]], axis=1)    # (D, 2D)
    b_e = jnp.concatenate([params["b_ein"], params["b_eout"]], axis=1)    # (1, 2D)
    # Fold b_iah / b_oah into the input-gate bias:  (x+b) @ Wi == x @ Wi + b @ Wi.
    bi_fused = (params["bi"].astype(f32)
                + params["b_iah"].astype(f32) @ Wi[:D]
                + params["b_oah"].astype(f32) @ Wi[D:])            # (1, 3D)
    # Fused PGAT attention matrices: q @ k.T == x @ (Wq @ Wk.T) @ star.T
    Wqk1 = params["Wq1"] @ params["Wk1"].T
    Wqk2 = params["Wk2"] @ params["Wq2"].T
    Ww = params["Ww"]                                              # (2D, D): rows [hidden | sate]

    return [
        wcast(W_e), b_e.astype(f32),
        wcast(Wi[:D]), wcast(Wi[D:]), wcast(params["Wh"]),
        bi_fused, params["bh"].astype(f32),
        wcast(Wqk1), wcast(Wqk2),
        wcast(Ww[:D]), wcast(Ww[D:]), params["bw"].astype(f32),
    ]


def long_short_aggregator(A, adj, hidden, s_node, item_mask, params,
                          gnn_step=2, star_step=3, mxu_dtype=jnp.bfloat16):
    """Pallas implementation of LongShortAggregator.forward (default hybrid path).

    `adj` / `star_step` are accepted for signature parity only: with no_hybrid_gnn=False the
    PyTorch forward returns inside the first star_step iteration, so LocalAggregator / adj are
    never used.
    """
    del adj, star_step
    B, N, D = hidden.shape
    f32 = jnp.float32
    mxu_bytes = jnp.dtype(mxu_dtype).itemsize
    exact_softmax = jnp.dtype(mxu_dtype) == jnp.dtype(jnp.float32)

    # Pad N to a multiple of 16 (zero rows, mask 0) so bf16 (M,D)<->(Bt,N,D) reshapes inside
    # the kernel are copy-free.  Zero adjacency rows/cols keep real-node results bit-identical.
    Np = _ceil_to(N, 16)

    plist = _prepare_params(params, D, mxu_dtype)
    param_bytes = sum(_padded_bytes(p.shape, p.dtype.itemsize) for p in plist)

    capacity = _vmem_capacity_bytes()
    vmem_limit = _vmem_limit_bytes(capacity)
    two_cores = _tensorcores_per_chip() >= 2
    Bt = _choose_bt(B, Np, D, mxu_bytes, param_bytes, vmem_limit, two_cores)
    Bp = _ceil_to(B, Bt)
    grid = (Bp // Bt,)

    # Split + stack the GGNN adjacency so the kernel never slices the lane axis at column N and
    # the in/out contractions run as a single 2*Bt-batch dot_general; cast to the MXU dtype.
    A4 = A.reshape(B, N, 2, N).astype(mxu_dtype)
    pad_bnn = ((0, Bp - B), (0, Np - N), (0, Np - N))
    A_stk = jnp.stack([jnp.pad(A4[:, :, 0, :], pad_bnn),
                       jnp.pad(A4[:, :, 1, :], pad_bnn)], axis=0)      # (2, Bp, Np, Np)

    hidden_f = jnp.pad(hidden.astype(f32), ((0, Bp - B), (0, Np - N), (0, 0)))
    s_f = jnp.pad(s_node.reshape(B, 1, D).astype(f32), ((0, Bp - B), (0, 0), (0, 0)))
    # Padded nodes of real batches are masked out; fully padded batches get mask=1 so their
    # (discarded) softmax stays finite.
    mask3 = item_mask.reshape(B, N, 1).astype(f32)
    mask3 = jnp.pad(mask3, ((0, 0), (0, Np - N), (0, 0)))
    mask3 = jnp.pad(mask3, ((0, Bp - B), (0, 0), (0, 0)), constant_values=1.0)

    data_specs = [
        pl.BlockSpec((2, Bt, Np, Np), lambda b: (0, b, 0, 0)),   # A (in | out stacked)
        pl.BlockSpec((Bt, Np, D), lambda b: (b, 0, 0)),          # hidden
        pl.BlockSpec((Bt, 1, D), lambda b: (b, 0, 0)),           # s_node
        pl.BlockSpec((Bt, Np, 1), lambda b: (b, 0, 0)),          # item_mask
    ]
    # Weights/biases: whole-array blocks with a constant index map (re-DMA is skipped).
    # TODO(synk): single-buffer these with pipeline_mode=pl.Buffered(1) once buffer_count=1 is
    # reliably supported; today they are honestly double-counted in the Bt budget instead.
    param_specs = [pl.BlockSpec(p.shape, lambda b, nd=p.ndim: (0,) * nd) for p in plist]

    kernel = functools.partial(_ls_agg_kernel, gnn_step, bool(exact_softmax))
    out_h, out_s = pl.pallas_call(
        kernel,
        out_shape=(jax.ShapeDtypeStruct((Bp, Np, D), f32),
                   jax.ShapeDtypeStruct((Bp, 1, D), f32)),
        grid_spec=pltpu.PrefetchScalarGridSpec(
            num_scalar_prefetch=0,
            grid=grid,
            in_specs=data_specs + param_specs,
            out_specs=[pl.BlockSpec((Bt, Np, D), lambda b: (b, 0, 0)),
                       pl.BlockSpec((Bt, 1, D), lambda b: (b, 0, 0))],
        ),
        compiler_params=pltpu.CompilerParams(
            dimension_semantics=("parallel",),
            vmem_limit_bytes=vmem_limit),
    )(A_stk, hidden_f, s_f, mask3, *plist)
    return out_h[:B, :N], out_s[:B]


# ---------------------------- pure-JAX reference ----------------------------
def _reference(A, hidden, s_node, item_mask, params, gnn_step=2, dot_dtype=jnp.float32):
    """Pure-JAX reference.  With dot_dtype=float32 this is exactly the PyTorch module's math;
    with bfloat16 it applies the same dot-boundary casts as the bf16 kernel (the kernel
    additionally folds b_iah/b_oah into the gate bias, so bf16 agreement is to ~1e-2)."""
    cd = dot_dtype
    f32 = jnp.float32
    B, N, D = hidden.shape
    w = {k: (v.astype(cd) if k.startswith("W") else v.astype(f32)) for k, v in params.items()}
    Wqk1 = (params["Wq1"] @ params["Wk1"].T).astype(cd)
    Wqk2 = (params["Wk2"] @ params["Wq2"].T).astype(cd)

    def dot(x, wt):
        return jnp.einsum("...ij,jk->...ik", x.astype(cd), wt, preferred_element_type=f32)

    A_in = A[:, :, :N].astype(cd)
    A_out = A[:, :, N:].astype(cd)
    hidden0 = hidden.astype(f32)
    sate = hidden0
    s = s_node.astype(f32)                               # (B, 1, D)
    mask = item_mask[:, :, None]                         # (B, N, 1)
    for _ in range(gnn_step):
        edge_in = dot(sate, w["W_ein"]) + w["b_ein"]
        edge_out = dot(sate, w["W_eout"]) + w["b_eout"]
        input_in = jnp.einsum("bij,bjd->bid", A_in, edge_in.astype(cd),
                              preferred_element_type=f32) + w["b_iah"]
        input_out = jnp.einsum("bij,bjd->bid", A_out, edge_out.astype(cd),
                               preferred_element_type=f32) + w["b_oah"]
        gi = dot(input_in, w["Wi"][:D]) + dot(input_out, w["Wi"][D:]) + w["bi"]
        gh = dot(sate, w["Wh"]) + w["bh"]
        i_r, i_i, i_n = jnp.split(gi, 3, axis=-1)
        h_r, h_i, h_n = jnp.split(gh, 3, axis=-1)
        u = jax.nn.sigmoid(i_i + h_i)
        r = jax.nn.sigmoid(i_r + h_r)
        n = jnp.tanh(r * h_n + i_n)
        hs = (1.0 - u) * sate + u * n
        sumsq = jnp.sum(hs * hs, axis=-1, keepdims=True)
        sate = sate + hs * jax.lax.rsqrt(jnp.maximum(sumsq, 1e-24))

        qk1 = dot(sate, Wqk1)
        attn = jnp.sum(qk1 * s, axis=-1, keepdims=True) / math.sqrt(D)    # (B, N, 1)
        sate = (1.0 - attn) * sate + attn * s
        qk2 = dot(sate, Wqk2)
        logits = jnp.sum(qk2 * s, axis=-1, keepdims=True) / math.sqrt(D)  # (B, N, 1)
        logits = jnp.where(mask == 0, -jnp.inf, logits)
        attn_s = jax.nn.softmax(logits, axis=1)
        s = jnp.sum(attn_s * sate, axis=1, keepdims=True)                 # (B, 1, D)

    weight = jax.nn.sigmoid(dot(hidden0, w["Ww"][:D]) + dot(sate, w["Ww"][D:]) + w["bw"])
    sate = weight * hidden0 + (1.0 - weight) * sate
    return sate, s


def init_params(key, dim):
    D = dim
    keys = jax.random.split(key, len(PARAM_ORDER))
    shapes = {
        "W_ein": (D, D), "b_ein": (1, D),
        "W_eout": (D, D), "b_eout": (1, D),
        "b_iah": (1, D), "b_oah": (1, D),
        "Wi": (2 * D, 3 * D), "bi": (1, 3 * D),
        "Wh": (D, 3 * D), "bh": (1, 3 * D),
        "Wq1": (D, D), "Wk1": (D, D), "Wq2": (D, D), "Wk2": (D, D),
        "Ww": (2 * D, D), "bw": (1, D),
    }
    return {name: 0.1 * jax.random.normal(k, shapes[name], jnp.float32)
            for name, k in zip(PARAM_ORDER, keys)}


if __name__ == "__main__":
    B, N, D = 2, 8, 32
    key = jax.random.PRNGKey(0)
    k_h, k_s, k_a, k_p = jax.random.split(key, 4)

    hidden = jax.random.normal(k_h, (B, N, D), jnp.float32)
    s_node = jax.random.normal(k_s, (B, 1, D), jnp.float32)
    A = jax.random.uniform(k_a, (B, N, 2 * N), jnp.float32)
    adj = jnp.zeros((B, N, N), jnp.int32)       # unused on the hybrid path
    item_mask = jnp.concatenate(
        [jnp.ones((B, 6), jnp.float32), jnp.zeros((B, N - 6), jnp.float32)], axis=-1)
    params = init_params(k_p, D)

    # f32-MXU path: checks the exact module semantics against the pure-JAX reference.
    out_h32, out_s32 = long_short_aggregator(A, adj, hidden, s_node, item_mask, params,
                                             mxu_dtype=jnp.float32)
    out_h32 = jax.block_until_ready(out_h32)
    out_s32 = jax.block_until_ready(out_s32)
    ref_h32, ref_s32 = _reference(A, hidden, s_node, item_mask, params, dot_dtype=jnp.float32)
    assert out_h32.shape == (B, N, D) and out_s32.shape == (B, 1, D)
    assert bool(jnp.all(jnp.isfinite(out_h32))) and bool(jnp.all(jnp.isfinite(out_s32)))
    assert bool(jnp.allclose(out_h32, ref_h32, rtol=2e-2, atol=2e-2))
    assert bool(jnp.allclose(out_s32, ref_s32, rtol=2e-2, atol=2e-2))

    # bf16-MXU path (default / performance configuration): checked against a reference that
    # applies the same dot-boundary casts (looser tolerance: the kernel also folds
    # b_iah/b_oah into the gate bias, a ~1e-2 structural difference under bf16 rounding).
    out_h, out_s = long_short_aggregator(A, adj, hidden, s_node, item_mask, params)
    out_h = jax.block_until_ready(out_h)
    out_s = jax.block_until_ready(out_s)
    ref_h, ref_s = _reference(A, hidden, s_node, item_mask, params, dot_dtype=jnp.bfloat16)
    assert bool(jnp.all(jnp.isfinite(out_h))) and bool(jnp.all(jnp.isfinite(out_s)))
    assert bool(jnp.allclose(out_h, ref_h, rtol=4e-2, atol=4e-2))
    assert bool(jnp.allclose(out_s, ref_s, rtol=4e-2, atol=4e-2))

    print("KERNEL_OK")
</pallas_src>

<mosaic_0001>
module attributes {stable_mosaic.version = 11 : i64} {
  func.func @_ls_agg_kernel(%arg0: i32, %arg1: memref<2x2x16x16xf32, #tpu.memory_space<vmem>>, %arg2: memref<2x16x32xf32, #tpu.memory_space<vmem>>, %arg3: memref<2x1x32xf32, #tpu.memory_space<vmem>>, %arg4: memref<2x16x1xf32, #tpu.memory_space<vmem>>, %arg5: memref<32x64xf32, #tpu.memory_space<vmem>>, %arg6: memref<1x64xf32, #tpu.memory_space<vmem>>, %arg7: memref<32x96xf32, #tpu.memory_space<vmem>>, %arg8: memref<32x96xf32, #tpu.memory_space<vmem>>, %arg9: memref<32x96xf32, #tpu.memory_space<vmem>>, %arg10: memref<1x96xf32, #tpu.memory_space<vmem>>, %arg11: memref<1x96xf32, #tpu.memory_space<vmem>>, %arg12: memref<32x32xf32, #tpu.memory_space<vmem>>, %arg13: memref<32x32xf32, #tpu.memory_space<vmem>>, %arg14: memref<32x32xf32, #tpu.memory_space<vmem>>, %arg15: memref<32x32xf32, #tpu.memory_space<vmem>>, %arg16: memref<1x32xf32, #tpu.memory_space<vmem>>, %arg17: memref<2x16x32xf32, #tpu.memory_space<vmem>>, %arg18: memref<2x1x32xf32, #tpu.memory_space<vmem>>) attributes {dimension_semantics = [#tpu.dimension_semantics<parallel>], iteration_bounds = array<i64: 1>, scalar_prefetch = 0 : i64, scratch_operands = 0 : i64, tpu.core_type = #tpu.core_type<tc>, window_params = [{transform_indices = @transform_0, window_bounds = array<i64: 2, 2, 16, 16>}, {transform_indices = @transform_1, window_bounds = array<i64: 2, 16, 32>}, {transform_indices = @transform_2, window_bounds = array<i64: 2, 1, 32>}, {transform_indices = @transform_3, window_bounds = array<i64: 2, 16, 1>}, {pipeline_mode = #tpu.pipeline_mode<synchronous>, transform_indices = @transform_4, window_bounds = array<i64: 32, 64>}, {pipeline_mode = #tpu.pipeline_mode<synchronous>, transform_indices = @transform_5, window_bounds = array<i64: 1, 64>}, {pipeline_mode = #tpu.pipeline_mode<synchronous>, transform_indices = @transform_6, window_bounds = array<i64: 32, 96>}, {pipeline_mode = #tpu.pipeline_mode<synchronous>, transform_indices = @transform_7, window_bounds = array<i64: 32, 96>}, {pipeline_mode = #tpu.pipeline_mode<synchronous>, transform_indices = @transform_8, window_bounds = array<i64: 32, 96>}, {pipeline_mode = #tpu.pipeline_mode<synchronous>, transform_indices = @transform_9, window_bounds = array<i64: 1, 96>}, {pipeline_mode = #tpu.pipeline_mode<synchronous>, transform_indices = @transform_10, window_bounds = array<i64: 1, 96>}, {pipeline_mode = #tpu.pipeline_mode<synchronous>, transform_indices = @transform_11, window_bounds = array<i64: 32, 32>}, {pipeline_mode = #tpu.pipeline_mode<synchronous>, transform_indices = @transform_12, window_bounds = array<i64: 32, 32>}, {pipeline_mode = #tpu.pipeline_mode<synchronous>, transform_indices = @transform_13, window_bounds = array<i64: 32, 32>}, {pipeline_mode = #tpu.pipeline_mode<synchronous>, transform_indices = @transform_14, window_bounds = array<i64: 32, 32>}, {pipeline_mode = #tpu.pipeline_mode<synchronous>, transform_indices = @transform_15, window_bounds = array<i64: 1, 32>}, {transform_indices = @transform_16, window_bounds = array<i64: 2, 16, 32>}, {transform_indices = @transform_17, window_bounds = array<i64: 2, 1, 32>}]} {
    %c0 = arith.constant 0 : index
    %c0_0 = arith.constant 0 : index
    %c0_1 = arith.constant 0 : index
    %c0_2 = arith.constant 0 : index
    %0 = vector.load %arg1[%c0, %c0_0, %c0_1, %c0_2] : memref<2x2x16x16xf32, #tpu.memory_space<vmem>>, vector<2x2x16x16xf32>
    %1 = vector.shape_cast %0 : vector<2x2x16x16xf32> to vector<4x16x16xf32>
    %c0_3 = arith.constant 0 : index
    %c0_4 = arith.constant 0 : index
    %c0_5 = arith.constant 0 : index
    %2 = vector.load %arg2[%c0_3, %c0_4, %c0_5] : memref<2x16x32xf32, #tpu.memory_space<vmem>>, vector<2x16x32xf32>
    %3 = vector.shape_cast %2 : vector<2x16x32xf32> to vector<32x32xf32>
    %c0_6 = arith.constant 0 : index
    %c0_7 = arith.constant 0 : index
    %c0_8 = arith.constant 0 : index
    %4 = vector.load %arg3[%c0_6, %c0_7, %c0_8] : memref<2x1x32xf32, #tpu.memory_space<vmem>>, vector<2x1x32xf32>
    %c0_9 = arith.constant 0 : index
    %c0_10 = arith.constant 0 : index
    %c0_11 = arith.constant 0 : index
    %5 = vector.load %arg4[%c0_9, %c0_10, %c0_11] : memref<2x16x1xf32, #tpu.memory_space<vmem>>, vector<2x16x1xf32>
    %c0_12 = arith.constant 0 : index
    %c0_13 = arith.constant 0 : index
    %6 = vector.load %arg5[%c0_12, %c0_13] : memref<32x64xf32, #tpu.memory_space<vmem>>, vector<32x64xf32>
    %cst = arith.constant dense<0.000000e+00> : vector<32x64xf32>
    %7 = tpu.matmul %3, %6, %cst {dimension_numbers = #tpu.dot_dimension_numbers<[1], [0], [0], [1], [0, 0, 1, 1], [], []>} : vector<32x32xf32>, vector<32x64xf32>, vector<32x64xf32> -> vector<32x64xf32>
    %c0_14 = arith.constant 0 : index
    %c0_15 = arith.constant 0 : index
    %8 = vector.load %arg6[%c0_14, %c0_15] : memref<1x64xf32, #tpu.memory_space<vmem>>, vector<1x64xf32>
    %9 = vector.broadcast %8 : vector<1x64xf32> to vector<32x64xf32>
    %10 = arith.addf %7, %9 : vector<32x64xf32>
    %c0_16 = arith.constant 0 : index
    %c0_17 = arith.constant 0 : index
    %11 = vector.load %arg9[%c0_16, %c0_17] : memref<32x96xf32, #tpu.memory_space<vmem>>, vector<32x96xf32>
    %cst_18 = arith.constant dense<0.000000e+00> : vector<32x96xf32>
    %12 = tpu.matmul %3, %11, %cst_18 {dimension_numbers = #tpu.dot_dimension_numbers<[1], [0], [0], [1], [0, 0, 1, 1], [], []>} : vector<32x32xf32>, vector<32x96xf32>, vector<32x96xf32> -> vector<32x96xf32>
    %c0_19 = arith.constant 0 : index
    %c0_20 = arith.constant 0 : index
    %13 = vector.load %arg11[%c0_19, %c0_20] : memref<1x96xf32, #tpu.memory_space<vmem>>, vector<1x96xf32>
    %14 = vector.broadcast %13 : vector<1x96xf32> to vector<32x96xf32>
    %15 = arith.addf %12, %14 : vector<32x96xf32>
    %16 = vector.extract_strided_slice %10 {offsets = [0, 0], sizes = [32, 32], strides = [1, 1]} : vector<32x64xf32> to vector<32x32xf32>
    %17 = vector.shape_cast %16 : vector<32x32xf32> to vector<2x16x32xf32>
    %18 = vector.extract_strided_slice %10 {offsets = [0, 32], sizes = [32, 32], strides = [1, 1]} : vector<32x64xf32> to vector<32x32xf32>
    %19 = vector.shape_cast %18 : vector<32x32xf32> to vector<2x16x32xf32>
    %20 = tpu.concatenate %17, %19 in 0 : vector<2x16x32xf32>, vector<2x16x32xf32> -> vector<4x16x32xf32>
    %cst_21 = arith.constant dense<0.000000e+00> : vector<4x16x32xf32>
    %21 = tpu.matmul %1, %20, %cst_21 {dimension_numbers = #tpu.dot_dimension_numbers<[2], [1], [1], [2], [0, 0, 0, 1, 1, 2], [0], [0]>} : vector<4x16x16xf32>, vector<4x16x32xf32>, vector<4x16x32xf32> -> vector<4x16x32xf32>
    %22 = vector.extract_strided_slice %21 {offsets = [0, 0, 0], sizes = [2, 16, 32], strides = [1, 1, 1]} : vector<4x16x32xf32> to vector<2x16x32xf32>
    %23 = vector.shape_cast %22 : vector<2x16x32xf32> to vector<32x32xf32>
    %24 = vector.extract_strided_slice %21 {offsets = [2, 0, 0], sizes = [2, 16, 32], strides = [1, 1, 1]} : vector<4x16x32xf32> to vector<2x16x32xf32>
    %25 = vector.shape_cast %24 : vector<2x16x32xf32> to vector<32x32xf32>
    %c0_22 = arith.constant 0 : index
    %c0_23 = arith.constant 0 : index
    %26 = vector.load %arg7[%c0_22, %c0_23] : memref<32x96xf32, #tpu.memory_space<vmem>>, vector<32x96xf32>
    %cst_24 = arith.constant dense<0.000000e+00> : vector<32x96xf32>
    %27 = tpu.matmul %23, %26, %cst_24 {dimension_numbers = #tpu.dot_dimension_numbers<[1], [0], [0], [1], [0, 0, 1, 1], [], []>} : vector<32x32xf32>, vector<32x96xf32>, vector<32x96xf32> -> vector<32x96xf32>
    %c0_25 = arith.constant 0 : index
    %c0_26 = arith.constant 0 : index
    %28 = vector.load %arg8[%c0_25, %c0_26] : memref<32x96xf32, #tpu.memory_space<vmem>>, vector<32x96xf32>
    %cst_27 = arith.constant dense<0.000000e+00> : vector<32x96xf32>
    %29 = tpu.matmul %25, %28, %cst_27 {dimension_numbers = #tpu.dot_dimension_numbers<[1], [0], [0], [1], [0, 0, 1, 1], [], []>} : vector<32x32xf32>, vector<32x96xf32>, vector<32x96xf32> -> vector<32x96xf32>
    %30 = arith.addf %27, %29 : vector<32x96xf32>
    %c0_28 = arith.constant 0 : index
    %c0_29 = arith.constant 0 : index
    %31 = vector.load %arg10[%c0_28, %c0_29] : memref<1x96xf32, #tpu.memory_space<vmem>>, vector<1x96xf32>
    %32 = vector.broadcast %31 : vector<1x96xf32> to vector<32x96xf32>
    %33 = arith.addf %30, %32 : vector<32x96xf32>
    %34 = arith.addf %33, %15 : vector<32x96xf32>
    %35 = arith.negf %34 : vector<32x96xf32>
    %36 = math.exp %35 : vector<32x96xf32>
    %cst_30 = arith.constant 1.000000e+00 : f32
    %37 = vector.broadcast %cst_30 : f32 to vector<32x96xf32>
    %38 = arith.addf %37, %36 : vector<32x96xf32>
    %39 = arith.divf %37, %38 : vector<32x96xf32>
    %40 = vector.extract_strided_slice %39 {offsets = [0, 0], sizes = [32, 32], strides = [1, 1]} : vector<32x96xf32> to vector<32x32xf32>
    %41 = vector.extract_strided_slice %39 {offsets = [0, 32], sizes = [32, 32], strides = [1, 1]} : vector<32x96xf32> to vector<32x32xf32>
    %42 = vector.extract_strided_slice %15 {offsets = [0, 64], sizes = [32, 32], strides = [1, 1]} : vector<32x96xf32> to vector<32x32xf32>
    %43 = arith.mulf %40, %42 : vector<32x32xf32>
    %44 = vector.extract_strided_slice %33 {offsets = [0, 64], sizes = [32, 32], strides = [1, 1]} : vector<32x96xf32> to vector<32x32xf32>
    %45 = arith.addf %43, %44 : vector<32x32xf32>
    %46 = math.tanh %45 : vector<32x32xf32>
    %cst_31 = arith.constant 1.000000e+00 : f32
    %47 = vector.broadcast %cst_31 : f32 to vector<32x32xf32>
    %48 = arith.subf %47, %41 : vector<32x32xf32>
    %49 = arith.mulf %48, %3 : vector<32x32xf32>
    %50 = arith.mulf %41, %46 : vector<32x32xf32>
    %51 = arith.addf %49, %50 : vector<32x32xf32>
    %52 = arith.mulf %51, %51 : vector<32x32xf32>
    %cst_32 = arith.constant dense<0.000000e+00> : vector<32xf32>
    %53 = vector.multi_reduction <add>, %52, %cst_32 [1] : vector<32x32xf32> to vector<32xf32>
    %54 = vector.shape_cast %53 : vector<32xf32> to vector<32x1xf32>
    %cst_33 = arith.constant 1.000000e-24 : f32
    %55 = vector.broadcast %cst_33 : f32 to vector<32x1xf32>
    %56 = arith.maximumf %54, %55 : vector<32x1xf32>
    %57 = math.rsqrt %56 : vector<32x1xf32>
    %58 = vector.broadcast %57 : vector<32x1xf32> to vector<32x32xf32>
    %59 = arith.mulf %51, %58 : vector<32x32xf32>
    %60 = arith.addf %3, %59 : vector<32x32xf32>
    %c0_34 = arith.constant 0 : index
    %c0_35 = arith.constant 0 : index
    %61 = vector.load %arg12[%c0_34, %c0_35] : memref<32x32xf32, #tpu.memory_space<vmem>>, vector<32x32xf32>
    %cst_36 = arith.constant dense<0.000000e+00> : vector<32x32xf32>
    %62 = tpu.matmul %60, %61, %cst_36 {dimension_numbers = #tpu.dot_dimension_numbers<[1], [0], [0], [1], [0, 0, 1, 1], [], []>} : vector<32x32xf32>, vector<32x32xf32>, vector<32x32xf32> -> vector<32x32xf32>
    %63 = vector.shape_cast %62 : vector<32x32xf32> to vector<2x16x32xf32>
    %64 = vector.broadcast %4 : vector<2x1x32xf32> to vector<2x16x32xf32>
    %65 = arith.mulf %63, %64 : vector<2x16x32xf32>
    %cst_37 = arith.constant dense<0.000000e+00> : vector<2x16xf32>
    %66 = vector.multi_reduction <add>, %65, %cst_37 [2] : vector<2x16x32xf32> to vector<2x16xf32>
    %67 = vector.shape_cast %66 : vector<2x16xf32> to vector<2x16x1xf32>
    %cst_38 = arith.constant 0.176776692 : f32
    %68 = vector.broadcast %cst_38 : f32 to vector<2x16x1xf32>
    %69 = arith.mulf %67, %68 : vector<2x16x1xf32>
    %cst_39 = arith.constant 1.000000e+00 : f32
    %70 = vector.broadcast %cst_39 : f32 to vector<2x16x1xf32>
    %71 = arith.subf %70, %69 : vector<2x16x1xf32>
    %72 = vector.shape_cast %60 : vector<32x32xf32> to vector<2x16x32xf32>
    %73 = vector.broadcast %71 : vector<2x16x1xf32> to vector<2x16x32xf32>
    %74 = arith.mulf %73, %72 : vector<2x16x32xf32>
    %75 = vector.broadcast %69 : vector<2x16x1xf32> to vector<2x16x32xf32>
    %76 = vector.broadcast %4 : vector<2x1x32xf32> to vector<2x16x32xf32>
    %77 = arith.mulf %75, %76 : vector<2x16x32xf32>
    %78 = arith.addf %74, %77 : vector<2x16x32xf32>
    %79 = vector.shape_cast %78 : vector<2x16x32xf32> to vector<32x32xf32>
    %c0_40 = arith.constant 0 : index
    %c0_41 = arith.constant 0 : index
    %80 = vector.load %arg13[%c0_40, %c0_41] : memref<32x32xf32, #tpu.memory_space<vmem>>, vector<32x32xf32>
    %cst_42 = arith.constant dense<0.000000e+00> : vector<32x32xf32>
    %81 = tpu.matmul %79, %80, %cst_42 {dimension_numbers = #tpu.dot_dimension_numbers<[1], [0], [0], [1], [0, 0, 1, 1], [], []>} : vector<32x32xf32>, vector<32x32xf32>, vector<32x32xf32> -> vector<32x32xf32>
    %82 = vector.shape_cast %81 : vector<32x32xf32> to vector<2x16x32xf32>
    %83 = vector.broadcast %4 : vector<2x1x32xf32> to vector<2x16x32xf32>
    %84 = arith.mulf %82, %83 : vector<2x16x32xf32>
    %cst_43 = arith.constant dense<0.000000e+00> : vector<2x16xf32>
    %85 = vector.multi_reduction <add>, %84, %cst_43 [2] : vector<2x16x32xf32> to vector<2x16xf32>
    %86 = vector.shape_cast %85 : vector<2x16xf32> to vector<2x16x1xf32>
    %cst_44 = arith.constant 0.176776692 : f32
    %87 = vector.broadcast %cst_44 : f32 to vector<2x16x1xf32>
    %88 = arith.mulf %86, %87 : vector<2x16x1xf32>
    %cst_45 = arith.constant 0.000000e+00 : f32
    %89 = vector.broadcast %cst_45 : f32 to vector<2x16x1xf32>
    %90 = arith.cmpf oeq, %5, %89 : vector<2x16x1xf32>
    %cst_46 = arith.constant 0xFF800000 : f32
    %91 = vector.broadcast %cst_46 : f32 to vector<2x16x1xf32>
    %92 = arith.select %90, %91, %88 : vector<2x16x1xi1>, vector<2x16x1xf32>
    %cst_47 = arith.constant dense<0xFF800000> : vector<2x1xf32>
    %93 = vector.multi_reduction <maximumf>, %92, %cst_47 [1] : vector<2x16x1xf32> to vector<2x1xf32>
    %94 = vector.shape_cast %93 : vector<2x1xf32> to vector<2x1x1xf32>
    %95 = vector.broadcast %94 : vector<2x1x1xf32> to vector<2x16x1xf32>
    %96 = arith.subf %92, %95 : vector<2x16x1xf32>
    %97 = math.exp %96 : vector<2x16x1xf32>
    %cst_48 = arith.constant dense<0.000000e+00> : vector<2x1xf32>
    %98 = vector.multi_reduction <add>, %97, %cst_48 [1] : vector<2x16x1xf32> to vector<2x1xf32>
    %99 = vector.shape_cast %98 : vector<2x1xf32> to vector<2x1x1xf32>
    %100 = vector.broadcast %99 : vector<2x1x1xf32> to vector<2x16x1xf32>
    %101 = arith.divf %97, %100 : vector<2x16x1xf32>
    %102 = vector.broadcast %101 : vector<2x16x1xf32> to vector<2x16x32xf32>
    %103 = arith.mulf %102, %78 : vector<2x16x32xf32>
    %cst_49 = arith.constant dense<0.000000e+00> : vector<2x32xf32>
    %104 = vector.multi_reduction <add>, %103, %cst_49 [1] : vector<2x16x32xf32> to vector<2x32xf32>
    %105 = vector.shape_cast %104 : vector<2x32xf32> to vector<2x1x32xf32>
    %c0_50 = arith.constant 0 : index
    %c0_51 = arith.constant 0 : index
    %106 = vector.load %arg5[%c0_50, %c0_51] : memref<32x64xf32, #tpu.memory_space<vmem>>, vector<32x64xf32>
    %cst_52 = arith.constant dense<0.000000e+00> : vector<32x64xf32>
    %107 = tpu.matmul %79, %106, %cst_52 {dimension_numbers = #tpu.dot_dimension_numbers<[1], [0], [0], [1], [0, 0, 1, 1], [], []>} : vector<32x32xf32>, vector<32x64xf32>, vector<32x64xf32> -> vector<32x64xf32>
    %c0_53 = arith.constant 0 : index
    %c0_54 = arith.constant 0 : index
    %108 = vector.load %arg6[%c0_53, %c0_54] : memref<1x64xf32, #tpu.memory_space<vmem>>, vector<1x64xf32>
    %109 = vector.broadcast %108 : vector<1x64xf32> to vector<32x64xf32>
    %110 = arith.addf %107, %109 : vector<32x64xf32>
    %c0_55 = arith.constant 0 : index
    %c0_56 = arith.constant 0 : index
    %111 = vector.load %arg9[%c0_55, %c0_56] : memref<32x96xf32, #tpu.memory_space<vmem>>, vector<32x96xf32>
    %cst_57 = arith.constant dense<0.000000e+00> : vector<32x96xf32>
    %112 = tpu.matmul %79, %111, %cst_57 {dimension_numbers = #tpu.dot_dimension_numbers<[1], [0], [0], [1], [0, 0, 1, 1], [], []>} : vector<32x32xf32>, vector<32x96xf32>, vector<32x96xf32> -> vector<32x96xf32>
    %c0_58 = arith.constant 0 : index
    %c0_59 = arith.constant 0 : index
    %113 = vector.load %arg11[%c0_58, %c0_59] : memref<1x96xf32, #tpu.memory_space<vmem>>, vector<1x96xf32>
    %114 = vector.broadcast %113 : vector<1x96xf32> to vector<32x96xf32>
    %115 = arith.addf %112, %114 : vector<32x96xf32>
    %116 = vector.extract_strided_slice %110 {offsets = [0, 0], sizes = [32, 32], strides = [1, 1]} : vector<32x64xf32> to vector<32x32xf32>
    %117 = vector.shape_cast %116 : vector<32x32xf32> to vector<2x16x32xf32>
    %118 = vector.extract_strided_slice %110 {offsets = [0, 32], sizes = [32, 32], strides = [1, 1]} : vector<32x64xf32> to vector<32x32xf32>
    %119 = vector.shape_cast %118 : vector<32x32xf32> to vector<2x16x32xf32>
    %120 = tpu.concatenate %117, %119 in 0 : vector<2x16x32xf32>, vector<2x16x32xf32> -> vector<4x16x32xf32>
    %cst_60 = arith.constant dense<0.000000e+00> : vector<4x16x32xf32>
    %121 = tpu.matmul %1, %120, %cst_60 {dimension_numbers = #tpu.dot_dimension_numbers<[2], [1], [1], [2], [0, 0, 0, 1, 1, 2], [0], [0]>} : vector<4x16x16xf32>, vector<4x16x32xf32>, vector<4x16x32xf32> -> vector<4x16x32xf32>
    %122 = vector.extract_strided_slice %121 {offsets = [0, 0, 0], sizes = [2, 16, 32], strides = [1, 1, 1]} : vector<4x16x32xf32> to vector<2x16x32xf32>
    %123 = vector.shape_cast %122 : vector<2x16x32xf32> to vector<32x32xf32>
    %124 = vector.extract_strided_slice %121 {offsets = [2, 0, 0], sizes = [2, 16, 32], strides = [1, 1, 1]} : vector<4x16x32xf32> to vector<2x16x32xf32>
    %125 = vector.shape_cast %124 : vector<2x16x32xf32> to vector<32x32xf32>
    %c0_61 = arith.constant 0 : index
    %c0_62 = arith.constant 0 : index
    %126 = vector.load %arg7[%c0_61, %c0_62] : memref<32x96xf32, #tpu.memory_space<vmem>>, vector<32x96xf32>
    %cst_63 = arith.constant dense<0.000000e+00> : vector<32x96xf32>
    %127 = tpu.matmul %123, %126, %cst_63 {dimension_numbers = #tpu.dot_dimension_numbers<[1], [0], [0], [1], [0, 0, 1, 1], [], []>} : vector<32x32xf32>, vector<32x96xf32>, vector<32x96xf32> -> vector<32x96xf32>
    %c0_64 = arith.constant 0 : index
    %c0_65 = arith.constant 0 : index
    %128 = vector.load %arg8[%c0_64, %c0_65] : memref<32x96xf32, #tpu.memory_space<vmem>>, vector<32x96xf32>
    %cst_66 = arith.constant dense<0.000000e+00> : vector<32x96xf32>
    %129 = tpu.matmul %125, %128, %cst_66 {dimension_numbers = #tpu.dot_dimension_numbers<[1], [0], [0], [1], [0, 0, 1, 1], [], []>} : vector<32x32xf32>, vector<32x96xf32>, vector<32x96xf32> -> vector<32x96xf32>
    %130 = arith.addf %127, %129 : vector<32x96xf32>
    %c0_67 = arith.constant 0 : index
    %c0_68 = arith.constant 0 : index
    %131 = vector.load %arg10[%c0_67, %c0_68] : memref<1x96xf32, #tpu.memory_space<vmem>>, vector<1x96xf32>
    %132 = vector.broadcast %131 : vector<1x96xf32> to vector<32x96xf32>
    %133 = arith.addf %130, %132 : vector<32x96xf32>
    %134 = arith.addf %133, %115 : vector<32x96xf32>
    %135 = arith.negf %134 : vector<32x96xf32>
    %136 = math.exp %135 : vector<32x96xf32>
    %cst_69 = arith.constant 1.000000e+00 : f32
    %137 = vector.broadcast %cst_69 : f32 to vector<32x96xf32>
    %138 = arith.addf %137, %136 : vector<32x96xf32>
    %139 = arith.divf %137, %138 : vector<32x96xf32>
    %140 = vector.extract_strided_slice %139 {offsets = [0, 0], sizes = [32, 32], strides = [1, 1]} : vector<32x96xf32> to vector<32x32xf32>
    %141 = vector.extract_strided_slice %139 {offsets = [0, 32], sizes = [32, 32], strides = [1, 1]} : vector<32x96xf32> to vector<32x32xf32>
    %142 = vector.extract_strided_slice %115 {offsets = [0, 64], sizes = [32, 32], strides = [1, 1]} : vector<32x96xf32> to vector<32x32xf32>
    %143 = arith.mulf %140, %142 : vector<32x32xf32>
    %144 = vector.extract_strided_slice %133 {offsets = [0, 64], sizes = [32, 32], strides = [1, 1]} : vector<32x96xf32> to vector<32x32xf32>
    %145 = arith.addf %143, %144 : vector<32x32xf32>
    %146 = math.tanh %145 : vector<32x32xf32>
    %cst_70 = arith.constant 1.000000e+00 : f32
    %147 = vector.broadcast %cst_70 : f32 to vector<32x32xf32>
    %148 = arith.subf %147, %141 : vector<32x32xf32>
    %149 = arith.mulf %148, %79 : vector<32x32xf32>
    %150 = arith.mulf %141, %146 : vector<32x32xf32>
    %151 = arith.addf %149, %150 : vector<32x32xf32>
    %152 = arith.mulf %151, %151 : vector<32x32xf32>
    %cst_71 = arith.constant dense<0.000000e+00> : vector<32xf32>
    %153 = vector.multi_reduction <add>, %152, %cst_71 [1] : vector<32x32xf32> to vector<32xf32>
    %154 = vector.shape_cast %153 : vector<32xf32> to vector<32x1xf32>
    %cst_72 = arith.constant 1.000000e-24 : f32
    %155 = vector.broadcast %cst_72 : f32 to vector<32x1xf32>
    %156 = arith.maximumf %154, %155 : vector<32x1xf32>
    %157 = math.rsqrt %156 : vector<32x1xf32>
    %158 = vector.broadcast %157 : vector<32x1xf32> to vector<32x32xf32>
    %159 = arith.mulf %151, %158 : vector<32x32xf32>
    %160 = arith.addf %79, %159 : vector<32x32xf32>
    %c0_73 = arith.constant 0 : index
    %c0_74 = arith.constant 0 : index
    %161 = vector.load %arg12[%c0_73, %c0_74] : memref<32x32xf32, #tpu.memory_space<vmem>>, vector<32x32xf32>
    %cst_75 = arith.constant dense<0.000000e+00> : vector<32x32xf32>
    %162 = tpu.matmul %160, %161, %cst_75 {dimension_numbers = #tpu.dot_dimension_numbers<[1], [0], [0], [1], [0, 0, 1, 1], [], []>} : vector<32x32xf32>, vector<32x32xf32>, vector<32x32xf32> -> vector<32x32xf32>
    %163 = vector.shape_cast %162 : vector<32x32xf32> to vector<2x16x32xf32>
    %164 = vector.broadcast %105 : vector<2x1x32xf32> to vector<2x16x32xf32>
    %165 = arith.mulf %163, %164 : vector<2x16x32xf32>
    %cst_76 = arith.constant dense<0.000000e+00> : vector<2x16xf32>
    %166 = vector.multi_reduction <add>, %165, %cst_76 [2] : vector<2x16x32xf32> to vector<2x16xf32>
    %167 = vector.shape_cast %166 : vector<2x16xf32> to vector<2x16x1xf32>
    %cst_77 = arith.constant 0.176776692 : f32
    %168 = vector.broadcast %cst_77 : f32 to vector<2x16x1xf32>
    %169 = arith.mulf %167, %168 : vector<2x16x1xf32>
    %cst_78 = arith.constant 1.000000e+00 : f32
    %170 = vector.broadcast %cst_78 : f32 to vector<2x16x1xf32>
    %171 = arith.subf %170, %169 : vector<2x16x1xf32>
    %172 = vector.shape_cast %160 : vector<32x32xf32> to vector<2x16x32xf32>
    %173 = vector.broadcast %171 : vector<2x16x1xf32> to vector<2x16x32xf32>
    %174 = arith.mulf %173, %172 : vector<2x16x32xf32>
    %175 = vector.broadcast %169 : vector<2x16x1xf32> to vector<2x16x32xf32>
    %176 = vector.broadcast %105 : vector<2x1x32xf32> to vector<2x16x32xf32>
    %177 = arith.mulf %175, %176 : vector<2x16x32xf32>
    %178 = arith.addf %174, %177 : vector<2x16x32xf32>
    %179 = vector.shape_cast %178 : vector<2x16x32xf32> to vector<32x32xf32>
    %c0_79 = arith.constant 0 : index
    %c0_80 = arith.constant 0 : index
    %180 = vector.load %arg13[%c0_79, %c0_80] : memref<32x32xf32, #tpu.memory_space<vmem>>, vector<32x32xf32>
    %cst_81 = arith.constant dense<0.000000e+00> : vector<32x32xf32>
    %181 = tpu.matmul %179, %180, %cst_81 {dimension_numbers = #tpu.dot_dimension_numbers<[1], [0], [0], [1], [0, 0, 1, 1], [], []>} : vector<32x32xf32>, vector<32x32xf32>, vector<32x32xf32> -> vector<32x32xf32>
    %182 = vector.shape_cast %181 : vector<32x32xf32> to vector<2x16x32xf32>
    %183 = vector.broadcast %105 : vector<2x1x32xf32> to vector<2x16x32xf32>
    %184 = arith.mulf %182, %183 : vector<2x16x32xf32>
    %cst_82 = arith.constant dense<0.000000e+00> : vector<2x16xf32>
    %185 = vector.multi_reduction <add>, %184, %cst_82 [2] : vector<2x16x32xf32> to vector<2x16xf32>
    %186 = vector.shape_cast %185 : vector<2x16xf32> to vector<2x16x1xf32>
    %cst_83 = arith.constant 0.176776692 : f32
    %187 = vector.broadcast %cst_83 : f32 to vector<2x16x1xf32>
    %188 = arith.mulf %186, %187 : vector<2x16x1xf32>
    %cst_84 = arith.constant 0.000000e+00 : f32
    %189 = vector.broadcast %cst_84 : f32 to vector<2x16x1xf32>
    %190 = arith.cmpf oeq, %5, %189 : vector<2x16x1xf32>
    %cst_85 = arith.constant 0xFF800000 : f32
    %191 = vector.broadcast %cst_85 : f32 to vector<2x16x1xf32>
    %192 = arith.select %190, %191, %188 : vector<2x16x1xi1>, vector<2x16x1xf32>
    %cst_86 = arith.constant dense<0xFF800000> : vector<2x1xf32>
    %193 = vector.multi_reduction <maximumf>, %192, %cst_86 [1] : vector<2x16x1xf32> to vector<2x1xf32>
    %194 = vector.shape_cast %193 : vector<2x1xf32> to vector<2x1x1xf32>
    %195 = vector.broadcast %194 : vector<2x1x1xf32> to vector<2x16x1xf32>
    %196 = arith.subf %192, %195 : vector<2x16x1xf32>
    %197 = math.exp %196 : vector<2x16x1xf32>
    %cst_87 = arith.constant dense<0.000000e+00> : vector<2x1xf32>
    %198 = vector.multi_reduction <add>, %197, %cst_87 [1] : vector<2x16x1xf32> to vector<2x1xf32>
    %199 = vector.shape_cast %198 : vector<2x1xf32> to vector<2x1x1xf32>
    %200 = vector.broadcast %199 : vector<2x1x1xf32> to vector<2x16x1xf32>
    %201 = arith.divf %197, %200 : vector<2x16x1xf32>
    %202 = vector.broadcast %201 : vector<2x16x1xf32> to vector<2x16x32xf32>
    %203 = arith.mulf %202, %178 : vector<2x16x32xf32>
    %cst_88 = arith.constant dense<0.000000e+00> : vector<2x32xf32>
    %204 = vector.multi_reduction <add>, %203, %cst_88 [1] : vector<2x16x32xf32> to vector<2x32xf32>
    %205 = vector.shape_cast %204 : vector<2x32xf32> to vector<2x1x32xf32>
    %c0_89 = arith.constant 0 : index
    %c0_90 = arith.constant 0 : index
    %206 = vector.load %arg14[%c0_89, %c0_90] : memref<32x32xf32, #tpu.memory_space<vmem>>, vector<32x32xf32>
    %cst_91 = arith.constant dense<0.000000e+00> : vector<32x32xf32>
    %207 = tpu.matmul %3, %206, %cst_91 {dimension_numbers = #tpu.dot_dimension_numbers<[1], [0], [0], [1], [0, 0, 1, 1], [], []>} : vector<32x32xf32>, vector<32x32xf32>, vector<32x32xf32> -> vector<32x32xf32>
    %c0_92 = arith.constant 0 : index
    %c0_93 = arith.constant 0 : index
    %208 = vector.load %arg15[%c0_92, %c0_93] : memref<32x32xf32, #tpu.memory_space<vmem>>, vector<32x32xf32>
    %cst_94 = arith.constant dense<0.000000e+00> : vector<32x32xf32>
    %209 = tpu.matmul %179, %208, %cst_94 {dimension_numbers = #tpu.dot_dimension_numbers<[1], [0], [0], [1], [0, 0, 1, 1], [], []>} : vector<32x32xf32>, vector<32x32xf32>, vector<32x32xf32> -> vector<32x32xf32>
    %210 = arith.addf %207, %209 : vector<32x32xf32>
    %c0_95 = arith.constant 0 : index
    %c0_96 = arith.constant 0 : index
    %211 = vector.load %arg16[%c0_95, %c0_96] : memref<1x32xf32, #tpu.memory_space<vmem>>, vector<1x32xf32>
    %212 = vector.broadcast %211 : vector<1x32xf32> to vector<32x32xf32>
    %213 = arith.addf %210, %212 : vector<32x32xf32>
    %214 = arith.negf %213 : vector<32x32xf32>
    %215 = math.exp %214 : vector<32x32xf32>
    %cst_97 = arith.constant 1.000000e+00 : f32
    %216 = vector.broadcast %cst_97 : f32 to vector<32x32xf32>
    %217 = arith.addf %216, %215 : vector<32x32xf32>
    %218 = arith.divf %216, %217 : vector<32x32xf32>
    %219 = arith.mulf %218, %3 : vector<32x32xf32>
    %cst_98 = arith.constant 1.000000e+00 : f32
    %220 = vector.broadcast %cst_98 : f32 to vector<32x32xf32>
    %221 = arith.subf %220, %218 : vector<32x32xf32>
    %222 = arith.mulf %221, %179 : vector<32x32xf32>
    %223 = arith.addf %219, %222 : vector<32x32xf32>
    %224 = vector.shape_cast %223 : vector<32x32xf32> to vector<2x16x32xf32>
    %c0_99 = arith.constant 0 : index
    %c0_100 = arith.constant 0 : index
    %c0_101 = arith.constant 0 : index
    %225 = vector.load %arg17[%c0_99, %c0_100, %c0_101] : memref<2x16x32xf32, #tpu.memory_space<vmem>>, vector<2x16x32xf32>
    tpu.vector_store %arg17[%c0_99, %c0_100, %c0_101], %224 {strides = array<i32>} : memref<2x16x32xf32, #tpu.memory_space<vmem>>, vector<2x16x32xf32>,
    %c0_102 = arith.constant 0 : index
    %c0_103 = arith.constant 0 : index
    %c0_104 = arith.constant 0 : index
    %226 = vector.load %arg18[%c0_102, %c0_103, %c0_104] : memref<2x1x32xf32, #tpu.memory_space<vmem>>, vector<2x1x32xf32>
    tpu.vector_store %arg18[%c0_102, %c0_103, %c0_104], %205 {strides = array<i32>} : memref<2x1x32xf32, #tpu.memory_space<vmem>>, vector<2x1x32xf32>,
    return
  }
  func.func @transform_0(%arg0: i32) -> (i32, i32, i32, i32) {
    %c0_i32 = arith.constant 0 : i32
    %c0_i32_0 = arith.constant 0 : i32
    %c0_i32_1 = arith.constant 0 : i32
    %c0_i32_2 = arith.constant 0 : i32
    return %c0_i32, %arg0, %c0_i32_0, %c0_i32_1 : i32, i32, i32, i32
  }
  func.func @transform_1(%arg0: i32) -> (i32, i32, i32) {
    %c0_i32 = arith.constant 0 : i32
    %c0_i32_0 = arith.constant 0 : i32
    %c0_i32_1 = arith.constant 0 : i32
    return %arg0, %c0_i32, %c0_i32_0 : i32, i32, i32
  }
  func.func @transform_2(%arg0: i32) -> (i32, i32, i32) {
    %c0_i32 = arith.constant 0 : i32
    %c0_i32_0 = arith.constant 0 : i32
    %c0_i32_1 = arith.constant 0 : i32
    return %arg0, %c0_i32, %c0_i32_0 : i32, i32, i32
  }
  func.func @transform_3(%arg0: i32) -> (i32, i32, i32) {
    %c0_i32 = arith.constant 0 : i32
    %c0_i32_0 = arith.constant 0 : i32
    %c0_i32_1 = arith.constant 0 : i32
    return %arg0, %c0_i32, %c0_i32_0 : i32, i32, i32
  }
  func.func @transform_4(%arg0: i32) -> (i32, i32) {
    %c0_i32 = arith.constant 0 : i32
    %c0_i32_0 = arith.constant 0 : i32
    %c0_i32_1 = arith.constant 0 : i32
    return %c0_i32, %c0_i32_0 : i32, i32
  }
  func.func @transform_5(%arg0: i32) -> (i32, i32) {
    %c0_i32 = arith.constant 0 : i32
    %c0_i32_0 = arith.constant 0 : i32
    %c0_i32_1 = arith.constant 0 : i32
    return %c0_i32, %c0_i32_0 : i32, i32
  }
  func.func @transform_6(%arg0: i32) -> (i32, i32) {
    %c0_i32 = arith.constant 0 : i32
    %c0_i32_0 = arith.constant 0 : i32
    %c0_i32_1 = arith.constant 0 : i32
    return %c0_i32, %c0_i32_0 : i32, i32
  }
  func.func @transform_7(%arg0: i32) -> (i32, i32) {
    %c0_i32 = arith.constant 0 : i32
    %c0_i32_0 = arith.constant 0 : i32
    %c0_i32_1 = arith.constant 0 : i32
    return %c0_i32, %c0_i32_0 : i32, i32
  }
  func.func @transform_8(%arg0: i32) -> (i32, i32) {
    %c0_i32 = arith.constant 0 : i32
    %c0_i32_0 = arith.constant 0 : i32
    %c0_i32_1 = arith.constant 0 : i32
    return %c0_i32, %c0_i32_0 : i32, i32
  }
  func.func @transform_9(%arg0: i32) -> (i32, i32) {
    %c0_i32 = arith.constant 0 : i32
    %c0_i32_0 = arith.constant 0 : i32
    %c0_i32_1 = arith.constant 0 : i32
    return %c0_i32, %c0_i32_0 : i32, i32
  }
  func.func @transform_10(%arg0: i32) -> (i32, i32) {
    %c0_i32 = arith.constant 0 : i32
    %c0_i32_0 = arith.constant 0 : i32
    %c0_i32_1 = arith.constant 0 : i32
    return %c0_i32, %c0_i32_0 : i32, i32
  }
  func.func @transform_11(%arg0: i32) -> (i32, i32) {
    %c0_i32 = arith.constant 0 : i32
    %c0_i32_0 = arith.constant 0 : i32
    %c0_i32_1 = arith.constant 0 : i32
    return %c0_i32, %c0_i32_0 : i32, i32
  }
  func.func @transform_12(%arg0: i32) -> (i32, i32) {
    %c0_i32 = arith.constant 0 : i32
    %c0_i32_0 = arith.constant 0 : i32
    %c0_i32_1 = arith.constant 0 : i32
    return %c0_i32, %c0_i32_0 : i32, i32
  }
  func.func @transform_13(%arg0: i32) -> (i32, i32) {
    %c0_i32 = arith.constant 0 : i32
    %c0_i32_0 = arith.constant 0 : i32
    %c0_i32_1 = arith.constant 0 : i32
    return %c0_i32, %c0_i32_0 : i32, i32
  }
  func.func @transform_14(%arg0: i32) -> (i32, i32) {
    %c0_i32 = arith.constant 0 : i32
    %c0_i32_0 = arith.constant 0 : i32
    %c0_i32_1 = arith.constant 0 : i32
    return %c0_i32, %c0_i32_0 : i32, i32
  }
  func.func @transform_15(%arg0: i32) -> (i32, i32) {
    %c0_i32 = arith.constant 0 : i32
    %c0_i32_0 = arith.constant 0 : i32
    %c0_i32_1 = arith.constant 0 : i32
    return %c0_i32, %c0_i32_0 : i32, i32
  }
  func.func @transform_16(%arg0: i32) -> (i32, i32, i32) {
    %c0_i32 = arith.constant 0 : i32
    %c0_i32_0 = arith.constant 0 : i32
    %c0_i32_1 = arith.constant 0 : i32
    return %arg0, %c0_i32, %c0_i32_0 : i32, i32, i32
  }
  func.func @transform_17(%arg0: i32) -> (i32, i32, i32) {
    %c0_i32 = arith.constant 0 : i32
    %c0_i32_0 = arith.constant 0 : i32
    %c0_i32_1 = arith.constant 0 : i32
    return %arg0, %c0_i32, %c0_i32_0 : i32, i32, i32
  }
}

</mosaic_0001>

<llo_original>
// kernel: tpu_custom_call.1
$region0: #{tpu_custom_call.1}
  #allocation0 [shape = 'u32[]', space=smem, size = 0x4, offset = 0x4, fixed_abs, tag = 'smem constant byte address 0x4 - core index']
  #allocation1 [shape = 'u32[144,128]{1,0:T(1,128)}', space=vmem, size = 0x12000, scoped, tag = 'internal scratch']
  %s0 = inlined_call_operand.hbm [shape: f32[2,2,16,16], index: 0, kind: input, shape index: {}]
  %s1 = inlined_call_operand.hbm [shape: f32[2,16,32], index: 1, kind: input, shape index: {}]
  %s2 = inlined_call_operand.hbm [shape: f32[2,1,32], index: 2, kind: input, shape index: {}]
  %s3 = inlined_call_operand.hbm [shape: f32[2,16,1], index: 3, kind: input, shape index: {}]
  %s4 = inlined_call_operand.hbm [shape: f32[32,64], index: 4, kind: input, shape index: {}]
  %s5 = inlined_call_operand.hbm [shape: f32[1,64], index: 5, kind: input, shape index: {}]
  %s6 = inlined_call_operand.hbm [shape: f32[32,96], index: 6, kind: input, shape index: {}]
  %s7 = inlined_call_operand.hbm [shape: f32[32,96], index: 7, kind: input, shape index: {}]
  %s8 = inlined_call_operand.hbm [shape: f32[32,96], index: 8, kind: input, shape index: {}]
  %s9 = inlined_call_operand.hbm [shape: f32[1,96], index: 9, kind: input, shape index: {}]
  %s10 = inlined_call_operand.hbm [shape: f32[1,96], index: 10, kind: input, shape index: {}]
  %s11 = inlined_call_operand.hbm [shape: f32[32,32], index: 11, kind: input, shape index: {}]
  %s12 = inlined_call_operand.hbm [shape: f32[32,32], index: 12, kind: input, shape index: {}]
  %s13 = inlined_call_operand.hbm [shape: f32[32,32], index: 13, kind: input, shape index: {}]
  %s14 = inlined_call_operand.hbm [shape: f32[32,32], index: 14, kind: input, shape index: {}]
  %s15 = inlined_call_operand.hbm [shape: f32[1,32], index: 15, kind: input, shape index: {}]
  %s16 = inlined_call_operand.hbm [shape: f32[2,16,32], index: 16, kind: output, shape index: {0}]
  %s17 = inlined_call_operand.hbm [shape: f32[2,1,32], index: 17, kind: output, shape index: {1}]
  %18 = xla_tuple %s16, %s17
  %s19 = sld [smem:[#allocation0]]
  $region146: #{tpu_custom_call.1} parent=0
    _
  %s21 = ssub.s32 1, %s19
  %s22 = scalar_select 0, %s21, %s19
  $region1: #{tpu_custom_call.1} parent=0
    #allocation2 [shape = 'u8[32768]{0}', space=vmem, size = 0x8000, scoped, tag = 'input window, operand 0, single buffered']
    #allocation3 [shape = 's32[1]{0}', space=sflag, size = 0x4, scoped, tag = 'scoped memory for tpu_custom_call.1']
    #allocation4 [shape = 's32[1]{0}', space=sflag, size = 0x4, scoped, tag = 'scoped memory for tpu_custom_call.1']
    #allocation5 [shape = 'u8[16384]{0}', space=vmem, size = 0x4000, scoped, tag = 'input window, operand 1, single buffered']
    #allocation6 [shape = 's32[1]{0}', space=sflag, size = 0x4, scoped, tag = 'scoped memory for tpu_custom_call.1']
    #allocation7 [shape = 'u8[1024]{0}', space=vmem, size = 0x400, scoped, tag = 'input window, operand 2, single buffered']
    #allocation8 [shape = 'u8[16384]{0}', space=vmem, size = 0x4000, scoped, tag = 'input window, operand 3, single buffered']
    #allocation9 [shape = 's32[1]{0}', space=sflag, size = 0x4, scoped, tag = 'scoped memory for tpu_custom_call.1']
    #allocation10 [shape = 'u8[16384]{0}', space=vmem, size = 0x4000, scoped, tag = 'input window, operand 4, single buffered']
    #allocation11 [shape = 'u8[512]{0}', space=vmem, size = 0x400, scoped, tag = 'input window, operand 5, single buffered']
    #allocation12 [shape = 's32[1]{0}', space=sflag, size = 0x4, scoped, tag = 'scoped memory for tpu_custom_call.1']
    #allocation13 [shape = 'u8[16384]{0}', space=vmem, size = 0x4000, scoped, tag = 'input window, operand 6, single buffered']
    #allocation14 [shape = 'u8[16384]{0}', space=vmem, size = 0x4000, scoped, tag = 'input window, operand 7, single buffered']
    #allocation15 [shape = 's32[1]{0}', space=sflag, size = 0x4, scoped, tag = 'scoped memory for tpu_custom_call.1']
    #allocation16 [shape = 'u8[16384]{0}', space=vmem, size = 0x4000, scoped, tag = 'input window, operand 8, single buffered']
    #allocation17 [shape = 'u8[512]{0}', space=vmem, size = 0x400, scoped, tag = 'input window, operand 9, single buffered']
    #allocation18 [shape = 's32[1]{0}', space=sflag, size = 0x4, scoped, tag = 'scoped memory for tpu_custom_call.1']
    #allocation19 [shape = 'u8[512]{0}', space=vmem, size = 0x400, scoped, tag = 'input window, operand 10, single buffered']
    #allocation20 [shape = 'u8[16384]{0}', space=vmem, size = 0x4000, scoped, tag = 'input window, operand 11, single buffered']
    #allocation21 [shape = 's32[1]{0}', space=sflag, size = 0x4, scoped, tag = 'scoped memory for tpu_custom_call.1']
    #allocation22 [shape = 'u8[16384]{0}', space=vmem, size = 0x4000, scoped, tag = 'input window, operand 12, single buffered']
    #allocation23 [shape = 'u8[16384]{0}', space=vmem, size = 0x4000, scoped, tag = 'input window, operand 13, single buffered']
    #allocation24 [shape = 's32[1]{0}', space=sflag, size = 0x4, scoped, tag = 'scoped memory for tpu_custom_call.1']
    #allocation25 [shape = 'u8[16384]{0}', space=vmem, size = 0x4000, scoped, tag = 'input window, operand 14, single buffered']
    #allocation26 [shape = 'u8[512]{0}', space=vmem, size = 0x400, scoped, tag = 'input window, operand 15, single buffered']
    #allocation27 [shape = 's32[1]{0}', space=sflag, size = 0x4, scoped, tag = 'scoped memory for tpu_custom_call.1']
    #allocation28 [shape = 'u8[16384]{0}', space=vmem, size = 0x4000, scoped, tag = 'output window, operand 0, single buffered']
    #allocation29 [shape = 'u8[1024]{0}', space=vmem, size = 0x400, scoped, tag = 'output window, operand 1, single buffered']
    #allocation30 [shape = 's32[1]{0}', space=sflag, size = 0x4, scoped, tag = 'scoped memory for tpu_custom_call.1']
    %23 = vsyncpa [#allocation3], 0
    %24 = vsyncpa [#allocation6], 0
    %25 = vsyncpa [#allocation9], 0
    %26 = vsyncpa [#allocation12], 0
    %27 = vsyncpa [#allocation15], 0
    %28 = vsyncpa [#allocation18], 0
    %29 = vsyncpa [#allocation21], 0
    %30 = vsyncpa [#allocation24], 0
    %31 = vsyncpa [#allocation27], 0
    %32 = vsyncpa [#allocation4], 0
    %33 = vsyncpa [#allocation30], 0
    // Predicated region
    $region2: #{tpu_custom_call.1} parent=1 // pred_check
      _
    $region3: #{tpu_custom_call.1} parent=1 // pred_check_branch
      %35 = sbr.rel (0) target = $region5
    $region4: #{tpu_custom_call.1} parent=1 // pred_region
      %s37 = ssub.s32 1024, 1024
      %38 = vsyncadd [#allocation3], %s37
      %s39 = sshll.u32 [#allocation2], 4
      %s40 = int_to_ptr.vmem [resolvable:$true] %s39
      %45 = dma.hbm_to_vmem [thread:$0]  %s0, 1024, %s40, [#allocation3], 128, 128, 8
    $region5: #{tpu_custom_call.1} parent=1 // pred_fallthru
      _
    // Predicated region
    $region6: #{tpu_custom_call.1} parent=1 // pred_check
      _
    $region7: #{tpu_custom_call.1} parent=1 // pred_check_branch
      %47 = sbr.rel (0) target = $region9
    $region8: #{tpu_custom_call.1} parent=1 // pred_region
      %s49 = ssub.s32 512, 512
      %50 = vsyncadd [#allocation6], %s49
      %s51 = sshll.u32 [#allocation5], 4
      %s52 = int_to_ptr.vmem [resolvable:$true] %s51
      %57 = dma.hbm_to_vmem [thread:$0]  %s1, 512, %s52, [#allocation6], 128, 128, 8
    $region9: #{tpu_custom_call.1} parent=1 // pred_fallthru
      _
    // Predicated region
    $region10: #{tpu_custom_call.1} parent=1 // pred_check
      _
    $region11: #{tpu_custom_call.1} parent=1 // pred_check_branch
      %59 = sbr.rel (0) target = $region13
    $region12: #{tpu_custom_call.1} parent=1 // pred_region
      %s61 = ssub.s32 32, 32
      %62 = vsyncadd [#allocation6], %s61
      %s63 = sshll.u32 [#allocation7], 4
      %s64 = int_to_ptr.vmem [resolvable:$true] %s63
      %69 = dma.hbm_to_vmem [thread:$0]  %s2, 32, %s64, [#allocation6], 16, 16, 1
    $region13: #{tpu_custom_call.1} parent=1 // pred_fallthru
      _
    // Predicated region
    $region14: #{tpu_custom_call.1} parent=1 // pred_check
      _
    $region15: #{tpu_custom_call.1} parent=1 // pred_check_branch
      %71 = sbr.rel (0) target = $region17
    $region16: #{tpu_custom_call.1} parent=1 // pred_region
      %s73 = ssub.s32 512, 512
      %74 = vsyncadd [#allocation9], %s73
      %s75 = sshll.u32 [#allocation8], 4
      %s76 = int_to_ptr.vmem [resolvable:$true] %s75
      %81 = dma.hbm_to_vmem [thread:$0]  %s3, 512, %s76, [#allocation9], 128, 128, 8
    $region17: #{tpu_custom_call.1} parent=1 // pred_fallthru
      _
    // Predicated region
    $region18: #{tpu_custom_call.1} parent=1 // pred_check
      _
    $region19: #{tpu_custom_call.1} parent=1 // pred_check_branch
      %83 = sbr.rel (0) target = $region21
    $region20: #{tpu_custom_call.1} parent=1 // pred_region
      %s85 = ssub.s32 512, 512
      %86 = vsyncadd [#allocation9], %s85
      %s87 = sshll.u32 [#allocation10], 4
      %s88 = int_to_ptr.vmem [resolvable:$true] %s87
      %93 = dma.hbm_to_vmem [thread:$0]  %s4, 512, %s88, [#allocation9], 128, 128, 8
    $region21: #{tpu_custom_call.1} parent=1 // pred_fallthru
      _
    // Predicated region
    $region22: #{tpu_custom_call.1} parent=1 // pred_check
      _
    $region23: #{tpu_custom_call.1} parent=1 // pred_check_branch
      %95 = sbr.rel (0) target = $region25
    $region24: #{tpu_custom_call.1} parent=1 // pred_region
      %s97 = ssub.s32 16, 16
      %98 = vsyncadd [#allocation12], %s97
      %s100 = sshll.u32 [#allocation11], 4
      %s101 = int_to_ptr.vmem [resolvable:$true] %s100
      %103 = dma.hbm_to_vmem [thread:$0]  %s5, 16, %s101, [#allocation12]
    $region25: #{tpu_custom_call.1} parent=1 // pred_fallthru
      _
    // Predicated region
    $region26: #{tpu_custom_call.1} parent=1 // pred_check
      _
    $region27: #{tpu_custom_call.1} parent=1 // pred_check_branch
      %105 = sbr.rel (0) target = $region29
    $region28: #{tpu_custom_call.1} parent=1 // pred_region
      %s107 = ssub.s32 512, 512
      %108 = vsyncadd [#allocation12], %s107
      %s109 = sshll.u32 [#allocation13], 4
      %s110 = int_to_ptr.vmem [resolvable:$true] %s109
      %115 = dma.hbm_to_vmem [thread:$0]  %s6, 512, %s110, [#allocation12], 128, 128, 8
    $region29: #{tpu_custom_call.1} parent=1 // pred_fallthru
      _
    // Predicated region
    $region30: #{tpu_custom_call.1} parent=1 // pred_check
      _
    $region31: #{tpu_custom_call.1} parent=1 // pred_check_branch
      %117 = sbr.rel (0) target = $region33
    $region32: #{tpu_custom_call.1} parent=1 // pred_region
      %s119 = ssub.s32 512, 512
      %120 = vsyncadd [#allocation15], %s119
      %s121 = sshll.u32 [#allocation14], 4
      %s122 = int_to_ptr.vmem [resolvable:$true] %s121
      %127 = dma.hbm_to_vmem [thread:$0]  %s7, 512, %s122, [#allocation15], 128, 128, 8
    $region33: #{tpu_custom_call.1} parent=1 // pred_fallthru
      _
    // Predicated region
    $region34: #{tpu_custom_call.1} parent=1 // pred_check
      _
    $region35: #{tpu_custom_call.1} parent=1 // pred_check_branch
      %129 = sbr.rel (0) target = $region37
    $region36: #{tpu_custom_call.1} parent=1 // pred_region
      %s131 = ssub.s32 512, 512
      %132 = vsyncadd [#allocation15], %s131
      %s133 = sshll.u32 [#allocation16], 4
      %s134 = int_to_ptr.vmem [resolvable:$true] %s133
      %139 = dma.hbm_to_vmem [thread:$0]  %s8, 512, %s134, [#allocation15], 128, 128, 8
    $region37: #{tpu_custom_call.1} parent=1 // pred_fallthru
      _
    // Predicated region
    $region38: #{tpu_custom_call.1} parent=1 // pred_check
      _
    $region39: #{tpu_custom_call.1} parent=1 // pred_check_branch
      %141 = sbr.rel (0) target = $region41
    $region40: #{tpu_custom_call.1} parent=1 // pred_region
      %s143 = ssub.s32 16, 16
      %144 = vsyncadd [#allocation18], %s143
      %s146 = sshll.u32 [#allocation17], 4
      %s147 = int_to_ptr.vmem [resolvable:$true] %s146
      %149 = dma.hbm_to_vmem [thread:$0]  %s9, 16, %s147, [#allocation18]
    $region41: #{tpu_custom_call.1} parent=1 // pred_fallthru
      _
    // Predicated region
    $region42: #{tpu_custom_call.1} parent=1 // pred_check
      _
    $region43: #{tpu_custom_call.1} parent=1 // pred_check_branch
      %151 = sbr.rel (0) target = $region45
    $region44: #{tpu_custom_call.1} parent=1 // pred_region
      %s153 = ssub.s32 16, 16
      %154 = vsyncadd [#allocation18], %s153
      %s156 = sshll.u32 [#allocation19], 4
      %s157 = int_to_ptr.vmem [resolvable:$true] %s156
      %159 = dma.hbm_to_vmem [thread:$0]  %s10, 16, %s157, [#allocation18]
    $region45: #{tpu_custom_call.1} parent=1 // pred_fallthru
      _
    // Predicated region
    $region46: #{tpu_custom_call.1} parent=1 // pred_check
      _
    $region47: #{tpu_custom_call.1} parent=1 // pred_check_branch
      %161 = sbr.rel (0) target = $region49
    $region48: #{tpu_custom_call.1} parent=1 // pred_region
      %s163 = ssub.s32 512, 512
      %164 = vsyncadd [#allocation21], %s163
      %s165 = sshll.u32 [#allocation20], 4
      %s166 = int_to_ptr.vmem [resolvable:$true] %s165
      %171 = dma.hbm_to_vmem [thread:$0]  %s11, 512, %s166, [#allocation21], 128, 128, 8
    $region49: #{tpu_custom_call.1} parent=1 // pred_fallthru
      _
    // Predicated region
    $region50: #{tpu_custom_call.1} parent=1 // pred_check
      _
    $region51: #{tpu_custom_call.1} parent=1 // pred_check_branch
      %173 = sbr.rel (0) target = $region53
    $region52: #{tpu_custom_call.1} parent=1 // pred_region
      %s175 = ssub.s32 512, 512
      %176 = vsyncadd [#allocation21], %s175
      %s177 = sshll.u32 [#allocation22], 4
      %s178 = int_to_ptr.vmem [resolvable:$true] %s177
      %183 = dma.hbm_to_vmem [thread:$0]  %s12, 512, %s178, [#allocation21], 128, 128, 8
    $region53: #{tpu_custom_call.1} parent=1 // pred_fallthru
      _
    // Predicated region
    $region54: #{tpu_custom_call.1} parent=1 // pred_check
      _
    $region55: #{tpu_custom_call.1} parent=1 // pred_check_branch
      %185 = sbr.rel (0) target = $region57
    $region56: #{tpu_custom_call.1} parent=1 // pred_region
      %s187 = ssub.s32 512, 512
      %188 = vsyncadd [#allocation24], %s187
      %s189 = sshll.u32 [#allocation23], 4
      %s190 = int_to_ptr.vmem [resolvable:$true] %s189
      %195 = dma.hbm_to_vmem [thread:$0]  %s13, 512, %s190, [#allocation24], 128, 128, 8
    $region57: #{tpu_custom_call.1} parent=1 // pred_fallthru
      _
    // Predicated region
    $region58: #{tpu_custom_call.1} parent=1 // pred_check
      _
    $region59: #{tpu_custom_call.1} parent=1 // pred_check_branch
      %197 = sbr.rel (0) target = $region61
    $region60: #{tpu_custom_call.1} parent=1 // pred_region
      %s199 = ssub.s32 512, 512
      %200 = vsyncadd [#allocation24], %s199
      %s201 = sshll.u32 [#allocation25], 4
      %s202 = int_to_ptr.vmem [resolvable:$true] %s201
      %207 = dma.hbm_to_vmem [thread:$0]  %s14, 512, %s202, [#allocation24], 128, 128, 8
    $region61: #{tpu_custom_call.1} parent=1 // pred_fallthru
      _
    // Predicated region
    $region62: #{tpu_custom_call.1} parent=1 // pred_check
      _
    $region63: #{tpu_custom_call.1} parent=1 // pred_check_branch
      %209 = sbr.rel (0) target = $region65
    $region64: #{tpu_custom_call.1} parent=1 // pred_region
      %s211 = ssub.s32 16, 16
      %212 = vsyncadd [#allocation27], %s211
      %s214 = sshll.u32 [#allocation26], 4
      %s215 = int_to_ptr.vmem [resolvable:$true] %s214
      %217 = dma.hbm_to_vmem [thread:$0]  %s15, 16, %s215, [#allocation27]
    $region65: #{tpu_custom_call.1} parent=1 // pred_fallthru
      _
    // Predicated region
    $region66: #{tpu_custom_call.1} parent=1 // pred_check
      _
    $region67: #{tpu_custom_call.1} parent=1 // pred_check_branch
      %219 = sbr.rel (0) target = $region69
    $region68: #{tpu_custom_call.1} parent=1 // pred_region
      %220 = dma.done [#allocation3], 1024
    $region69: #{tpu_custom_call.1} parent=1 // pred_fallthru
      _
    // Predicated region
    $region70: #{tpu_custom_call.1} parent=1 // pred_check
      _
    $region71: #{tpu_custom_call.1} parent=1 // pred_check_branch
      %222 = sbr.rel (0) target = $region73
    $region72: #{tpu_custom_call.1} parent=1 // pred_region
      %223 = dma.done [#allocation6], 512
    $region73: #{tpu_custom_call.1} parent=1 // pred_fallthru
      _
    // Predicated region
    $region74: #{tpu_custom_call.1} parent=1 // pred_check
      _
    $region75: #{tpu_custom_call.1} parent=1 // pred_check_branch
      %225 = sbr.rel (0) target = $region77
    $region76: #{tpu_custom_call.1} parent=1 // pred_region
      %226 = dma.done [#allocation6], 32
    $region77: #{tpu_custom_call.1} parent=1 // pred_fallthru
      _
    // Predicated region
    $region78: #{tpu_custom_call.1} parent=1 // pred_check
      _
    $region79: #{tpu_custom_call.1} parent=1 // pred_check_branch
      %228 = sbr.rel (0) target = $region81
    $region80: #{tpu_custom_call.1} parent=1 // pred_region
      %229 = dma.done [#allocation9], 512
    $region81: #{tpu_custom_call.1} parent=1 // pred_fallthru
      _
    // Predicated region
    $region82: #{tpu_custom_call.1} parent=1 // pred_check
      _
    $region83: #{tpu_custom_call.1} parent=1 // pred_check_branch
      %231 = sbr.rel (0) target = $region85
    $region84: #{tpu_custom_call.1} parent=1 // pred_region
      %232 = dma.done [#allocation9], 512
    $region85: #{tpu_custom_call.1} parent=1 // pred_fallthru
      _
    // Predicated region
    $region86: #{tpu_custom_call.1} parent=1 // pred_check
      _
    $region87: #{tpu_custom_call.1} parent=1 // pred_check_branch
      %234 = sbr.rel (0) target = $region89
    $region88: #{tpu_custom_call.1} parent=1 // pred_region
      %235 = dma.done [#allocation12], 16
    $region89: #{tpu_custom_call.1} parent=1 // pred_fallthru
      _
    // Predicated region
    $region90: #{tpu_custom_call.1} parent=1 // pred_check
      _
    $region91: #{tpu_custom_call.1} parent=1 // pred_check_branch
      %237 = sbr.rel (0) target = $region93
    $region92: #{tpu_custom_call.1} parent=1 // pred_region
      %238 = dma.done [#allocation12], 512
    $region93: #{tpu_custom_call.1} parent=1 // pred_fallthru
      _
    // Predicated region
    $region94: #{tpu_custom_call.1} parent=1 // pred_check
      _
    $region95: #{tpu_custom_call.1} parent=1 // pred_check_branch
      %240 = sbr.rel (0) target = $region97
    $region96: #{tpu_custom_call.1} parent=1 // pred_region
      %241 = dma.done [#allocation15], 512
    $region97: #{tpu_custom_call.1} parent=1 // pred_fallthru
      _
    // Predicated region
    $region98: #{tpu_custom_call.1} parent=1 // pred_check
      _
    $region99: #{tpu_custom_call.1} parent=1 // pred_check_branch
      %243 = sbr.rel (0) target = $region101
    $region100: #{tpu_custom_call.1} parent=1 // pred_region
      %244 = dma.done [#allocation15], 512
    $region101: #{tpu_custom_call.1} parent=1 // pred_fallthru
      _
    // Predicated region
    $region102: #{tpu_custom_call.1} parent=1 // pred_check
      _
    $region103: #{tpu_custom_call.1} parent=1 // pred_check_branch
      %246 = sbr.rel (0) target = $region105
    $region104: #{tpu_custom_call.1} parent=1 // pred_region
      %247 = dma.done [#allocation18], 16
    $region105: #{tpu_custom_call.1} parent=1 // pred_fallthru
      _
    // Predicated region
    $region106: #{tpu_custom_call.1} parent=1 // pred_check
      _
    $region107: #{tpu_custom_call.1} parent=1 // pred_check_branch
      %249 = sbr.rel (0) target = $region109
    $region108: #{tpu_custom_call.1} parent=1 // pred_region
      %250 = dma.done [#allocation18], 16
    $region109: #{tpu_custom_call.1} parent=1 // pred_fallthru
      _
    // Predicated region
    $region110: #{tpu_custom_call.1} parent=1 // pred_check
      _
    $region111: #{tpu_custom_call.1} parent=1 // pred_check_branch
      %252 = sbr.rel (0) target = $region113
    $region112: #{tpu_custom_call.1} parent=1 // pred_region
      %253 = dma.done [#allocation21], 512
    $region113: #{tpu_custom_call.1} parent=1 // pred_fallthru
      _
    // Predicated region
    $region114: #{tpu_custom_call.1} parent=1 // pred_check
      _
    $region115: #{tpu_custom_call.1} parent=1 // pred_check_branch
      %255 = sbr.rel (0) target = $region117
    $region116: #{tpu_custom_call.1} parent=1 // pred_region
      %256 = dma.done [#allocation21], 512
    $region117: #{tpu_custom_call.1} parent=1 // pred_fallthru
      _
    // Predicated region
    $region118: #{tpu_custom_call.1} parent=1 // pred_check
      _
    $region119: #{tpu_custom_call.1} parent=1 // pred_check_branch
      %258 = sbr.rel (0) target = $region121
    $region120: #{tpu_custom_call.1} parent=1 // pred_region
      %259 = dma.done [#allocation24], 512
    $region121: #{tpu_custom_call.1} parent=1 // pred_fallthru
      _
    // Predicated region
    $region122: #{tpu_custom_call.1} parent=1 // pred_check
      _
    $region123: #{tpu_custom_call.1} parent=1 // pred_check_branch
      %261 = sbr.rel (0) target = $region125
    $region124: #{tpu_custom_call.1} parent=1 // pred_region
      %262 = dma.done [#allocation24], 512
    $region125: #{tpu_custom_call.1} parent=1 // pred_fallthru
      _
    // Predicated region
    $region126: #{tpu_custom_call.1} parent=1 // pred_check
      _
    $region127: #{tpu_custom_call.1} parent=1 // pred_check_branch
      %264 = sbr.rel (0) target = $region129
    $region128: #{tpu_custom_call.1} parent=1 // pred_region
      %265 = dma.done [#allocation27], 16
    $region129: #{tpu_custom_call.1} parent=1 // pred_fallthru
      _
    %v266 = vld [vmem:[#allocation2] sm:$0xff]
    %v267 = vld [vmem:[#allocation2 + $0x8] sm:$0xff]
    %v268 = vld [vmem:[#allocation2 + $0x10] sm:$0xff]
    %v269 = vld [vmem:[#allocation2 + $0x18] sm:$0xff]
    %v270 = vld [vmem:[#allocation2 + $0x20] sm:$0xff]
    %v271 = vld [vmem:[#allocation2 + $0x28] sm:$0xff]
    %v272 = vld [vmem:[#allocation2 + $0x30] sm:$0xff]
    %v273 = vld [vmem:[#allocation2 + $0x38] sm:$0xff]
    %v274 = vld [vmem:[#allocation5] sm:$0xff]
    %v275 = vld [vmem:[#allocation5 + $0x8] sm:$0xff]
    %v276 = vld [vmem:[#allocation5 + $0x10] sm:$0xff]
    %v277 = vld [vmem:[#allocation5 + $0x18] sm:$0xff]
    %v278 = vld [vmem:[#allocation7] sm:$0x1]
    %v279 = vld [vmem:[#allocation7 + $0x1] sm:$0x1]
    %v280 = vld [vmem:[#allocation8] sm:$0xff]
    %v281 = vld [vmem:[#allocation8 + $0x8] sm:$0xff]
    %v282 = vld [vmem:[#allocation8 + $0x10] sm:$0xff]
    %v283 = vld [vmem:[#allocation8 + $0x18] sm:$0xff]
    %v284 = vld [vmem:[#allocation10] sm:$0xff]
    %v285 = vld [vmem:[#allocation10 + $0x8] sm:$0xff]
    %v286 = vld [vmem:[#allocation10 + $0x10] sm:$0xff]
    %v287 = vld [vmem:[#allocation10 + $0x18] sm:$0xff]
    %v288 = vld [vmem:[#allocation11] sm:$0x1]
    %v290 = vlaneseq
    %v291 = vshrl.u32 %v290, 7
    %v292 = vsub.s32 0, %v291
    %v293 = vrot.slane %v288, %v292
    %vm295 = vcmask 261120
    %v297 = vsel %vm295, %v274, 0
    %v300 = vsel %vm295, %v275, 0
    %v303 = vsel %vm295, %v276, 0
    %v306 = vsel %vm295, %v277, 0
    %308 = vmatprep.subr.mxu0 0.0
    %309 = vmatpush1.msra.mxu0 %v284
    %310 = vmatprep.subr.mxu0 0.0
    %311 = vmatpush1.msra.mxu0 %v285
    %312 = vmatprep.subr.mxu0 0.0
    %313 = vmatpush1.msra.mxu0 %v286
    %314 = vmatprep.subr.mxu0 0.0
    %315 = vmatpush1.msra.mxu0 %v287
    %316 = vmatprep.subr.mxu0 0.0
    %317 = vmatpush1.msra.mxu0 0.0
    %318 = vmatprep.subr.mxu0 0.0
    %319 = vmatpush1.msra.mxu0 0.0
    %320 = vmatprep.subr.mxu0 0.0
    %321 = vmatpush1.msra.mxu0 0.0
    %322 = vmatprep.subr.mxu0 0.0
    %323 = vmatpush1.msra.mxu0 0.0
    %324 = vmatprep.subr.mxu0 0.0
    %325 = vmatpush1.msra.mxu0 0.0
    %326 = vmatprep.subr.mxu0 0.0
    %327 = vmatpush1.msra.mxu0 0.0
    %328 = vmatprep.subr.mxu0 0.0
    %329 = vmatpush1.msra.mxu0 0.0
    %330 = vmatprep.subr.mxu0 0.0
    %331 = vmatpush1.msra.mxu0 0.0
    %332 = vmatprep.subr.mxu0 0.0
    %333 = vmatpush1.msra.mxu0 0.0
    %334 = vmatprep.subr.mxu0 0.0
    %335 = vmatpush1.msra.mxu0 0.0
    %336 = vmatprep.subr.mxu0 0.0
    %337 = vmatpush1.msra.mxu0 0.0
    %338 = vmatprep.subr.mxu0 0.0
    %339 = vmatpush1.msra.mxu0 0.0
    %340 = vmatprep.subr.mxu0 0.0
    %341 = vmatpush1.msra.mxu0 0.0
    %342 = vmatprep.subr.mxu0 0.0
    %343 = vmatpush1.msra.mxu0 0.0
    %344 = vmatprep.subr.mxu0 0.0
    %345 = vmatpush1.msra.mxu0 0.0
    %346 = vmatprep.subr.mxu0 0.0
    %347 = vmatpush1.msra.mxu0 0.0
    %348 = vmatprep.subr.mxu0 0.0
    %349 = vmatpush1.msra.mxu0 0.0
    %350 = vmatprep.subr.mxu0 0.0
    %351 = vmatpush1.msra.mxu0 0.0
    %352 = vmatprep.subr.mxu0 0.0
    %353 = vmatpush1.msra.mxu0 0.0
    %354 = vmatprep.subr.mxu0 0.0
    %355 = vmatpush1.msra.mxu0 0.0
    %356 = vmatprep.subr.mxu0 0.0
    %357 = vmatpush1.msra.mxu0 0.0
    %358 = vmatprep.subr.mxu0 0.0
    %359 = vmatpush1.msra.mxu0 0.0
    %360 = vmatprep.subr.mxu0 0.0
    %361 = vmatpush1.msra.mxu0 0.0
    %362 = vmatprep.subr.mxu0 0.0
    %363 = vmatpush1.msra.mxu0 0.0
    %364 = vmatprep.subr.mxu0 0.0
    %365 = vmatpush1.msra.mxu0 0.0
    %366 = vmatprep.subr.mxu0 0.0
    %367 = vmatpush1.msra.mxu0 0.0
    %368 = vmatprep.subr.mxu0 0.0
    %369 = vmatpush1.msra.mxu0 0.0
    %370 = vmatprep.subr.mxu0 0.0
    %371 = vmatpush1.msra.mxu0 0.0
    %372 = vmatprep.mubr.f32.mxu0 0.0
    %373 = vmatmul.mubr.f32.gmra.mrb[0].mxu0 %v297
    %v374 = vpop.f32.mrb[0].mxu0
    %v375 = vadd.f32 %v293, %v374
    %v376 = vpop.f32.mrb[0].mxu0
    %377 = vmatprep.mubr.f32.mxu0 0.0
    %378 = vmatmul.mubr.f32.gmra.mrb[0].mxu0 %v300
    %v379 = vpop.f32.mrb[0].mxu0
    %v380 = vadd.f32 %v293, %v379
    %v381 = vpop.f32.mrb[0].mxu0
    %382 = vmatprep.mubr.f32.mxu0 0.0
    %383 = vmatmul.mubr.f32.gmra.mrb[0].mxu0 %v303
    %v384 = vpop.f32.mrb[0].mxu0
    %v385 = vadd.f32 %v293, %v384
    %v386 = vpop.f32.mrb[0].mxu0
    %387 = vmatprep.mubr.f32.mxu0 0.0
    %388 = vmatmul.mubr.f32.gmra.mrb[0].mxu0 %v306
    %v389 = vpop.f32.mrb[0].mxu0
    %v390 = vadd.f32 %v293, %v389
    %v391 = vpop.f32.mrb[0].mxu0
    %392 = vdwg.mxu0
    %v393 = vld [vmem:[#allocation16] sm:$0xff]
    %v394 = vld [vmem:[#allocation16 + $0x8] sm:$0xff]
    %v395 = vld [vmem:[#allocation16 + $0x10] sm:$0xff]
    %v396 = vld [vmem:[#allocation16 + $0x18] sm:$0xff]
    %v397 = vld [vmem:[#allocation19] sm:$0x1]
    %v399 = vlaneseq
    %v400 = vshrl.u32 %v399, 7
    %v401 = vsub.s32 0, %v400
    %v402 = vrot.slane %v397, %v401
    %404 = vmatprep.subr.mxu0 0.0
    %405 = vmatpush1.msra.mxu0 %v393
    %406 = vmatprep.subr.mxu0 0.0
    %407 = vmatpush1.msra.mxu0 %v394
    %408 = vmatprep.subr.mxu0 0.0
    %409 = vmatpush1.msra.mxu0 %v395
    %410 = vmatprep.subr.mxu0 0.0
    %411 = vmatpush1.msra.mxu0 %v396
    %412 = vmatprep.subr.mxu0 0.0
    %413 = vmatpush1.msra.mxu0 0.0
    %414 = vmatprep.subr.mxu0 0.0
    %415 = vmatpush1.msra.mxu0 0.0
    %416 = vmatprep.subr.mxu0 0.0
    %417 = vmatpush1.msra.mxu0 0.0
    %418 = vmatprep.subr.mxu0 0.0
    %419 = vmatpush1.msra.mxu0 0.0
    %420 = vmatprep.subr.mxu0 0.0
    %421 = vmatpush1.msra.mxu0 0.0
    %422 = vmatprep.subr.mxu0 0.0
    %423 = vmatpush1.msra.mxu0 0.0
    %424 = vmatprep.subr.mxu0 0.0
    %425 = vmatpush1.msra.mxu0 0.0
    %426 = vmatprep.subr.mxu0 0.0
    %427 = vmatpush1.msra.mxu0 0.0
    %428 = vmatprep.subr.mxu0 0.0
    %429 = vmatpush1.msra.mxu0 0.0
    %430 = vmatprep.subr.mxu0 0.0
    %431 = vmatpush1.msra.mxu0 0.0
    %432 = vmatprep.subr.mxu0 0.0
    %433 = vmatpush1.msra.mxu0 0.0
    %434 = vmatprep.subr.mxu0 0.0
    %435 = vmatpush1.msra.mxu0 0.0
    %436 = vmatprep.subr.mxu0 0.0
    %437 = vmatpush1.msra.mxu0 0.0
    %438 = vmatprep.subr.mxu0 0.0
    %439 = vmatpush1.msra.mxu0 0.0
    %440 = vmatprep.subr.mxu0 0.0
    %441 = vmatpush1.msra.mxu0 0.0
    %442 = vmatprep.subr.mxu0 0.0
    %443 = vmatpush1.msra.mxu0 0.0
    %444 = vmatprep.subr.mxu0 0.0
    %445 = vmatpush1.msra.mxu0 0.0
    %446 = vmatprep.subr.mxu0 0.0
    %447 = vmatpush1.msra.mxu0 0.0
    %448 = vmatprep.subr.mxu0 0.0
    %449 = vmatpush1.msra.mxu0 0.0
    %450 = vmatprep.subr.mxu0 0.0
    %451 = vmatpush1.msra.mxu0 0.0
    %452 = vmatprep.subr.mxu0 0.0
    %453 = vmatpush1.msra.mxu0 0.0
    %454 = vmatprep.subr.mxu0 0.0
    %455 = vmatpush1.msra.mxu0 0.0
    %456 = vmatprep.subr.mxu0 0.0
    %457 = vmatpush1.msra.mxu0 0.0
    %458 = vmatprep.subr.mxu0 0.0
    %459 = vmatpush1.msra.mxu0 0.0
    %460 = vmatprep.subr.mxu0 0.0
    %461 = vmatpush1.msra.mxu0 0.0
    %462 = vmatprep.subr.mxu0 0.0
    %463 = vmatpush1.msra.mxu0 0.0
    %464 = vmatprep.subr.mxu0 0.0
    %465 = vmatpush1.msra.mxu0 0.0
    %466 = vmatprep.subr.mxu0 0.0
    %467 = vmatpush1.msra.mxu0 0.0
    %468 = vmatprep.mubr.f32.mxu0 0.0
    %469 = vmatmul.mubr.f32.gmra.mrb[0].mxu0 %v297
    %v470 = vpop.f32.mrb[0].mxu0
    %v471 = vadd.f32 %v402, %v470
    %v472 = vpop.f32.mrb[0].mxu0
    %473 = vmatprep.mubr.f32.mxu0 0.0
    %474 = vmatmul.mubr.f32.gmra.mrb[0].mxu0 %v300
    %v475 = vpop.f32.mrb[0].mxu0
    %v476 = vadd.f32 %v402, %v475
    %v477 = vpop.f32.mrb[0].mxu0
    %478 = vmatprep.mubr.f32.mxu0 0.0
    %479 = vmatmul.mubr.f32.gmra.mrb[0].mxu0 %v303
    %v480 = vpop.f32.mrb[0].mxu0
    %v481 = vadd.f32 %v402, %v480
    %v482 = vpop.f32.mrb[0].mxu0
    %483 = vmatprep.mubr.f32.mxu0 0.0
    %484 = vmatmul.mubr.f32.gmra.mrb[0].mxu0 %v306
    %v485 = vpop.f32.mrb[0].mxu0
    %v486 = vadd.f32 %v402, %v485
    %v487 = vpop.f32.mrb[0].mxu0
    %488 = vdwg.mxu0
    %493 = vrot.lane.b32.xlu0 %v375, 96
    %v494 = vpop.permute.xlu0 %493
    %495 = vrot.lane.b32.xlu0 %v380, 96
    %v496 = vpop.permute.xlu0 %495
    %497 = vrot.lane.b32.xlu0 %v385, 96
    %v498 = vpop.permute.xlu0 %497
    %499 = vrot.lane.b32.xlu0 %v390, 96
    %v500 = vpop.permute.xlu0 %499
    %vm505 = vcmask 130048
    %v507 = vsel %vm505, %v266, 0
    %v510 = vsel %vm505, %v267, 0
    %512 = vmatprep.subr.mxu0 0.0
    %513 = vmatpush1.msra.mxu0 %v375
    %514 = vmatprep.subr.mxu0 0.0
    %515 = vmatpush1.msra.mxu0 %v380
    %516 = vmatprep.subr.mxu0 0.0
    %517 = vmatpush1.msra.mxu0 0.0
    %518 = vmatprep.subr.mxu0 0.0
    %519 = vmatpush1.msra.mxu0 0.0
    %520 = vmatprep.subr.mxu0 0.0
    %521 = vmatpush1.msra.mxu0 0.0
    %522 = vmatprep.subr.mxu0 0.0
    %523 = vmatpush1.msra.mxu0 0.0
    %524 = vmatprep.subr.mxu0 0.0
    %525 = vmatpush1.msra.mxu0 0.0
    %526 = vmatprep.subr.mxu0 0.0
    %527 = vmatpush1.msra.mxu0 0.0
    %528 = vmatprep.subr.mxu0 0.0
    %529 = vmatpush1.msra.mxu0 0.0
    %530 = vmatprep.subr.mxu0 0.0
    %531 = vmatpush1.msra.mxu0 0.0
    %532 = vmatprep.subr.mxu0 0.0
    %533 = vmatpush1.msra.mxu0 0.0
    %534 = vmatprep.subr.mxu0 0.0
    %535 = vmatpush1.msra.mxu0 0.0
    %536 = vmatprep.subr.mxu0 0.0
    %537 = vmatpush1.msra.mxu0 0.0
    %538 = vmatprep.subr.mxu0 0.0
    %539 = vmatpush1.msra.mxu0 0.0
    %540 = vmatprep.subr.mxu0 0.0
    %541 = vmatpush1.msra.mxu0 0.0
    %542 = vmatprep.subr.mxu0 0.0
    %543 = vmatpush1.msra.mxu0 0.0
    %544 = vmatprep.subr.mxu0 0.0
    %545 = vmatpush1.msra.mxu0 0.0
    %546 = vmatprep.subr.mxu0 0.0
    %547 = vmatpush1.msra.mxu0 0.0
    %548 = vmatprep.subr.mxu0 0.0
    %549 = vmatpush1.msra.mxu0 0.0
    %550 = vmatprep.subr.mxu0 0.0
    %551 = vmatpush1.msra.mxu0 0.0
    %552 = vmatprep.subr.mxu0 0.0
    %553 = vmatpush1.msra.mxu0 0.0
    %554 = vmatprep.subr.mxu0 0.0
    %555 = vmatpush1.msra.mxu0 0.0
    %556 = vmatprep.subr.mxu0 0.0
    %557 = vmatpush1.msra.mxu0 0.0
    %558 = vmatprep.subr.mxu0 0.0
    %559 = vmatpush1.msra.mxu0 0.0
    %560 = vmatprep.subr.mxu0 0.0
    %561 = vmatpush1.msra.mxu0 0.0
    %562 = vmatprep.subr.mxu0 0.0
    %563 = vmatpush1.msra.mxu0 0.0
    %564 = vmatprep.subr.mxu0 0.0
    %565 = vmatpush1.msra.mxu0 0.0
    %566 = vmatprep.subr.mxu0 0.0
    %567 = vmatpush1.msra.mxu0 0.0
    %568 = vmatprep.subr.mxu0 0.0
    %569 = vmatpush1.msra.mxu0 0.0
    %570 = vmatprep.subr.mxu0 0.0
    %571 = vmatpush1.msra.mxu0 0.0
    %572 = vmatprep.subr.mxu0 0.0
    %573 = vmatpush1.msra.mxu0 0.0
    %574 = vmatprep.subr.mxu0 0.0
    %575 = vmatpush1.msra.mxu0 0.0
    %576 = vmatprep.mubr.f32.mxu0 0.0
    %577 = vmatmul.mubr.f32.gmra.mrb[0].mxu0 %v507
    %v578 = vpop.f32.mrb[0].mxu0
    %v579 = vadd.f32 0.0, %v578
    %v580 = vpop.f32.mrb[0].mxu0
    %581 = vmatprep.mubr.f32.mxu0 0.0
    %582 = vmatmul.mubr.f32.gmra.mrb[0].mxu0 %v510
    %v583 = vpop.f32.mrb[0].mxu0
    %v584 = vadd.f32 0.0, %v583
    %v585 = vpop.f32.mrb[0].mxu0
    %586 = vdwg.mxu0
    %v588 = vsel %vm505, %v268, 0
    %v591 = vsel %vm505, %v269, 0
    %593 = vmatprep.subr.mxu0 0.0
    %594 = vmatpush1.msra.mxu0 %v385
    %595 = vmatprep.subr.mxu0 0.0
    %596 = vmatpush1.msra.mxu0 %v390
    %597 = vmatprep.subr.mxu0 0.0
    %598 = vmatpush1.msra.mxu0 0.0
    %599 = vmatprep.subr.mxu0 0.0
    %600 = vmatpush1.msra.mxu0 0.0
    %601 = vmatprep.subr.mxu0 0.0
    %602 = vmatpush1.msra.mxu0 0.0
    %603 = vmatprep.subr.mxu0 0.0
    %604 = vmatpush1.msra.mxu0 0.0
    %605 = vmatprep.subr.mxu0 0.0
    %606 = vmatpush1.msra.mxu0 0.0
    %607 = vmatprep.subr.mxu0 0.0
    %608 = vmatpush1.msra.mxu0 0.0
    %609 = vmatprep.subr.mxu0 0.0
    %610 = vmatpush1.msra.mxu0 0.0
    %611 = vmatprep.subr.mxu0 0.0
    %612 = vmatpush1.msra.mxu0 0.0
    %613 = vmatprep.subr.mxu0 0.0
    %614 = vmatpush1.msra.mxu0 0.0
    %615 = vmatprep.subr.mxu0 0.0
    %616 = vmatpush1.msra.mxu0 0.0
    %617 = vmatprep.subr.mxu0 0.0
    %618 = vmatpush1.msra.mxu0 0.0
    %619 = vmatprep.subr.mxu0 0.0
    %620 = vmatpush1.msra.mxu0 0.0
    %621 = vmatprep.subr.mxu0 0.0
    %622 = vmatpush1.msra.mxu0 0.0
    %623 = vmatprep.subr.mxu0 0.0
    %624 = vmatpush1.msra.mxu0 0.0
    %625 = vmatprep.subr.mxu0 0.0
    %626 = vmatpush1.msra.mxu0 0.0
    %627 = vmatprep.subr.mxu0 0.0
    %628 = vmatpush1.msra.mxu0 0.0
    %629 = vmatprep.subr.mxu0 0.0
    %630 = vmatpush1.msra.mxu0 0.0
    %631 = vmatprep.subr.mxu0 0.0
    %632 = vmatpush1.msra.mxu0 0.0
    %633 = vmatprep.subr.mxu0 0.0
    %634 = vmatpush1.msra.mxu0 0.0
    %635 = vmatprep.subr.mxu0 0.0
    %636 = vmatpush1.msra.mxu0 0.0
    %637 = vmatprep.subr.mxu0 0.0
    %638 = vmatpush1.msra.mxu0 0.0
    %639 = vmatprep.subr.mxu0 0.0
    %640 = vmatpush1.msra.mxu0 0.0
    %641 = vmatprep.subr.mxu0 0.0
    %642 = vmatpush1.msra.mxu0 0.0
    %643 = vmatprep.subr.mxu0 0.0
    %644 = vmatpush1.msra.mxu0 0.0
    %645 = vmatprep.subr.mxu0 0.0
    %646 = vmatpush1.msra.mxu0 0.0
    %647 = vmatprep.subr.mxu0 0.0
    %648 = vmatpush1.msra.mxu0 0.0
    %649 = vmatprep.subr.mxu0 0.0
    %650 = vmatpush1.msra.mxu0 0.0
    %651 = vmatprep.subr.mxu0 0.0
    %652 = vmatpush1.msra.mxu0 0.0
    %653 = vmatprep.subr.mxu0 0.0
    %654 = vmatpush1.msra.mxu0 0.0
    %655 = vmatprep.subr.mxu0 0.0
    %656 = vmatpush1.msra.mxu0 0.0
    %657 = vmatprep.mubr.f32.mxu0 0.0
    %658 = vmatmul.mubr.f32.gmra.mrb[0].mxu0 %v588
    %v659 = vpop.f32.mrb[0].mxu0
    %v660 = vadd.f32 0.0, %v659
    %v661 = vpop.f32.mrb[0].mxu0
    %662 = vmatprep.mubr.f32.mxu0 0.0
    %663 = vmatmul.mubr.f32.gmra.mrb[0].mxu0 %v591
    %v664 = vpop.f32.mrb[0].mxu0
    %v665 = vadd.f32 0.0, %v664
    %v666 = vpop.f32.mrb[0].mxu0
    %667 = vdwg.mxu0
    %v669 = vsel %vm505, %v270, 0
    %v672 = vsel %vm505, %v271, 0
    %674 = vmatprep.subr.mxu0 0.0
    %675 = vmatpush1.msra.mxu0 %v494
    %676 = vmatprep.subr.mxu0 0.0
    %677 = vmatpush1.msra.mxu0 %v496
    %678 = vmatprep.subr.mxu0 0.0
    %679 = vmatpush1.msra.mxu0 0.0
    %680 = vmatprep.subr.mxu0 0.0
    %681 = vmatpush1.msra.mxu0 0.0
    %682 = vmatprep.subr.mxu0 0.0
    %683 = vmatpush1.msra.mxu0 0.0
    %684 = vmatprep.subr.mxu0 0.0
    %685 = vmatpush1.msra.mxu0 0.0
    %686 = vmatprep.subr.mxu0 0.0
    %687 = vmatpush1.msra.mxu0 0.0
    %688 = vmatprep.subr.mxu0 0.0
    %689 = vmatpush1.msra.mxu0 0.0
    %690 = vmatprep.subr.mxu0 0.0
    %691 = vmatpush1.msra.mxu0 0.0
    %692 = vmatprep.subr.mxu0 0.0
    %693 = vmatpush1.msra.mxu0 0.0
    %694 = vmatprep.subr.mxu0 0.0
    %695 = vmatpush1.msra.mxu0 0.0
    %696 = vmatprep.subr.mxu0 0.0
    %697 = vmatpush1.msra.mxu0 0.0
    %698 = vmatprep.subr.mxu0 0.0
    %699 = vmatpush1.msra.mxu0 0.0
    %700 = vmatprep.subr.mxu0 0.0
    %701 = vmatpush1.msra.mxu0 0.0
    %702 = vmatprep.subr.mxu0 0.0
    %703 = vmatpush1.msra.mxu0 0.0
    %704 = vmatprep.subr.mxu0 0.0
    %705 = vmatpush1.msra.mxu0 0.0
    %706 = vmatprep.subr.mxu0 0.0
    %707 = vmatpush1.msra.mxu0 0.0
    %708 = vmatprep.subr.mxu0 0.0
    %709 = vmatpush1.msra.mxu0 0.0
    %710 = vmatprep.subr.mxu0 0.0
    %711 = vmatpush1.msra.mxu0 0.0
    %712 = vmatprep.subr.mxu0 0.0
    %713 = vmatpush1.msra.mxu0 0.0
    %714 = vmatprep.subr.mxu0 0.0
    %715 = vmatpush1.msra.mxu0 0.0
    %716 = vmatprep.subr.mxu0 0.0
    %717 = vmatpush1.msra.mxu0 0.0
    %718 = vmatprep.subr.mxu0 0.0
    %719 = vmatpush1.msra.mxu0 0.0
    %720 = vmatprep.subr.mxu0 0.0
    %721 = vmatpush1.msra.mxu0 0.0
    %722 = vmatprep.subr.mxu0 0.0
    %723 = vmatpush1.msra.mxu0 0.0
    %724 = vmatprep.subr.mxu0 0.0
    %725 = vmatpush1.msra.mxu0 0.0
    %726 = vmatprep.subr.mxu0 0.0
    %727 = vmatpush1.msra.mxu0 0.0
    %728 = vmatprep.subr.mxu0 0.0
    %729 = vmatpush1.msra.mxu0 0.0
    %730 = vmatprep.subr.mxu0 0.0
    %731 = vmatpush1.msra.mxu0 0.0
    %732 = vmatprep.subr.mxu0 0.0
    %733 = vmatpush1.msra.mxu0 0.0
    %734 = vmatprep.subr.mxu0 0.0
    %735 = vmatpush1.msra.mxu0 0.0
    %736 = vmatprep.subr.mxu0 0.0
    %737 = vmatpush1.msra.mxu0 0.0
    %738 = vmatprep.mubr.f32.mxu0 0.0
    %739 = vmatmul.mubr.f32.gmra.mrb[0].mxu0 %v669
    %v740 = vpop.f32.mrb[0].mxu0
    %v741 = vadd.f32 0.0, %v740
    %v742 = vpop.f32.mrb[0].mxu0
    %743 = vmatprep.mubr.f32.mxu0 0.0
    %744 = vmatmul.mubr.f32.gmra.mrb[0].mxu0 %v672
    %v745 = vpop.f32.mrb[0].mxu0
    %v746 = vadd.f32 0.0, %v745
    %v747 = vpop.f32.mrb[0].mxu0
    %748 = vdwg.mxu0
    %v750 = vsel %vm505, %v272, 0
    %v753 = vsel %vm505, %v273, 0
    %755 = vmatprep.subr.mxu0 0.0
    %756 = vmatpush1.msra.mxu0 %v498
    %757 = vmatprep.subr.mxu0 0.0
    %758 = vmatpush1.msra.mxu0 %v500
    %759 = vmatprep.subr.mxu0 0.0
    %760 = vmatpush1.msra.mxu0 0.0
    %761 = vmatprep.subr.mxu0 0.0
    %762 = vmatpush1.msra.mxu0 0.0
    %763 = vmatprep.subr.mxu0 0.0
    %764 = vmatpush1.msra.mxu0 0.0
    %765 = vmatprep.subr.mxu0 0.0
    %766 = vmatpush1.msra.mxu0 0.0
    %767 = vmatprep.subr.mxu0 0.0
    %768 = vmatpush1.msra.mxu0 0.0
    %769 = vmatprep.subr.mxu0 0.0
    %770 = vmatpush1.msra.mxu0 0.0
    %771 = vmatprep.subr.mxu0 0.0
    %772 = vmatpush1.msra.mxu0 0.0
    %773 = vmatprep.subr.mxu0 0.0
    %774 = vmatpush1.msra.mxu0 0.0
    %775 = vmatprep.subr.mxu0 0.0
    %776 = vmatpush1.msra.mxu0 0.0
    %777 = vmatprep.subr.mxu0 0.0
    %778 = vmatpush1.msra.mxu0 0.0
    %779 = vmatprep.subr.mxu0 0.0
    %780 = vmatpush1.msra.mxu0 0.0
    %781 = vmatprep.subr.mxu0 0.0
    %782 = vmatpush1.msra.mxu0 0.0
    %783 = vmatprep.subr.mxu0 0.0
    %784 = vmatpush1.msra.mxu0 0.0
    %785 = vmatprep.subr.mxu0 0.0
    %786 = vmatpush1.msra.mxu0 0.0
    %787 = vmatprep.subr.mxu0 0.0
    %788 = vmatpush1.msra.mxu0 0.0
    %789 = vmatprep.subr.mxu0 0.0
    %790 = vmatpush1.msra.mxu0 0.0
    %791 = vmatprep.subr.mxu0 0.0
    %792 = vmatpush1.msra.mxu0 0.0
    %793 = vmatprep.subr.mxu0 0.0
    %794 = vmatpush1.msra.mxu0 0.0
    %795 = vmatprep.subr.mxu0 0.0
    %796 = vmatpush1.msra.mxu0 0.0
    %797 = vmatprep.subr.mxu0 0.0
    %798 = vmatpush1.msra.mxu0 0.0
    %799 = vmatprep.subr.mxu0 0.0
    %800 = vmatpush1.msra.mxu0 0.0
    %801 = vmatprep.subr.mxu0 0.0
    %802 = vmatpush1.msra.mxu0 0.0
    %803 = vmatprep.subr.mxu0 0.0
    %804 = vmatpush1.msra.mxu0 0.0
    %805 = vmatprep.subr.mxu0 0.0
    %806 = vmatpush1.msra.mxu0 0.0
    %807 = vmatprep.subr.mxu0 0.0
    %808 = vmatpush1.msra.mxu0 0.0
    %809 = vmatprep.subr.mxu0 0.0
    %810 = vmatpush1.msra.mxu0 0.0
    %811 = vmatprep.subr.mxu0 0.0
    %812 = vmatpush1.msra.mxu0 0.0
    %813 = vmatprep.subr.mxu0 0.0
    %814 = vmatpush1.msra.mxu0 0.0
    %815 = vmatprep.subr.mxu0 0.0
    %816 = vmatpush1.msra.mxu0 0.0
    %817 = vmatprep.subr.mxu0 0.0
    %818 = vmatpush1.msra.mxu0 0.0
    %819 = vmatprep.mubr.f32.mxu0 0.0
    %820 = vmatmul.mubr.f32.gmra.mrb[0].mxu0 %v750
    %v821 = vpop.f32.mrb[0].mxu0
    %v822 = vadd.f32 0.0, %v821
    %v823 = vpop.f32.mrb[0].mxu0
    %824 = vmatprep.mubr.f32.mxu0 0.0
    %825 = vmatmul.mubr.f32.gmra.mrb[0].mxu0 %v753
    %v826 = vpop.f32.mrb[0].mxu0
    %v827 = vadd.f32 0.0, %v826
    %v828 = vpop.f32.mrb[0].mxu0
    %829 = vdwg.mxu0
    %v830 = vld [vmem:[#allocation13] sm:$0xff]
    %v831 = vld [vmem:[#allocation13 + $0x8] sm:$0xff]
    %v832 = vld [vmem:[#allocation13 + $0x10] sm:$0xff]
    %v833 = vld [vmem:[#allocation13 + $0x18] sm:$0xff]
    %v834 = vld [vmem:[#allocation14] sm:$0xff]
    %v835 = vld [vmem:[#allocation14 + $0x8] sm:$0xff]
    %v836 = vld [vmem:[#allocation14 + $0x10] sm:$0xff]
    %v837 = vld [vmem:[#allocation14 + $0x18] sm:$0xff]
    %v839 = vsel %vm295, %v741, 0
    %v842 = vsel %vm295, %v746, 0
    %v845 = vsel %vm295, %v822, 0
    %v848 = vsel %vm295, %v827, 0
    %850 = vmatprep.subr.mxu0 0.0
    %851 = vmatpush1.msra.mxu0 %v834
    %852 = vmatprep.subr.mxu0 0.0
    %853 = vmatpush1.msra.mxu0 %v835
    %854 = vmatprep.subr.mxu0 0.0
    %855 = vmatpush1.msra.mxu0 %v836
    %856 = vmatprep.subr.mxu0 0.0
    %857 = vmatpush1.msra.mxu0 %v837
    %858 = vmatprep.subr.mxu0 0.0
    %859 = vmatpush1.msra.mxu0 0.0
    %860 = vmatprep.subr.mxu0 0.0
    %861 = vmatpush1.msra.mxu0 0.0
    %862 = vmatprep.subr.mxu0 0.0
    %863 = vmatpush1.msra.mxu0 0.0
    %864 = vmatprep.subr.mxu0 0.0
    %865 = vmatpush1.msra.mxu0 0.0
    %866 = vmatprep.subr.mxu0 0.0
    %867 = vmatpush1.msra.mxu0 0.0
    %868 = vmatprep.subr.mxu0 0.0
    %869 = vmatpush1.msra.mxu0 0.0
    %870 = vmatprep.subr.mxu0 0.0
    %871 = vmatpush1.msra.mxu0 0.0
    %872 = vmatprep.subr.mxu0 0.0
    %873 = vmatpush1.msra.mxu0 0.0
    %874 = vmatprep.subr.mxu0 0.0
    %875 = vmatpush1.msra.mxu0 0.0
    %876 = vmatprep.subr.mxu0 0.0
    %877 = vmatpush1.msra.mxu0 0.0
    %878 = vmatprep.subr.mxu0 0.0
    %879 = vmatpush1.msra.mxu0 0.0
    %880 = vmatprep.subr.mxu0 0.0
    %881 = vmatpush1.msra.mxu0 0.0
    %882 = vmatprep.subr.mxu0 0.0
    %883 = vmatpush1.msra.mxu0 0.0
    %884 = vmatprep.subr.mxu0 0.0
    %885 = vmatpush1.msra.mxu0 0.0
    %886 = vmatprep.subr.mxu0 0.0
    %887 = vmatpush1.msra.mxu0 0.0
    %888 = vmatprep.subr.mxu0 0.0
    %889 = vmatpush1.msra.mxu0 0.0
    %890 = vmatprep.subr.mxu0 0.0
    %891 = vmatpush1.msra.mxu0 0.0
    %892 = vmatprep.subr.mxu0 0.0
    %893 = vmatpush1.msra.mxu0 0.0
    %894 = vmatprep.subr.mxu0 0.0
    %895 = vmatpush1.msra.mxu0 0.0
    %896 = vmatprep.subr.mxu0 0.0
    %897 = vmatpush1.msra.mxu0 0.0
    %898 = vmatprep.subr.mxu0 0.0
    %899 = vmatpush1.msra.mxu0 0.0
    %900 = vmatprep.subr.mxu0 0.0
    %901 = vmatpush1.msra.mxu0 0.0
    %902 = vmatprep.subr.mxu0 0.0
    %903 = vmatpush1.msra.mxu0 0.0
    %904 = vmatprep.subr.mxu0 0.0
    %905 = vmatpush1.msra.mxu0 0.0
    %906 = vmatprep.subr.mxu0 0.0
    %907 = vmatpush1.msra.mxu0 0.0
    %908 = vmatprep.subr.mxu0 0.0
    %909 = vmatpush1.msra.mxu0 0.0
    %910 = vmatprep.subr.mxu0 0.0
    %911 = vmatpush1.msra.mxu0 0.0
    %912 = vmatprep.subr.mxu0 0.0
    %913 = vmatpush1.msra.mxu0 0.0
    %914 = vmatprep.mubr.f32.mxu0 0.0
    %915 = vmatmul.mubr.f32.gmra.mrb[0].mxu0 %v839
    %v916 = vpop.f32.mrb[0].mxu0
    %v917 = vadd.f32 0.0, %v916
    %v918 = vpop.f32.mrb[0].mxu0
    %919 = vmatprep.mubr.f32.mxu0 0.0
    %920 = vmatmul.mubr.f32.gmra.mrb[0].mxu0 %v842
    %v921 = vpop.f32.mrb[0].mxu0
    %v922 = vadd.f32 0.0, %v921
    %v923 = vpop.f32.mrb[0].mxu0
    %924 = vmatprep.mubr.f32.mxu0 0.0
    %925 = vmatmul.mubr.f32.gmra.mrb[0].mxu0 %v845
    %v926 = vpop.f32.mrb[0].mxu0
    %v927 = vadd.f32 0.0, %v926
    %v928 = vpop.f32.mrb[0].mxu0
    %929 = vmatprep.mubr.f32.mxu0 0.0
    %930 = vmatmul.mubr.f32.gmra.mrb[0].mxu0 %v848
    %v931 = vpop.f32.mrb[0].mxu0
    %v932 = vadd.f32 0.0, %v931
    %v933 = vpop.f32.mrb[0].mxu0
    %934 = vdwg.mxu0
    %v936 = vsel %vm295, %v579, 0
    %v939 = vsel %vm295, %v584, 0
    %v942 = vsel %vm295, %v660, 0
    %v945 = vsel %vm295, %v665, 0
    %947 = vmatprep.subr.mxu0 0.0
    %948 = vmatpush1.msra.mxu0 %v830
    %949 = vmatprep.subr.mxu0 0.0
    %950 = vmatpush1.msra.mxu0 %v831
    %951 = vmatprep.subr.mxu0 0.0
    %952 = vmatpush1.msra.mxu0 %v832
    %953 = vmatprep.subr.mxu0 0.0
    %954 = vmatpush1.msra.mxu0 %v833
    %955 = vmatprep.subr.mxu0 0.0
    %956 = vmatpush1.msra.mxu0 0.0
    %957 = vmatprep.subr.mxu0 0.0
    %958 = vmatpush1.msra.mxu0 0.0
    %959 = vmatprep.subr.mxu0 0.0
    %960 = vmatpush1.msra.mxu0 0.0
    %961 = vmatprep.subr.mxu0 0.0
    %962 = vmatpush1.msra.mxu0 0.0
    %963 = vmatprep.subr.mxu0 0.0
    %964 = vmatpush1.msra.mxu0 0.0
    %965 = vmatprep.subr.mxu0 0.0
    %966 = vmatpush1.msra.mxu0 0.0
    %967 = vmatprep.subr.mxu0 0.0
    %968 = vmatpush1.msra.mxu0 0.0
    %969 = vmatprep.subr.mxu0 0.0
    %970 = vmatpush1.msra.mxu0 0.0
    %971 = vmatprep.subr.mxu0 0.0
    %972 = vmatpush1.msra.mxu0 0.0
    %973 = vmatprep.subr.mxu0 0.0
    %974 = vmatpush1.msra.mxu0 0.0
    %975 = vmatprep.subr.mxu0 0.0
    %976 = vmatpush1.msra.mxu0 0.0
    %977 = vmatprep.subr.mxu0 0.0
    %978 = vmatpush1.msra.mxu0 0.0
    %979 = vmatprep.subr.mxu0 0.0
    %980 = vmatpush1.msra.mxu0 0.0
    %981 = vmatprep.subr.mxu0 0.0
    %982 = vmatpush1.msra.mxu0 0.0
    %983 = vmatprep.subr.mxu0 0.0
    %984 = vmatpush1.msra.mxu0 0.0
    %985 = vmatprep.subr.mxu0 0.0
    %986 = vmatpush1.msra.mxu0 0.0
    %987 = vmatprep.subr.mxu0 0.0
    %988 = vmatpush1.msra.mxu0 0.0
    %989 = vmatprep.subr.mxu0 0.0
    %990 = vmatpush1.msra.mxu0 0.0
    %991 = vmatprep.subr.mxu0 0.0
    %992 = vmatpush1.msra.mxu0 0.0
    %993 = vmatprep.subr.mxu0 0.0
    %994 = vmatpush1.msra.mxu0 0.0
    %995 = vmatprep.subr.mxu0 0.0
    %996 = vmatpush1.msra.mxu0 0.0
    %997 = vmatprep.subr.mxu0 0.0
    %998 = vmatpush1.msra.mxu0 0.0
    %999 = vmatprep.subr.mxu0 0.0
    %1000 = vmatpush1.msra.mxu0 0.0
    %1001 = vmatprep.subr.mxu0 0.0
    %1002 = vmatpush1.msra.mxu0 0.0
    %1003 = vmatprep.subr.mxu0 0.0
    %1004 = vmatpush1.msra.mxu0 0.0
    %1005 = vmatprep.subr.mxu0 0.0
    %1006 = vmatpush1.msra.mxu0 0.0
    %1007 = vmatprep.subr.mxu0 0.0
    %1008 = vmatpush1.msra.mxu0 0.0
    %1009 = vmatprep.subr.mxu0 0.0
    %1010 = vmatpush1.msra.mxu0 0.0
    %1011 = vmatprep.mubr.f32.mxu0 0.0
    %1012 = vmatmul.mubr.f32.gmra.mrb[0].mxu0 %v936
    %v1013 = vpop.f32.mrb[0].mxu0
    %v1014 = vadd.f32 %v917, %v1013
    %v1015 = vpop.f32.mrb[0].mxu0
    %1016 = vmatprep.mubr.f32.mxu0 0.0
    %1017 = vmatmul.mubr.f32.gmra.mrb[0].mxu0 %v939
    %v1018 = vpop.f32.mrb[0].mxu0
    %v1019 = vadd.f32 %v922, %v1018
    %v1020 = vpop.f32.mrb[0].mxu0
    %1021 = vmatprep.mubr.f32.mxu0 0.0
    %1022 = vmatmul.mubr.f32.gmra.mrb[0].mxu0 %v942
    %v1023 = vpop.f32.mrb[0].mxu0
    %v1024 = vadd.f32 %v927, %v1023
    %v1025 = vpop.f32.mrb[0].mxu0
    %1026 = vmatprep.mubr.f32.mxu0 0.0
    %1027 = vmatmul.mubr.f32.gmra.mrb[0].mxu0 %v945
    %v1028 = vpop.f32.mrb[0].mxu0
    %v1029 = vadd.f32 %v932, %v1028
    %v1030 = vpop.f32.mrb[0].mxu0
    %1031 = vdwg.mxu0
    %v1032 = vld [vmem:[#allocation17] sm:$0x1]
    %v1034 = vlaneseq
    %v1035 = vshrl.u32 %v1034, 7
    %v1036 = vsub.s32 0, %v1035
    %v1037 = vrot.slane %v1032, %v1036
    %v1039 = vadd.f32 %v1014, %v1037
    %v1040 = vadd.f32 %v1019, %v1037
    %v1041 = vadd.f32 %v1024, %v1037
    %v1042 = vadd.f32 %v1029, %v1037
    %v1043 = vadd.f32 %v1039, %v471
    %v1044 = vadd.f32 %v1040, %v476
    %v1045 = vadd.f32 %v1041, %v481
    %v1046 = vadd.f32 %v1042, %v486
    %v1047 = vxor.u32 %v1043, 2147483648
    %v1048 = vxor.u32 %v1044, 2147483648
    %v1049 = vxor.u32 %v1045, 2147483648
    %v1050 = vxor.u32 %v1046, 2147483648
    %v1051 = vmul.f32 %v1047, 1.442695
    %v1052 = vpow.pop %v1051
    %v1053 = vmul.f32 %v1048, 1.442695
    %v1054 = vpow.pop %v1053
    %v1055 = vmul.f32 %v1049, 1.442695
    %v1056 = vpow.pop %v1055
    %v1057 = vmul.f32 %v1050, 1.442695
    %v1058 = vpow.pop %v1057
    %v1059 = vadd.f32 %v1052, 1.0
    %v1060 = vadd.f32 %v1054, 1.0
    %v1061 = vadd.f32 %v1056, 1.0
    %v1062 = vadd.f32 %v1058, 1.0
    %v1063 = vrcp.pop %v1059
    %v1064 = vmul.f32 1.0, %v1063
    %v1065 = vrcp.pop %v1060
    %v1066 = vmul.f32 1.0, %v1065
    %v1067 = vrcp.pop %v1061
    %v1068 = vmul.f32 1.0, %v1067
    %v1069 = vrcp.pop %v1062
    %v1070 = vmul.f32 1.0, %v1069
    %1075 = vrot.lane.b32.xlu0 %v471, 64
    %v1076 = vpop.permute.xlu0 %1075
    %1077 = vrot.lane.b32.xlu0 %v476, 64
    %v1078 = vpop.permute.xlu0 %1077
    %1079 = vrot.lane.b32.xlu0 %v481, 64
    %v1080 = vpop.permute.xlu0 %1079
    %1081 = vrot.lane.b32.xlu0 %v486, 64
    %v1082 = vpop.permute.xlu0 %1081
    %v1087 = vmul.f32 %v1064, %v1076
    %v1088 = vmul.f32 %v1066, %v1078
    %v1089 = vmul.f32 %v1068, %v1080
    %v1090 = vmul.f32 %v1070, %v1082
    %1095 = vrot.lane.b32.xlu0 %v1039, 64
    %v1096 = vpop.permute.xlu0 %1095
    %1097 = vrot.lane.b32.xlu0 %v1040, 64
    %v1098 = vpop.permute.xlu0 %1097
    %1099 = vrot.lane.b32.xlu0 %v1041, 64
    %v1100 = vpop.permute.xlu0 %1099
    %1101 = vrot.lane.b32.xlu0 %v1042, 64
    %v1102 = vpop.permute.xlu0 %1101
    %v1107 = vadd.f32 %v1087, %v1096
    %v1108 = vadd.f32 %v1088, %v1098
    %v1109 = vadd.f32 %v1089, %v1100
    %v1110 = vadd.f32 %v1090, %v1102
    %v1111 = vtanh.pop %v1107
    %v1112 = vtanh.pop %v1108
    %v1113 = vtanh.pop %v1109
    %v1114 = vtanh.pop %v1110
    %v1115 = vsub.f32 1.0, %v1064
    %v1116 = vsub.f32 1.0, %v1066
    %v1117 = vsub.f32 1.0, %v1068
    %v1118 = vsub.f32 1.0, %v1070
    %1119 = vrot.lane.b32.xlu0 %v274, 32
    %v1120 = vpop.permute.xlu0 %1119
    %1121 = vrot.lane.b32.xlu0 %v275, 32
    %v1122 = vpop.permute.xlu0 %1121
    %1123 = vrot.lane.b32.xlu0 %v276, 32
    %v1124 = vpop.permute.xlu0 %1123
    %1125 = vrot.lane.b32.xlu0 %v277, 32
    %v1126 = vpop.permute.xlu0 %1125
    %v1131 = vmul.f32 %v1115, %v1120
    %v1132 = vmul.f32 %v1116, %v1122
    %v1133 = vmul.f32 %v1117, %v1124
    %v1134 = vmul.f32 %v1118, %v1126
    %1139 = vrot.lane.b32.xlu0 %v1111, 32
    %v1140 = vpop.permute.xlu0 %1139
    %1141 = vrot.lane.b32.xlu0 %v1112, 32
    %v1142 = vpop.permute.xlu0 %1141
    %1143 = vrot.lane.b32.xlu0 %v1113, 32
    %v1144 = vpop.permute.xlu0 %1143
    %1145 = vrot.lane.b32.xlu0 %v1114, 32
    %v1146 = vpop.permute.xlu0 %1145
    %v1151 = vmul.f32 %v1064, %v1140
    %v1152 = vmul.f32 %v1066, %v1142
    %v1153 = vmul.f32 %v1068, %v1144
    %v1154 = vmul.f32 %v1070, %v1146
    %v1155 = vadd.f32 %v1131, %v1151
    %v1156 = vadd.f32 %v1132, %v1152
    %v1157 = vadd.f32 %v1133, %v1153
    %v1158 = vadd.f32 %v1134, %v1154
    %v1159 = vmul.f32 %v1155, %v1155
    %v1160 = vmul.f32 %v1156, %v1156
    %v1161 = vmul.f32 %v1157, %v1157
    %v1162 = vmul.f32 %v1158, %v1158
    %1167 = vrot.lane.b32.xlu0 %v1159, 96
    %v1168 = vpop.permute.xlu0 %1167
    %1169 = vrot.lane.b32.xlu0 %v1160, 96
    %v1170 = vpop.permute.xlu0 %1169
    %1171 = vrot.lane.b32.xlu0 %v1161, 96
    %v1172 = vpop.permute.xlu0 %1171
    %1173 = vrot.lane.b32.xlu0 %v1162, 96
    %v1174 = vpop.permute.xlu0 %1173
    %v1179 = vsel %vm295, %v1168, 0.0
    %1180 = vadd.xlane.f32.xlu0 %v1179
    %v1181 = vpop.xlane.xlu0 %1180
    %v1182 = vsel %vm295, %v1170, 0.0
    %1183 = vadd.xlane.f32.xlu0 %v1182
    %v1184 = vpop.xlane.xlu0 %1183
    %v1185 = vsel %vm295, %v1172, 0.0
    %1186 = vadd.xlane.f32.xlu0 %v1185
    %v1187 = vpop.xlane.xlu0 %1186
    %v1188 = vsel %vm295, %v1174, 0.0
    %1189 = vadd.xlane.f32.xlu0 %v1188
    %v1190 = vpop.xlane.xlu0 %1189
    %v1191 = vmax.f32 %v1181, 1e-24
    %v1192 = vmax.f32 %v1184, 1e-24
    %v1193 = vmax.f32 %v1187, 1e-24
    %v1194 = vmax.f32 %v1190, 1e-24
    %v1195 = vrsqrt.pop %v1191
    %v1196 = vrsqrt.pop %v1192
    %v1197 = vrsqrt.pop %v1193
    %v1198 = vrsqrt.pop %v1194
    %v1199 = vmul.f32 %v1155, %v1195
    %v1200 = vmul.f32 %v1156, %v1196
    %v1201 = vmul.f32 %v1157, %v1197
    %v1202 = vmul.f32 %v1158, %v1198
    %1207 = vrot.lane.b32.xlu0 %v1199, 96
    %v1208 = vpop.permute.xlu0 %1207
    %1209 = vrot.lane.b32.xlu0 %v1200, 96
    %v1210 = vpop.permute.xlu0 %1209
    %1211 = vrot.lane.b32.xlu0 %v1201, 96
    %v1212 = vpop.permute.xlu0 %1211
    %1213 = vrot.lane.b32.xlu0 %v1202, 96
    %v1214 = vpop.permute.xlu0 %1213
    %v1219 = vadd.f32 %v274, %v1208
    %v1220 = vadd.f32 %v275, %v1210
    %v1221 = vadd.f32 %v276, %v1212
    %v1222 = vadd.f32 %v277, %v1214
    %v1223 = vld [vmem:[#allocation20] sm:$0xff]
    %v1224 = vld [vmem:[#allocation20 + $0x8] sm:$0xff]
    %v1225 = vld [vmem:[#allocation20 + $0x10] sm:$0xff]
    %v1226 = vld [vmem:[#allocation20 + $0x18] sm:$0xff]
    %v1228 = vsel %vm295, %v1219, 0
    %v1231 = vsel %vm295, %v1220, 0
    %v1234 = vsel %vm295, %v1221, 0
    %v1237 = vsel %vm295, %v1222, 0
    %1239 = vmatprep.subr.mxu0 0.0
    %1240 = vmatpush1.msra.mxu0 %v1223
    %1241 = vmatprep.subr.mxu0 0.0
    %1242 = vmatpush1.msra.mxu0 %v1224
    %1243 = vmatprep.subr.mxu0 0.0
    %1244 = vmatpush1.msra.mxu0 %v1225
    %1245 = vmatprep.subr.mxu0 0.0
    %1246 = vmatpush1.msra.mxu0 %v1226
    %1247 = vmatprep.subr.mxu0 0.0
    %1248 = vmatpush1.msra.mxu0 0.0
    %1249 = vmatprep.subr.mxu0 0.0
    %1250 = vmatpush1.msra.mxu0 0.0
    %1251 = vmatprep.subr.mxu0 0.0
    %1252 = vmatpush1.msra.mxu0 0.0
    %1253 = vmatprep.subr.mxu0 0.0
    %1254 = vmatpush1.msra.mxu0 0.0
    %1255 = vmatprep.subr.mxu0 0.0
    %1256 = vmatpush1.msra.mxu0 0.0
    %1257 = vmatprep.subr.mxu0 0.0
    %1258 = vmatpush1.msra.mxu0 0.0
    %1259 = vmatprep.subr.mxu0 0.0
    %1260 = vmatpush1.msra.mxu0 0.0
    %1261 = vmatprep.subr.mxu0 0.0
    %1262 = vmatpush1.msra.mxu0 0.0
    %1263 = vmatprep.subr.mxu0 0.0
    %1264 = vmatpush1.msra.mxu0 0.0
    %1265 = vmatprep.subr.mxu0 0.0
    %1266 = vmatpush1.msra.mxu0 0.0
    %1267 = vmatprep.subr.mxu0 0.0
    %1268 = vmatpush1.msra.mxu0 0.0
    %1269 = vmatprep.subr.mxu0 0.0
    %1270 = vmatpush1.msra.mxu0 0.0
    %1271 = vmatprep.subr.mxu0 0.0
    %1272 = vmatpush1.msra.mxu0 0.0
    %1273 = vmatprep.subr.mxu0 0.0
    %1274 = vmatpush1.msra.mxu0 0.0
    %1275 = vmatprep.subr.mxu0 0.0
    %1276 = vmatpush1.msra.mxu0 0.0
    %1277 = vmatprep.subr.mxu0 0.0
    %1278 = vmatpush1.msra.mxu0 0.0
    %1279 = vmatprep.subr.mxu0 0.0
    %1280 = vmatpush1.msra.mxu0 0.0
    %1281 = vmatprep.subr.mxu0 0.0
    %1282 = vmatpush1.msra.mxu0 0.0
    %1283 = vmatprep.subr.mxu0 0.0
    %1284 = vmatpush1.msra.mxu0 0.0
    %1285 = vmatprep.subr.mxu0 0.0
    %1286 = vmatpush1.msra.mxu0 0.0
    %1287 = vmatprep.subr.mxu0 0.0
    %1288 = vmatpush1.msra.mxu0 0.0
    %1289 = vmatprep.subr.mxu0 0.0
    %1290 = vmatpush1.msra.mxu0 0.0
    %1291 = vmatprep.subr.mxu0 0.0
    %1292 = vmatpush1.msra.mxu0 0.0
    %1293 = vmatprep.subr.mxu0 0.0
    %1294 = vmatpush1.msra.mxu0 0.0
    %1295 = vmatprep.subr.mxu0 0.0
    %1296 = vmatpush1.msra.mxu0 0.0
    %1297 = vmatprep.subr.mxu0 0.0
    %1298 = vmatpush1.msra.mxu0 0.0
    %1299 = vmatprep.subr.mxu0 0.0
    %1300 = vmatpush1.msra.mxu0 0.0
    %1301 = vmatprep.subr.mxu0 0.0
    %1302 = vmatpush1.msra.mxu0 0.0
    %1303 = vmatprep.mubr.f32.mxu0 0.0
    %1304 = vmatmul.mubr.f32.gmra.mrb[0].mxu0 %v1228
    %v1305 = vpop.f32.mrb[0].mxu0
    %v1306 = vadd.f32 0.0, %v1305
    %v1307 = vpop.f32.mrb[0].mxu0
    %1308 = vmatprep.mubr.f32.mxu0 0.0
    %1309 = vmatmul.mubr.f32.gmra.mrb[0].mxu0 %v1231
    %v1310 = vpop.f32.mrb[0].mxu0
    %v1311 = vadd.f32 0.0, %v1310
    %v1312 = vpop.f32.mrb[0].mxu0
    %1313 = vmatprep.mubr.f32.mxu0 0.0
    %1314 = vmatmul.mubr.f32.gmra.mrb[0].mxu0 %v1234
    %v1315 = vpop.f32.mrb[0].mxu0
    %v1316 = vadd.f32 0.0, %v1315
    %v1317 = vpop.f32.mrb[0].mxu0
    %1318 = vmatprep.mubr.f32.mxu0 0.0
    %1319 = vmatmul.mubr.f32.gmra.mrb[0].mxu0 %v1237
    %v1320 = vpop.f32.mrb[0].mxu0
    %v1321 = vadd.f32 0.0, %v1320
    %v1322 = vpop.f32.mrb[0].mxu0
    %1323 = vdwg.mxu0
    %v1326 = vlaneseq
    %v1327 = vshrl.u32 %v1326, 7
    %v1328 = vsub.s32 0, %v1327
    %v1329 = vrot.slane %v278, %v1328
    %v1330 = vlaneseq
    %v1331 = vshrl.u32 %v1330, 7
    %v1332 = vsub.s32 0, %v1331
    %v1333 = vrot.slane %v279, %v1332
    %v1336 = vmul.f32 %v1306, %v1329
    %v1337 = vmul.f32 %v1311, %v1329
    %v1338 = vmul.f32 %v1316, %v1333
    %v1339 = vmul.f32 %v1321, %v1333
    %v1340 = vsel %vm295, %v1336, 0.0
    %1341 = vadd.xlane.f32.xlu0 %v1340
    %v1342 = vpop.xlane.xlu0 %1341
    %v1343 = vsel %vm295, %v1337, 0.0
    %1344 = vadd.xlane.f32.xlu0 %v1343
    %v1345 = vpop.xlane.xlu0 %1344
    %v1346 = vsel %vm295, %v1338, 0.0
    %1347 = vadd.xlane.f32.xlu0 %v1346
    %v1348 = vpop.xlane.xlu0 %1347
    %v1349 = vsel %vm295, %v1339, 0.0
    %1350 = vadd.xlane.f32.xlu0 %v1349
    %v1351 = vpop.xlane.xlu0 %1350
    %v1352 = vmul.f32 %v1342, 0.17677669
    %v1353 = vmul.f32 %v1345, 0.17677669
    %v1354 = vmul.f32 %v1348, 0.17677669
    %v1355 = vmul.f32 %v1351, 0.17677669
    %v1356 = vsub.f32 1.0, %v1352
    %v1357 = vsub.f32 1.0, %v1353
    %v1358 = vsub.f32 1.0, %v1354
    %v1359 = vsub.f32 1.0, %v1355
    %v1360 = vmul.f32 %v1356, %v1219
    %v1361 = vmul.f32 %v1357, %v1220
    %v1362 = vmul.f32 %v1358, %v1221
    %v1363 = vmul.f32 %v1359, %v1222
    %v1364 = vmul.f32 %v1352, %v1329
    %v1365 = vmul.f32 %v1353, %v1329
    %v1366 = vmul.f32 %v1354, %v1333
    %v1367 = vmul.f32 %v1355, %v1333
    %v1368 = vadd.f32 %v1360, %v1364
    %v1369 = vadd.f32 %v1361, %v1365
    %v1370 = vadd.f32 %v1362, %v1366
    %v1371 = vadd.f32 %v1363, %v1367
    %v1372 = vld [vmem:[#allocation22] sm:$0xff]
    %v1373 = vld [vmem:[#allocation22 + $0x8] sm:$0xff]
    %v1374 = vld [vmem:[#allocation22 + $0x10] sm:$0xff]
    %v1375 = vld [vmem:[#allocation22 + $0x18] sm:$0xff]
    %v1377 = vsel %vm295, %v1368, 0
    %v1380 = vsel %vm295, %v1369, 0
    %v1383 = vsel %vm295, %v1370, 0
    %v1386 = vsel %vm295, %v1371, 0
    %1388 = vmatprep.subr.mxu0 0.0
    %1389 = vmatpush1.msra.mxu0 %v1372
    %1390 = vmatprep.subr.mxu0 0.0
    %1391 = vmatpush1.msra.mxu0 %v1373
    %1392 = vmatprep.subr.mxu0 0.0
    %1393 = vmatpush1.msra.mxu0 %v1374
    %1394 = vmatprep.subr.mxu0 0.0
    %1395 = vmatpush1.msra.mxu0 %v1375
    %1396 = vmatprep.subr.mxu0 0.0
    %1397 = vmatpush1.msra.mxu0 0.0
    %1398 = vmatprep.subr.mxu0 0.0
    %1399 = vmatpush1.msra.mxu0 0.0
    %1400 = vmatprep.subr.mxu0 0.0
    %1401 = vmatpush1.msra.mxu0 0.0
    %1402 = vmatprep.subr.mxu0 0.0
    %1403 = vmatpush1.msra.mxu0 0.0
    %1404 = vmatprep.subr.mxu0 0.0
    %1405 = vmatpush1.msra.mxu0 0.0
    %1406 = vmatprep.subr.mxu0 0.0
    %1407 = vmatpush1.msra.mxu0 0.0
    %1408 = vmatprep.subr.mxu0 0.0
    %1409 = vmatpush1.msra.mxu0 0.0
    %1410 = vmatprep.subr.mxu0 0.0
    %1411 = vmatpush1.msra.mxu0 0.0
    %1412 = vmatprep.subr.mxu0 0.0
    %1413 = vmatpush1.msra.mxu0 0.0
    %1414 = vmatprep.subr.mxu0 0.0
    %1415 = vmatpush1.msra.mxu0 0.0
    %1416 = vmatprep.subr.mxu0 0.0
    %1417 = vmatpush1.msra.mxu0 0.0
    %1418 = vmatprep.subr.mxu0 0.0
    %1419 = vmatpush1.msra.mxu0 0.0
    %1420 = vmatprep.subr.mxu0 0.0
    %1421 = vmatpush1.msra.mxu0 0.0
    %1422 = vmatprep.subr.mxu0 0.0
    %1423 = vmatpush1.msra.mxu0 0.0
    %1424 = vmatprep.subr.mxu0 0.0
    %1425 = vmatpush1.msra.mxu0 0.0
    %1426 = vmatprep.subr.mxu0 0.0
    %1427 = vmatpush1.msra.mxu0 0.0
    %1428 = vmatprep.subr.mxu0 0.0
    %1429 = vmatpush1.msra.mxu0 0.0
    %1430 = vmatprep.subr.mxu0 0.0
    %1431 = vmatpush1.msra.mxu0 0.0
    %1432 = vmatprep.subr.mxu0 0.0
    %1433 = vmatpush1.msra.mxu0 0.0
    %1434 = vmatprep.subr.mxu0 0.0
    %1435 = vmatpush1.msra.mxu0 0.0
    %1436 = vmatprep.subr.mxu0 0.0
    %1437 = vmatpush1.msra.mxu0 0.0
    %1438 = vmatprep.subr.mxu0 0.0
    %1439 = vmatpush1.msra.mxu0 0.0
    %1440 = vmatprep.subr.mxu0 0.0
    %1441 = vmatpush1.msra.mxu0 0.0
    %1442 = vmatprep.subr.mxu0 0.0
    %1443 = vmatpush1.msra.mxu0 0.0
    %1444 = vmatprep.subr.mxu0 0.0
    %1445 = vmatpush1.msra.mxu0 0.0
    %1446 = vmatprep.subr.mxu0 0.0
    %1447 = vmatpush1.msra.mxu0 0.0
    %1448 = vmatprep.subr.mxu0 0.0
    %1449 = vmatpush1.msra.mxu0 0.0
    %1450 = vmatprep.subr.mxu0 0.0
    %1451 = vmatpush1.msra.mxu0 0.0
    %1452 = vmatprep.mubr.f32.mxu0 0.0
    %1453 = vmatmul.mubr.f32.gmra.mrb[0].mxu0 %v1377
    %v1454 = vpop.f32.mrb[0].mxu0
    %v1455 = vadd.f32 0.0, %v1454
    %v1456 = vpop.f32.mrb[0].mxu0
    %1457 = vmatprep.mubr.f32.mxu0 0.0
    %1458 = vmatmul.mubr.f32.gmra.mrb[0].mxu0 %v1380
    %v1459 = vpop.f32.mrb[0].mxu0
    %v1460 = vadd.f32 0.0, %v1459
    %v1461 = vpop.f32.mrb[0].mxu0
    %1462 = vmatprep.mubr.f32.mxu0 0.0
    %1463 = vmatmul.mubr.f32.gmra.mrb[0].mxu0 %v1383
    %v1464 = vpop.f32.mrb[0].mxu0
    %v1465 = vadd.f32 0.0, %v1464
    %v1466 = vpop.f32.mrb[0].mxu0
    %1467 = vmatprep.mubr.f32.mxu0 0.0
    %1468 = vmatmul.mubr.f32.gmra.mrb[0].mxu0 %v1386
    %v1469 = vpop.f32.mrb[0].mxu0
    %v1470 = vadd.f32 0.0, %v1469
    %v1471 = vpop.f32.mrb[0].mxu0
    %1472 = vdwg.mxu0
    %v1473 = vmul.f32 %v1455, %v1329
    %v1474 = vmul.f32 %v1460, %v1329
    %v1475 = vmul.f32 %v1465, %v1333
    %v1476 = vmul.f32 %v1470, %v1333
    %v1477 = vsel %vm295, %v1473, 0.0
    %1478 = vadd.xlane.f32.xlu0 %v1477
    %v1479 = vpop.xlane.xlu0 %1478
    %v1480 = vsel %vm295, %v1474, 0.0
    %1481 = vadd.xlane.f32.xlu0 %v1480
    %v1482 = vpop.xlane.xlu0 %1481
    %v1483 = vsel %vm295, %v1475, 0.0
    %1484 = vadd.xlane.f32.xlu0 %v1483
    %v1485 = vpop.xlane.xlu0 %1484
    %v1486 = vsel %vm295, %v1476, 0.0
    %1487 = vadd.xlane.f32.xlu0 %v1486
    %v1488 = vpop.xlane.xlu0 %1487
    %v1489 = vmul.f32 %v1479, 0.17677669
    %v1490 = vmul.f32 %v1482, 0.17677669
    %v1491 = vmul.f32 %v1485, 0.17677669
    %v1492 = vmul.f32 %v1488, 0.17677669
    %vm1493 = vcmp.eq.f32.partialorder %v280, 0.0
    %vm1494 = vcmp.eq.f32.partialorder %v281, 0.0
    %vm1495 = vcmp.eq.f32.partialorder %v282, 0.0
    %vm1496 = vcmp.eq.f32.partialorder %v283, 0.0
    %v1497 = vsel %vm1493, -inf, %v1489
    %v1498 = vsel %vm1494, -inf, %v1490
    %v1499 = vsel %vm1495, -inf, %v1491
    %v1500 = vsel %vm1496, -inf, %v1492
    %vm1501 = vcmask 7168
    %v1502 = vsel %vm1501, %v1497, -inf
    %v1503 = vsel %vm1501, %v1498, -inf
    %v1504 = vmax.f32 %v1502, %v1503
    %v1505 = vrot.slane %v1504, 4
    %v1506 = vmax.f32 %v1504, %v1505
    %v1507 = vrot.slane %v1506, 2
    %v1508 = vmax.f32 %v1506, %v1507
    %v1509 = vrot.slane %v1508, 1
    %v1510 = vmax.f32 %v1508, %v1509
    %v1511 = vsel %vm1501, %v1499, -inf
    %v1512 = vsel %vm1501, %v1500, -inf
    %v1513 = vmax.f32 %v1511, %v1512
    %v1514 = vrot.slane %v1513, 4
    %v1515 = vmax.f32 %v1513, %v1514
    %v1516 = vrot.slane %v1515, 2
    %v1517 = vmax.f32 %v1515, %v1516
    %v1518 = vrot.slane %v1517, 1
    %v1519 = vmax.f32 %v1517, %v1518
    %v1520 = vsub.f32 %v1497, %v1510
    %v1521 = vsub.f32 %v1498, %v1510
    %v1522 = vsub.f32 %v1499, %v1519
    %v1523 = vsub.f32 %v1500, %v1519
    %v1524 = vmul.f32 %v1520, 1.442695
    %v1525 = vpow.pop %v1524
    %v1526 = vmul.f32 %v1521, 1.442695
    %v1527 = vpow.pop %v1526
    %v1528 = vmul.f32 %v1522, 1.442695
    %v1529 = vpow.pop %v1528
    %v1530 = vmul.f32 %v1523, 1.442695
    %v1531 = vpow.pop %v1530
    %v1532 = vsel %vm1501, %v1525, 0.0
    %v1533 = vsel %vm1501, %v1527, 0.0
    %v1534 = vadd.f32 %v1532, %v1533
    %v1535 = vrot.slane %v1534, 4
    %v1536 = vadd.f32 %v1534, %v1535
    %v1537 = vrot.slane %v1536, 2
    %v1538 = vadd.f32 %v1536, %v1537
    %v1539 = vrot.slane %v1538, 1
    %v1540 = vadd.f32 %v1538, %v1539
    %v1541 = vsel %vm1501, %v1529, 0.0
    %v1542 = vsel %vm1501, %v1531, 0.0
    %v1543 = vadd.f32 %v1541, %v1542
    %v1544 = vrot.slane %v1543, 4
    %v1545 = vadd.f32 %v1543, %v1544
    %v1546 = vrot.slane %v1545, 2
    %v1547 = vadd.f32 %v1545, %v1546
    %v1548 = vrot.slane %v1547, 1
    %v1549 = vadd.f32 %v1547, %v1548
    %v1550 = vrcp.pop %v1540
    %v1551 = vmul.f32 %v1525, %v1550
    %v1552 = vmul.f32 %v1527, %v1550
    %v1553 = vrcp.pop %v1549
    %v1554 = vmul.f32 %v1529, %v1553
    %v1555 = vmul.f32 %v1531, %v1553
    %1557 = vset.pattern.permute.xlu0 0
    %1558 = vperm.xlu0 %1557, %v1551
    %v1559 = vpop.permute.xlu0 %1558
    %1562 = vset.pattern.permute.xlu0 0
    %1563 = vperm.xlu0 %1562, %v1552
    %v1564 = vpop.permute.xlu0 %1563
    %1567 = vset.pattern.permute.xlu0 0
    %1568 = vperm.xlu0 %1567, %v1554
    %v1569 = vpop.permute.xlu0 %1568
    %1572 = vset.pattern.permute.xlu0 0
    %1573 = vperm.xlu0 %1572, %v1555
    %v1574 = vpop.permute.xlu0 %1573
    %v1576 = vmul.f32 %v1559, %v1368
    %v1577 = vmul.f32 %v1564, %v1369
    %v1578 = vmul.f32 %v1569, %v1370
    %v1579 = vmul.f32 %v1574, %v1371
    %v1580 = vsel %vm295, %v1576, 0.0
    %v1581 = vsel %vm295, %v1577, 0.0
    %v1582 = vadd.f32 %v1580, %v1581
    %v1583 = vrot.slane %v1582, 4
    %v1584 = vadd.f32 %v1582, %v1583
    %v1585 = vrot.slane %v1584, 2
    %v1586 = vadd.f32 %v1584, %v1585
    %v1587 = vrot.slane %v1586, 1
    %v1588 = vadd.f32 %v1586, %v1587
    %v1589 = vsel %vm295, %v1578, 0.0
    %v1590 = vsel %vm295, %v1579, 0.0
    %v1591 = vadd.f32 %v1589, %v1590
    %v1592 = vrot.slane %v1591, 4
    %v1593 = vadd.f32 %v1591, %v1592
    %v1594 = vrot.slane %v1593, 2
    %v1595 = vadd.f32 %v1593, %v1594
    %v1596 = vrot.slane %v1595, 1
    %v1597 = vadd.f32 %v1595, %v1596
    %1598 = vmatprep.subr.mxu0 0.0
    %1599 = vmatpush1.msra.mxu0 %v284
    %1600 = vmatprep.subr.mxu0 0.0
    %1601 = vmatpush1.msra.mxu0 %v285
    %1602 = vmatprep.subr.mxu0 0.0
    %1603 = vmatpush1.msra.mxu0 %v286
    %1604 = vmatprep.subr.mxu0 0.0
    %1605 = vmatpush1.msra.mxu0 %v287
    %1606 = vmatprep.subr.mxu0 0.0
    %1607 = vmatpush1.msra.mxu0 0.0
    %1608 = vmatprep.subr.mxu0 0.0
    %1609 = vmatpush1.msra.mxu0 0.0
    %1610 = vmatprep.subr.mxu0 0.0
    %1611 = vmatpush1.msra.mxu0 0.0
    %1612 = vmatprep.subr.mxu0 0.0
    %1613 = vmatpush1.msra.mxu0 0.0
    %1614 = vmatprep.subr.mxu0 0.0
    %1615 = vmatpush1.msra.mxu0 0.0
    %1616 = vmatprep.subr.mxu0 0.0
    %1617 = vmatpush1.msra.mxu0 0.0
    %1618 = vmatprep.subr.mxu0 0.0
    %1619 = vmatpush1.msra.mxu0 0.0
    %1620 = vmatprep.subr.mxu0 0.0
    %1621 = vmatpush1.msra.mxu0 0.0
    %1622 = vmatprep.subr.mxu0 0.0
    %1623 = vmatpush1.msra.mxu0 0.0
    %1624 = vmatprep.subr.mxu0 0.0
    %1625 = vmatpush1.msra.mxu0 0.0
    %1626 = vmatprep.subr.mxu0 0.0
    %1627 = vmatpush1.msra.mxu0 0.0
    %1628 = vmatprep.subr.mxu0 0.0
    %1629 = vmatpush1.msra.mxu0 0.0
    %1630 = vmatprep.subr.mxu0 0.0
    %1631 = vmatpush1.msra.mxu0 0.0
    %1632 = vmatprep.subr.mxu0 0.0
    %1633 = vmatpush1.msra.mxu0 0.0
    %1634 = vmatprep.subr.mxu0 0.0
    %1635 = vmatpush1.msra.mxu0 0.0
    %1636 = vmatprep.subr.mxu0 0.0
    %1637 = vmatpush1.msra.mxu0 0.0
    %1638 = vmatprep.subr.mxu0 0.0
    %1639 = vmatpush1.msra.mxu0 0.0
    %1640 = vmatprep.subr.mxu0 0.0
    %1641 = vmatpush1.msra.mxu0 0.0
    %1642 = vmatprep.subr.mxu0 0.0
    %1643 = vmatpush1.msra.mxu0 0.0
    %1644 = vmatprep.subr.mxu0 0.0
    %1645 = vmatpush1.msra.mxu0 0.0
    %1646 = vmatprep.subr.mxu0 0.0
    %1647 = vmatpush1.msra.mxu0 0.0
    %1648 = vmatprep.subr.mxu0 0.0
    %1649 = vmatpush1.msra.mxu0 0.0
    %1650 = vmatprep.subr.mxu0 0.0
    %1651 = vmatpush1.msra.mxu0 0.0
    %1652 = vmatprep.subr.mxu0 0.0
    %1653 = vmatpush1.msra.mxu0 0.0
    %1654 = vmatprep.subr.mxu0 0.0
    %1655 = vmatpush1.msra.mxu0 0.0
    %1656 = vmatprep.subr.mxu0 0.0
    %1657 = vmatpush1.msra.mxu0 0.0
    %1658 = vmatprep.subr.mxu0 0.0
    %1659 = vmatpush1.msra.mxu0 0.0
    %1660 = vmatprep.subr.mxu0 0.0
    %1661 = vmatpush1.msra.mxu0 0.0
    %1662 = vmatprep.mubr.f32.mxu0 0.0
    %1663 = vmatmul.mubr.f32.gmra.mrb[0].mxu0 %v1377
    %v1664 = vpop.f32.mrb[0].mxu0
    %v1665 = vadd.f32 %v293, %v1664
    %v1666 = vpop.f32.mrb[0].mxu0
    %1667 = vmatprep.mubr.f32.mxu0 0.0
    %1668 = vmatmul.mubr.f32.gmra.mrb[0].mxu0 %v1380
    %v1669 = vpop.f32.mrb[0].mxu0
    %v1670 = vadd.f32 %v293, %v1669
    %v1671 = vpop.f32.mrb[0].mxu0
    %1672 = vmatprep.mubr.f32.mxu0 0.0
    %1673 = vmatmul.mubr.f32.gmra.mrb[0].mxu0 %v1383
    %v1674 = vpop.f32.mrb[0].mxu0
    %v1675 = vadd.f32 %v293, %v1674
    %v1676 = vpop.f32.mrb[0].mxu0
    %1677 = vmatprep.mubr.f32.mxu0 0.0
    %1678 = vmatmul.mubr.f32.gmra.mrb[0].mxu0 %v1386
    %v1679 = vpop.f32.mrb[0].mxu0
    %v1680 = vadd.f32 %v293, %v1679
    %v1681 = vpop.f32.mrb[0].mxu0
    %1682 = vdwg.mxu0
    %1683 = vmatprep.subr.mxu0 0.0
    %1684 = vmatpush1.msra.mxu0 %v393
    %1685 = vmatprep.subr.mxu0 0.0
    %1686 = vmatpush1.msra.mxu0 %v394
    %1687 = vmatprep.subr.mxu0 0.0
    %1688 = vmatpush1.msra.mxu0 %v395
    %1689 = vmatprep.subr.mxu0 0.0
    %1690 = vmatpush1.msra.mxu0 %v396
    %1691 = vmatprep.subr.mxu0 0.0
    %1692 = vmatpush1.msra.mxu0 0.0
    %1693 = vmatprep.subr.mxu0 0.0
    %1694 = vmatpush1.msra.mxu0 0.0
    %1695 = vmatprep.subr.mxu0 0.0
    %1696 = vmatpush1.msra.mxu0 0.0
    %1697 = vmatprep.subr.mxu0 0.0
    %1698 = vmatpush1.msra.mxu0 0.0
    %1699 = vmatprep.subr.mxu0 0.0
    %1700 = vmatpush1.msra.mxu0 0.0
    %1701 = vmatprep.subr.mxu0 0.0
    %1702 = vmatpush1.msra.mxu0 0.0
    %1703 = vmatprep.subr.mxu0 0.0
    %1704 = vmatpush1.msra.mxu0 0.0
    %1705 = vmatprep.subr.mxu0 0.0
    %1706 = vmatpush1.msra.mxu0 0.0
    %1707 = vmatprep.subr.mxu0 0.0
    %1708 = vmatpush1.msra.mxu0 0.0
    %1709 = vmatprep.subr.mxu0 0.0
    %1710 = vmatpush1.msra.mxu0 0.0
    %1711 = vmatprep.subr.mxu0 0.0
    %1712 = vmatpush1.msra.mxu0 0.0
    %1713 = vmatprep.subr.mxu0 0.0
    %1714 = vmatpush1.msra.mxu0 0.0
    %1715 = vmatprep.subr.mxu0 0.0
    %1716 = vmatpush1.msra.mxu0 0.0
    %1717 = vmatprep.subr.mxu0 0.0
    %1718 = vmatpush1.msra.mxu0 0.0
    %1719 = vmatprep.subr.mxu0 0.0
    %1720 = vmatpush1.msra.mxu0 0.0
    %1721 = vmatprep.subr.mxu0 0.0
    %1722 = vmatpush1.msra.mxu0 0.0
    %1723 = vmatprep.subr.mxu0 0.0
    %1724 = vmatpush1.msra.mxu0 0.0
    %1725 = vmatprep.subr.mxu0 0.0
    %1726 = vmatpush1.msra.mxu0 0.0
    %1727 = vmatprep.subr.mxu0 0.0
    %1728 = vmatpush1.msra.mxu0 0.0
    %1729 = vmatprep.subr.mxu0 0.0
    %1730 = vmatpush1.msra.mxu0 0.0
    %1731 = vmatprep.subr.mxu0 0.0
    %1732 = vmatpush1.msra.mxu0 0.0
    %1733 = vmatprep.subr.mxu0 0.0
    %1734 = vmatpush1.msra.mxu0 0.0
    %1735 = vmatprep.subr.mxu0 0.0
    %1736 = vmatpush1.msra.mxu0 0.0
    %1737 = vmatprep.subr.mxu0 0.0
    %1738 = vmatpush1.msra.mxu0 0.0
    %1739 = vmatprep.subr.mxu0 0.0
    %1740 = vmatpush1.msra.mxu0 0.0
    %1741 = vmatprep.subr.mxu0 0.0
    %1742 = vmatpush1.msra.mxu0 0.0
    %1743 = vmatprep.subr.mxu0 0.0
    %1744 = vmatpush1.msra.mxu0 0.0
    %1745 = vmatprep.subr.mxu0 0.0
    %1746 = vmatpush1.msra.mxu0 0.0
    %1747 = vmatprep.mubr.f32.mxu0 0.0
    %1748 = vmatmul.mubr.f32.gmra.mrb[0].mxu0 %v1377
    %v1749 = vpop.f32.mrb[0].mxu0
    %v1750 = vadd.f32 %v402, %v1749
    %v1751 = vpop.f32.mrb[0].mxu0
    %1752 = vmatprep.mubr.f32.mxu0 0.0
    %1753 = vmatmul.mubr.f32.gmra.mrb[0].mxu0 %v1380
    %v1754 = vpop.f32.mrb[0].mxu0
    %v1755 = vadd.f32 %v402, %v1754
    %v1756 = vpop.f32.mrb[0].mxu0
    %1757 = vmatprep.mubr.f32.mxu0 0.0
    %1758 = vmatmul.mubr.f32.gmra.mrb[0].mxu0 %v1383
    %v1759 = vpop.f32.mrb[0].mxu0
    %v1760 = vadd.f32 %v402, %v1759
    %v1761 = vpop.f32.mrb[0].mxu0
    %1762 = vmatprep.mubr.f32.mxu0 0.0
    %1763 = vmatmul.mubr.f32.gmra.mrb[0].mxu0 %v1386
    %v1764 = vpop.f32.mrb[0].mxu0
    %v1765 = vadd.f32 %v402, %v1764
    %v1766 = vpop.f32.mrb[0].mxu0
    %1767 = vdwg.mxu0
    %1772 = vrot.lane.b32.xlu0 %v1665, 96
    %v1773 = vpop.permute.xlu0 %1772
    %1774 = vrot.lane.b32.xlu0 %v1670, 96
    %v1775 = vpop.permute.xlu0 %1774
    %1776 = vrot.lane.b32.xlu0 %v1675, 96
    %v1777 = vpop.permute.xlu0 %1776
    %1778 = vrot.lane.b32.xlu0 %v1680, 96
    %v1779 = vpop.permute.xlu0 %1778
    %1784 = vmatprep.subr.mxu0 0.0
    %1785 = vmatpush1.msra.mxu0 %v1665
    %1786 = vmatprep.subr.mxu0 0.0
    %1787 = vmatpush1.msra.mxu0 %v1670
    %1788 = vmatprep.subr.mxu0 0.0
    %1789 = vmatpush1.msra.mxu0 0.0
    %1790 = vmatprep.subr.mxu0 0.0
    %1791 = vmatpush1.msra.mxu0 0.0
    %1792 = vmatprep.subr.mxu0 0.0
    %1793 = vmatpush1.msra.mxu0 0.0
    %1794 = vmatprep.subr.mxu0 0.0
    %1795 = vmatpush1.msra.mxu0 0.0
    %1796 = vmatprep.subr.mxu0 0.0
    %1797 = vmatpush1.msra.mxu0 0.0
    %1798 = vmatprep.subr.mxu0 0.0
    %1799 = vmatpush1.msra.mxu0 0.0
    %1800 = vmatprep.subr.mxu0 0.0
    %1801 = vmatpush1.msra.mxu0 0.0
    %1802 = vmatprep.subr.mxu0 0.0
    %1803 = vmatpush1.msra.mxu0 0.0
    %1804 = vmatprep.subr.mxu0 0.0
    %1805 = vmatpush1.msra.mxu0 0.0
    %1806 = vmatprep.subr.mxu0 0.0
    %1807 = vmatpush1.msra.mxu0 0.0
    %1808 = vmatprep.subr.mxu0 0.0
    %1809 = vmatpush1.msra.mxu0 0.0
    %1810 = vmatprep.subr.mxu0 0.0
    %1811 = vmatpush1.msra.mxu0 0.0
    %1812 = vmatprep.subr.mxu0 0.0
    %1813 = vmatpush1.msra.mxu0 0.0
    %1814 = vmatprep.subr.mxu0 0.0
    %1815 = vmatpush1.msra.mxu0 0.0
    %1816 = vmatprep.subr.mxu0 0.0
    %1817 = vmatpush1.msra.mxu0 0.0
    %1818 = vmatprep.subr.mxu0 0.0
    %1819 = vmatpush1.msra.mxu0 0.0
    %1820 = vmatprep.subr.mxu0 0.0
    %1821 = vmatpush1.msra.mxu0 0.0
    %1822 = vmatprep.subr.mxu0 0.0
    %1823 = vmatpush1.msra.mxu0 0.0
    %1824 = vmatprep.subr.mxu0 0.0
    %1825 = vmatpush1.msra.mxu0 0.0
    %1826 = vmatprep.subr.mxu0 0.0
    %1827 = vmatpush1.msra.mxu0 0.0
    %1828 = vmatprep.subr.mxu0 0.0
    %1829 = vmatpush1.msra.mxu0 0.0
    %1830 = vmatprep.subr.mxu0 0.0
    %1831 = vmatpush1.msra.mxu0 0.0
    %1832 = vmatprep.subr.mxu0 0.0
    %1833 = vmatpush1.msra.mxu0 0.0
    %1834 = vmatprep.subr.mxu0 0.0
    %1835 = vmatpush1.msra.mxu0 0.0
    %1836 = vmatprep.subr.mxu0 0.0
    %1837 = vmatpush1.msra.mxu0 0.0
    %1838 = vmatprep.subr.mxu0 0.0
    %1839 = vmatpush1.msra.mxu0 0.0
    %1840 = vmatprep.subr.mxu0 0.0
    %1841 = vmatpush1.msra.mxu0 0.0
    %1842 = vmatprep.subr.mxu0 0.0
    %1843 = vmatpush1.msra.mxu0 0.0
    %1844 = vmatprep.subr.mxu0 0.0
    %1845 = vmatpush1.msra.mxu0 0.0
    %1846 = vmatprep.subr.mxu0 0.0
    %1847 = vmatpush1.msra.mxu0 0.0
    %1848 = vmatprep.mubr.f32.mxu0 0.0
    %1849 = vmatmul.mubr.f32.gmra.mrb[0].mxu0 %v507
    %v1850 = vpop.f32.mrb[0].mxu0
    %v1851 = vadd.f32 0.0, %v1850
    %v1852 = vpop.f32.mrb[0].mxu0
    %1853 = vmatprep.mubr.f32.mxu0 0.0
    %1854 = vmatmul.mubr.f32.gmra.mrb[0].mxu0 %v510
    %v1855 = vpop.f32.mrb[0].mxu0
    %v1856 = vadd.f32 0.0, %v1855
    %v1857 = vpop.f32.mrb[0].mxu0
    %1858 = vdwg.mxu0
    %1859 = vmatprep.subr.mxu0 0.0
    %1860 = vmatpush1.msra.mxu0 %v1675
    %1861 = vmatprep.subr.mxu0 0.0
    %1862 = vmatpush1.msra.mxu0 %v1680
    %1863 = vmatprep.subr.mxu0 0.0
    %1864 = vmatpush1.msra.mxu0 0.0
    %1865 = vmatprep.subr.mxu0 0.0
    %1866 = vmatpush1.msra.mxu0 0.0
    %1867 = vmatprep.subr.mxu0 0.0
    %1868 = vmatpush1.msra.mxu0 0.0
    %1869 = vmatprep.subr.mxu0 0.0
    %1870 = vmatpush1.msra.mxu0 0.0
    %1871 = vmatprep.subr.mxu0 0.0
    %1872 = vmatpush1.msra.mxu0 0.0
    %1873 = vmatprep.subr.mxu0 0.0
    %1874 = vmatpush1.msra.mxu0 0.0
    %1875 = vmatprep.subr.mxu0 0.0
    %1876 = vmatpush1.msra.mxu0 0.0
    %1877 = vmatprep.subr.mxu0 0.0
    %1878 = vmatpush1.msra.mxu0 0.0
    %1879 = vmatprep.subr.mxu0 0.0
    %1880 = vmatpush1.msra.mxu0 0.0
    %1881 = vmatprep.subr.mxu0 0.0
    %1882 = vmatpush1.msra.mxu0 0.0
    %1883 = vmatprep.subr.mxu0 0.0
    %1884 = vmatpush1.msra.mxu0 0.0
    %1885 = vmatprep.subr.mxu0 0.0
    %1886 = vmatpush1.msra.mxu0 0.0
    %1887 = vmatprep.subr.mxu0 0.0
    %1888 = vmatpush1.msra.mxu0 0.0
    %1889 = vmatprep.subr.mxu0 0.0
    %1890 = vmatpush1.msra.mxu0 0.0
    %1891 = vmatprep.subr.mxu0 0.0
    %1892 = vmatpush1.msra.mxu0 0.0
    %1893 = vmatprep.subr.mxu0 0.0
    %1894 = vmatpush1.msra.mxu0 0.0
    %1895 = vmatprep.subr.mxu0 0.0
    %1896 = vmatpush1.msra.mxu0 0.0
    %1897 = vmatprep.subr.mxu0 0.0
    %1898 = vmatpush1.msra.mxu0 0.0
    %1899 = vmatprep.subr.mxu0 0.0
    %1900 = vmatpush1.msra.mxu0 0.0
    %1901 = vmatprep.subr.mxu0 0.0
    %1902 = vmatpush1.msra.mxu0 0.0
    %1903 = vmatprep.subr.mxu0 0.0
    %1904 = vmatpush1.msra.mxu0 0.0
    %1905 = vmatprep.subr.mxu0 0.0
    %1906 = vmatpush1.msra.mxu0 0.0
    %1907 = vmatprep.subr.mxu0 0.0
    %1908 = vmatpush1.msra.mxu0 0.0
    %1909 = vmatprep.subr.mxu0 0.0
    %1910 = vmatpush1.msra.mxu0 0.0
    %1911 = vmatprep.subr.mxu0 0.0
    %1912 = vmatpush1.msra.mxu0 0.0
    %1913 = vmatprep.subr.mxu0 0.0
    %1914 = vmatpush1.msra.mxu0 0.0
    %1915 = vmatprep.subr.mxu0 0.0
    %1916 = vmatpush1.msra.mxu0 0.0
    %1917 = vmatprep.subr.mxu0 0.0
    %1918 = vmatpush1.msra.mxu0 0.0
    %1919 = vmatprep.subr.mxu0 0.0
    %1920 = vmatpush1.msra.mxu0 0.0
    %1921 = vmatprep.subr.mxu0 0.0
    %1922 = vmatpush1.msra.mxu0 0.0
    %1923 = vmatprep.mubr.f32.mxu0 0.0
    %1924 = vmatmul.mubr.f32.gmra.mrb[0].mxu0 %v588
    %v1925 = vpop.f32.mrb[0].mxu0
    %v1926 = vadd.f32 0.0, %v1925
    %v1927 = vpop.f32.mrb[0].mxu0
    %1928 = vmatprep.mubr.f32.mxu0 0.0
    %1929 = vmatmul.mubr.f32.gmra.mrb[0].mxu0 %v591
    %v1930 = vpop.f32.mrb[0].mxu0
    %v1931 = vadd.f32 0.0, %v1930
    %v1932 = vpop.f32.mrb[0].mxu0
    %1933 = vdwg.mxu0
    %1934 = vmatprep.subr.mxu0 0.0
    %1935 = vmatpush1.msra.mxu0 %v1773
    %1936 = vmatprep.subr.mxu0 0.0
    %1937 = vmatpush1.msra.mxu0 %v1775
    %1938 = vmatprep.subr.mxu0 0.0
    %1939 = vmatpush1.msra.mxu0 0.0
    %1940 = vmatprep.subr.mxu0 0.0
    %1941 = vmatpush1.msra.mxu0 0.0
    %1942 = vmatprep.subr.mxu0 0.0
    %1943 = vmatpush1.msra.mxu0 0.0
    %1944 = vmatprep.subr.mxu0 0.0
    %1945 = vmatpush1.msra.mxu0 0.0
    %1946 = vmatprep.subr.mxu0 0.0
    %1947 = vmatpush1.msra.mxu0 0.0
    %1948 = vmatprep.subr.mxu0 0.0
    %1949 = vmatpush1.msra.mxu0 0.0
    %1950 = vmatprep.subr.mxu0 0.0
    %1951 = vmatpush1.msra.mxu0 0.0
    %1952 = vmatprep.subr.mxu0 0.0
    %1953 = vmatpush1.msra.mxu0 0.0
    %1954 = vmatprep.subr.mxu0 0.0
    %1955 = vmatpush1.msra.mxu0 0.0
    %1956 = vmatprep.subr.mxu0 0.0
    %1957 = vmatpush1.msra.mxu0 0.0
    %1958 = vmatprep.subr.mxu0 0.0
    %1959 = vmatpush1.msra.mxu0 0.0
    %1960 = vmatprep.subr.mxu0 0.0
    %1961 = vmatpush1.msra.mxu0 0.0
    %1962 = vmatprep.subr.mxu0 0.0
    %1963 = vmatpush1.msra.mxu0 0.0
    %1964 = vmatprep.subr.mxu0 0.0
    %1965 = vmatpush1.msra.mxu0 0.0
    %1966 = vmatprep.subr.mxu0 0.0
    %1967 = vmatpush1.msra.mxu0 0.0
    %1968 = vmatprep.subr.mxu0 0.0
    %1969 = vmatpush1.msra.mxu0 0.0
    %1970 = vmatprep.subr.mxu0 0.0
    %1971 = vmatpush1.msra.mxu0 0.0
    %1972 = vmatprep.subr.mxu0 0.0
    %1973 = vmatpush1.msra.mxu0 0.0
    %1974 = vmatprep.subr.mxu0 0.0
    %1975 = vmatpush1.msra.mxu0 0.0
    %1976 = vmatprep.subr.mxu0 0.0
    %1977 = vmatpush1.msra.mxu0 0.0
    %1978 = vmatprep.subr.mxu0 0.0
    %1979 = vmatpush1.msra.mxu0 0.0
    %1980 = vmatprep.subr.mxu0 0.0
    %1981 = vmatpush1.msra.mxu0 0.0
    %1982 = vmatprep.subr.mxu0 0.0
    %1983 = vmatpush1.msra.mxu0 0.0
    %1984 = vmatprep.subr.mxu0 0.0
    %1985 = vmatpush1.msra.mxu0 0.0
    %1986 = vmatprep.subr.mxu0 0.0
    %1987 = vmatpush1.msra.mxu0 0.0
    %1988 = vmatprep.subr.mxu0 0.0
    %1989 = vmatpush1.msra.mxu0 0.0
    %1990 = vmatprep.subr.mxu0 0.0
    %1991 = vmatpush1.msra.mxu0 0.0
    %1992 = vmatprep.subr.mxu0 0.0
    %1993 = vmatpush1.msra.mxu0 0.0
    %1994 = vmatprep.subr.mxu0 0.0
    %1995 = vmatpush1.msra.mxu0 0.0
    %1996 = vmatprep.subr.mxu0 0.0
    %1997 = vmatpush1.msra.mxu0 0.0
    %1998 = vmatprep.mubr.f32.mxu0 0.0
    %1999 = vmatmul.mubr.f32.gmra.mrb[0].mxu0 %v669
    %v2000 = vpop.f32.mrb[0].mxu0
    %v2001 = vadd.f32 0.0, %v2000
    %v2002 = vpop.f32.mrb[0].mxu0
    %2003 = vmatprep.mubr.f32.mxu0 0.0
    %2004 = vmatmul.mubr.f32.gmra.mrb[0].mxu0 %v672
    %v2005 = vpop.f32.mrb[0].mxu0
    %v2006 = vadd.f32 0.0, %v2005
    %v2007 = vpop.f32.mrb[0].mxu0
    %2008 = vdwg.mxu0
    %2009 = vmatprep.subr.mxu0 0.0
    %2010 = vmatpush1.msra.mxu0 %v1777
    %2011 = vmatprep.subr.mxu0 0.0
    %2012 = vmatpush1.msra.mxu0 %v1779
    %2013 = vmatprep.subr.mxu0 0.0
    %2014 = vmatpush1.msra.mxu0 0.0
    %2015 = vmatprep.subr.mxu0 0.0
    %2016 = vmatpush1.msra.mxu0 0.0
    %2017 = vmatprep.subr.mxu0 0.0
    %2018 = vmatpush1.msra.mxu0 0.0
    %2019 = vmatprep.subr.mxu0 0.0
    %2020 = vmatpush1.msra.mxu0 0.0
    %2021 = vmatprep.subr.mxu0 0.0
    %2022 = vmatpush1.msra.mxu0 0.0
    %2023 = vmatprep.subr.mxu0 0.0
    %2024 = vmatpush1.msra.mxu0 0.0
    %2025 = vmatprep.subr.mxu0 0.0
    %2026 = vmatpush1.msra.mxu0 0.0
    %2027 = vmatprep.subr.mxu0 0.0
    %2028 = vmatpush1.msra.mxu0 0.0
    %2029 = vmatprep.subr.mxu0 0.0
    %2030 = vmatpush1.msra.mxu0 0.0
    %2031 = vmatprep.subr.mxu0 0.0
    %2032 = vmatpush1.msra.mxu0 0.0
    %2033 = vmatprep.subr.mxu0 0.0
    %2034 = vmatpush1.msra.mxu0 0.0
    %2035 = vmatprep.subr.mxu0 0.0
    %2036 = vmatpush1.msra.mxu0 0.0
    %2037 = vmatprep.subr.mxu0 0.0
    %2038 = vmatpush1.msra.mxu0 0.0
    %2039 = vmatprep.subr.mxu0 0.0
    %2040 = vmatpush1.msra.mxu0 0.0
    %2041 = vmatprep.subr.mxu0 0.0
    %2042 = vmatpush1.msra.mxu0 0.0
    %2043 = vmatprep.subr.mxu0 0.0
    %2044 = vmatpush1.msra.mxu0 0.0
    %2045 = vmatprep.subr.mxu0 0.0
    %2046 = vmatpush1.msra.mxu0 0.0
    %2047 = vmatprep.subr.mxu0 0.0
    %2048 = vmatpush1.msra.mxu0 0.0
    %2049 = vmatprep.subr.mxu0 0.0
    %2050 = vmatpush1.msra.mxu0 0.0
    %2051 = vmatprep.subr.mxu0 0.0
    %2052 = vmatpush1.msra.mxu0 0.0
    %2053 = vmatprep.subr.mxu0 0.0
    %2054 = vmatpush1.msra.mxu0 0.0
    %2055 = vmatprep.subr.mxu0 0.0
    %2056 = vmatpush1.msra.mxu0 0.0
    %2057 = vmatprep.subr.mxu0 0.0
    %2058 = vmatpush1.msra.mxu0 0.0
    %2059 = vmatprep.subr.mxu0 0.0
    %2060 = vmatpush1.msra.mxu0 0.0
    %2061 = vmatprep.subr.mxu0 0.0
    %2062 = vmatpush1.msra.mxu0 0.0
    %2063 = vmatprep.subr.mxu0 0.0
    %2064 = vmatpush1.msra.mxu0 0.0
    %2065 = vmatprep.subr.mxu0 0.0
    %2066 = vmatpush1.msra.mxu0 0.0
    %2067 = vmatprep.subr.mxu0 0.0
    %2068 = vmatpush1.msra.mxu0 0.0
    %2069 = vmatprep.subr.mxu0 0.0
    %2070 = vmatpush1.msra.mxu0 0.0
    %2071 = vmatprep.subr.mxu0 0.0
    %2072 = vmatpush1.msra.mxu0 0.0
    %2073 = vmatprep.mubr.f32.mxu0 0.0
    %2074 = vmatmul.mubr.f32.gmra.mrb[0].mxu0 %v750
    %v2075 = vpop.f32.mrb[0].mxu0
    %v2076 = vadd.f32 0.0, %v2075
    %v2077 = vpop.f32.mrb[0].mxu0
    %2078 = vmatprep.mubr.f32.mxu0 0.0
    %2079 = vmatmul.mubr.f32.gmra.mrb[0].mxu0 %v753
    %v2080 = vpop.f32.mrb[0].mxu0
    %v2081 = vadd.f32 0.0, %v2080
    %v2082 = vpop.f32.mrb[0].mxu0
    %2083 = vdwg.mxu0
    %v2085 = vsel %vm295, %v2001, 0
    %v2088 = vsel %vm295, %v2006, 0
    %v2091 = vsel %vm295, %v2076, 0
    %v2094 = vsel %vm295, %v2081, 0
    %2096 = vmatprep.subr.mxu0 0.0
    %2097 = vmatpush1.msra.mxu0 %v834
    %2098 = vmatprep.subr.mxu0 0.0
    %2099 = vmatpush1.msra.mxu0 %v835
    %2100 = vmatprep.subr.mxu0 0.0
    %2101 = vmatpush1.msra.mxu0 %v836
    %2102 = vmatprep.subr.mxu0 0.0
    %2103 = vmatpush1.msra.mxu0 %v837
    %2104 = vmatprep.subr.mxu0 0.0
    %2105 = vmatpush1.msra.mxu0 0.0
    %2106 = vmatprep.subr.mxu0 0.0
    %2107 = vmatpush1.msra.mxu0 0.0
    %2108 = vmatprep.subr.mxu0 0.0
    %2109 = vmatpush1.msra.mxu0 0.0
    %2110 = vmatprep.subr.mxu0 0.0
    %2111 = vmatpush1.msra.mxu0 0.0
    %2112 = vmatprep.subr.mxu0 0.0
    %2113 = vmatpush1.msra.mxu0 0.0
    %2114 = vmatprep.subr.mxu0 0.0
    %2115 = vmatpush1.msra.mxu0 0.0
    %2116 = vmatprep.subr.mxu0 0.0
    %2117 = vmatpush1.msra.mxu0 0.0
    %2118 = vmatprep.subr.mxu0 0.0
    %2119 = vmatpush1.msra.mxu0 0.0
    %2120 = vmatprep.subr.mxu0 0.0
    %2121 = vmatpush1.msra.mxu0 0.0
    %2122 = vmatprep.subr.mxu0 0.0
    %2123 = vmatpush1.msra.mxu0 0.0
    %2124 = vmatprep.subr.mxu0 0.0
    %2125 = vmatpush1.msra.mxu0 0.0
    %2126 = vmatprep.subr.mxu0 0.0
    %2127 = vmatpush1.msra.mxu0 0.0
    %2128 = vmatprep.subr.mxu0 0.0
    %2129 = vmatpush1.msra.mxu0 0.0
    %2130 = vmatprep.subr.mxu0 0.0
    %2131 = vmatpush1.msra.mxu0 0.0
    %2132 = vmatprep.subr.mxu0 0.0
    %2133 = vmatpush1.msra.mxu0 0.0
    %2134 = vmatprep.subr.mxu0 0.0
    %2135 = vmatpush1.msra.mxu0 0.0
    %2136 = vmatprep.subr.mxu0 0.0
    %2137 = vmatpush1.msra.mxu0 0.0
    %2138 = vmatprep.subr.mxu0 0.0
    %2139 = vmatpush1.msra.mxu0 0.0
    %2140 = vmatprep.subr.mxu0 0.0
    %2141 = vmatpush1.msra.mxu0 0.0
    %2142 = vmatprep.subr.mxu0 0.0
    %2143 = vmatpush1.msra.mxu0 0.0
    %2144 = vmatprep.subr.mxu0 0.0
    %2145 = vmatpush1.msra.mxu0 0.0
    %2146 = vmatprep.subr.mxu0 0.0
    %2147 = vmatpush1.msra.mxu0 0.0
    %2148 = vmatprep.subr.mxu0 0.0
    %2149 = vmatpush1.msra.mxu0 0.0
    %2150 = vmatprep.subr.mxu0 0.0
    %2151 = vmatpush1.msra.mxu0 0.0
    %2152 = vmatprep.subr.mxu0 0.0
    %2153 = vmatpush1.msra.mxu0 0.0
    %2154 = vmatprep.subr.mxu0 0.0
    %2155 = vmatpush1.msra.mxu0 0.0
    %2156 = vmatprep.subr.mxu0 0.0
    %2157 = vmatpush1.msra.mxu0 0.0
    %2158 = vmatprep.subr.mxu0 0.0
    %2159 = vmatpush1.msra.mxu0 0.0
    %2160 = vmatprep.mubr.f32.mxu0 0.0
    %2161 = vmatmul.mubr.f32.gmra.mrb[0].mxu0 %v2085
    %v2162 = vpop.f32.mrb[0].mxu0
    %v2163 = vadd.f32 0.0, %v2162
    %v2164 = vpop.f32.mrb[0].mxu0
    %2165 = vmatprep.mubr.f32.mxu0 0.0
    %2166 = vmatmul.mubr.f32.gmra.mrb[0].mxu0 %v2088
    %v2167 = vpop.f32.mrb[0].mxu0
    %v2168 = vadd.f32 0.0, %v2167
    %v2169 = vpop.f32.mrb[0].mxu0
    %2170 = vmatprep.mubr.f32.mxu0 0.0
    %2171 = vmatmul.mubr.f32.gmra.mrb[0].mxu0 %v2091
    %v2172 = vpop.f32.mrb[0].mxu0
    %v2173 = vadd.f32 0.0, %v2172
    %v2174 = vpop.f32.mrb[0].mxu0
    %2175 = vmatprep.mubr.f32.mxu0 0.0
    %2176 = vmatmul.mubr.f32.gmra.mrb[0].mxu0 %v2094
    %v2177 = vpop.f32.mrb[0].mxu0
    %v2178 = vadd.f32 0.0, %v2177
    %v2179 = vpop.f32.mrb[0].mxu0
    %2180 = vdwg.mxu0
    %v2182 = vsel %vm295, %v1851, 0
    %v2185 = vsel %vm295, %v1856, 0
    %v2188 = vsel %vm295, %v1926, 0
    %v2191 = vsel %vm295, %v1931, 0
    %2193 = vmatprep.subr.mxu0 0.0
    %2194 = vmatpush1.msra.mxu0 %v830
    %2195 = vmatprep.subr.mxu0 0.0
    %2196 = vmatpush1.msra.mxu0 %v831
    %2197 = vmatprep.subr.mxu0 0.0
    %2198 = vmatpush1.msra.mxu0 %v832
    %2199 = vmatprep.subr.mxu0 0.0
    %2200 = vmatpush1.msra.mxu0 %v833
    %2201 = vmatprep.subr.mxu0 0.0
    %2202 = vmatpush1.msra.mxu0 0.0
    %2203 = vmatprep.subr.mxu0 0.0
    %2204 = vmatpush1.msra.mxu0 0.0
    %2205 = vmatprep.subr.mxu0 0.0
    %2206 = vmatpush1.msra.mxu0 0.0
    %2207 = vmatprep.subr.mxu0 0.0
    %2208 = vmatpush1.msra.mxu0 0.0
    %2209 = vmatprep.subr.mxu0 0.0
    %2210 = vmatpush1.msra.mxu0 0.0
    %2211 = vmatprep.subr.mxu0 0.0
    %2212 = vmatpush1.msra.mxu0 0.0
    %2213 = vmatprep.subr.mxu0 0.0
    %2214 = vmatpush1.msra.mxu0 0.0
    %2215 = vmatprep.subr.mxu0 0.0
    %2216 = vmatpush1.msra.mxu0 0.0
    %2217 = vmatprep.subr.mxu0 0.0
    %2218 = vmatpush1.msra.mxu0 0.0
    %2219 = vmatprep.subr.mxu0 0.0
    %2220 = vmatpush1.msra.mxu0 0.0
    %2221 = vmatprep.subr.mxu0 0.0
    %2222 = vmatpush1.msra.mxu0 0.0
    %2223 = vmatprep.subr.mxu0 0.0
    %2224 = vmatpush1.msra.mxu0 0.0
    %2225 = vmatprep.subr.mxu0 0.0
    %2226 = vmatpush1.msra.mxu0 0.0
    %2227 = vmatprep.subr.mxu0 0.0
    %2228 = vmatpush1.msra.mxu0 0.0
    %2229 = vmatprep.subr.mxu0 0.0
    %2230 = vmatpush1.msra.mxu0 0.0
    %2231 = vmatprep.subr.mxu0 0.0
    %2232 = vmatpush1.msra.mxu0 0.0
    %2233 = vmatprep.subr.mxu0 0.0
    %2234 = vmatpush1.msra.mxu0 0.0
    %2235 = vmatprep.subr.mxu0 0.0
    %2236 = vmatpush1.msra.mxu0 0.0
    %2237 = vmatprep.subr.mxu0 0.0
    %2238 = vmatpush1.msra.mxu0 0.0
    %2239 = vmatprep.subr.mxu0 0.0
    %2240 = vmatpush1.msra.mxu0 0.0
    %2241 = vmatprep.subr.mxu0 0.0
    %2242 = vmatpush1.msra.mxu0 0.0
    %2243 = vmatprep.subr.mxu0 0.0
    %2244 = vmatpush1.msra.mxu0 0.0
    %2245 = vmatprep.subr.mxu0 0.0
    %2246 = vmatpush1.msra.mxu0 0.0
    %2247 = vmatprep.subr.mxu0 0.0
    %2248 = vmatpush1.msra.mxu0 0.0
    %2249 = vmatprep.subr.mxu0 0.0
    %2250 = vmatpush1.msra.mxu0 0.0
    %2251 = vmatprep.subr.mxu0 0.0
    %2252 = vmatpush1.msra.mxu0 0.0
    %2253 = vmatprep.subr.mxu0 0.0
    %2254 = vmatpush1.msra.mxu0 0.0
    %2255 = vmatprep.subr.mxu0 0.0
    %2256 = vmatpush1.msra.mxu0 0.0
    %2257 = vmatprep.mubr.f32.mxu0 0.0
    %2258 = vmatmul.mubr.f32.gmra.mrb[0].mxu0 %v2182
    %v2259 = vpop.f32.mrb[0].mxu0
    %v2260 = vadd.f32 %v2163, %v2259
    %v2261 = vpop.f32.mrb[0].mxu0
    %2262 = vmatprep.mubr.f32.mxu0 0.0
    %2263 = vmatmul.mubr.f32.gmra.mrb[0].mxu0 %v2185
    %v2264 = vpop.f32.mrb[0].mxu0
    %v2265 = vadd.f32 %v2168, %v2264
    %v2266 = vpop.f32.mrb[0].mxu0
    %2267 = vmatprep.mubr.f32.mxu0 0.0
    %2268 = vmatmul.mubr.f32.gmra.mrb[0].mxu0 %v2188
    %v2269 = vpop.f32.mrb[0].mxu0
    %v2270 = vadd.f32 %v2173, %v2269
    %v2271 = vpop.f32.mrb[0].mxu0
    %2272 = vmatprep.mubr.f32.mxu0 0.0
    %2273 = vmatmul.mubr.f32.gmra.mrb[0].mxu0 %v2191
    %v2274 = vpop.f32.mrb[0].mxu0
    %v2275 = vadd.f32 %v2178, %v2274
    %v2276 = vpop.f32.mrb[0].mxu0
    %2277 = vdwg.mxu0
    %v2278 = vadd.f32 %v2260, %v1037
    %v2279 = vadd.f32 %v2265, %v1037
    %v2280 = vadd.f32 %v2270, %v1037
    %v2281 = vadd.f32 %v2275, %v1037
    %v2282 = vadd.f32 %v2278, %v1750
    %v2283 = vadd.f32 %v2279, %v1755
    %v2284 = vadd.f32 %v2280, %v1760
    %v2285 = vadd.f32 %v2281, %v1765
    %v2286 = vxor.u32 %v2282, 2147483648
    %v2287 = vxor.u32 %v2283, 2147483648
    %v2288 = vxor.u32 %v2284, 2147483648
    %v2289 = vxor.u32 %v2285, 2147483648
    %v2290 = vmul.f32 %v2286, 1.442695
    %v2291 = vpow.pop %v2290
    %v2292 = vmul.f32 %v2287, 1.442695
    %v2293 = vpow.pop %v2292
    %v2294 = vmul.f32 %v2288, 1.442695
    %v2295 = vpow.pop %v2294
    %v2296 = vmul.f32 %v2289, 1.442695
    %v2297 = vpow.pop %v2296
    %v2298 = vadd.f32 %v2291, 1.0
    %v2299 = vadd.f32 %v2293, 1.0
    %v2300 = vadd.f32 %v2295, 1.0
    %v2301 = vadd.f32 %v2297, 1.0
    %v2302 = vrcp.pop %v2298
    %v2303 = vmul.f32 1.0, %v2302
    %v2304 = vrcp.pop %v2299
    %v2305 = vmul.f32 1.0, %v2304
    %v2306 = vrcp.pop %v2300
    %v2307 = vmul.f32 1.0, %v2306
    %v2308 = vrcp.pop %v2301
    %v2309 = vmul.f32 1.0, %v2308
    %2314 = vrot.lane.b32.xlu0 %v1750, 64
    %v2315 = vpop.permute.xlu0 %2314
    %2316 = vrot.lane.b32.xlu0 %v1755, 64
    %v2317 = vpop.permute.xlu0 %2316
    %2318 = vrot.lane.b32.xlu0 %v1760, 64
    %v2319 = vpop.permute.xlu0 %2318
    %2320 = vrot.lane.b32.xlu0 %v1765, 64
    %v2321 = vpop.permute.xlu0 %2320
    %v2326 = vmul.f32 %v2303, %v2315
    %v2327 = vmul.f32 %v2305, %v2317
    %v2328 = vmul.f32 %v2307, %v2319
    %v2329 = vmul.f32 %v2309, %v2321
    %2334 = vrot.lane.b32.xlu0 %v2278, 64
    %v2335 = vpop.permute.xlu0 %2334
    %2336 = vrot.lane.b32.xlu0 %v2279, 64
    %v2337 = vpop.permute.xlu0 %2336
    %2338 = vrot.lane.b32.xlu0 %v2280, 64
    %v2339 = vpop.permute.xlu0 %2338
    %2340 = vrot.lane.b32.xlu0 %v2281, 64
    %v2341 = vpop.permute.xlu0 %2340
    %v2346 = vadd.f32 %v2326, %v2335
    %v2347 = vadd.f32 %v2327, %v2337
    %v2348 = vadd.f32 %v2328, %v2339
    %v2349 = vadd.f32 %v2329, %v2341
    %v2350 = vtanh.pop %v2346
    %v2351 = vtanh.pop %v2347
    %v2352 = vtanh.pop %v2348
    %v2353 = vtanh.pop %v2349
    %v2354 = vsub.f32 1.0, %v2303
    %v2355 = vsub.f32 1.0, %v2305
    %v2356 = vsub.f32 1.0, %v2307
    %v2357 = vsub.f32 1.0, %v2309
    %2358 = vrot.lane.b32.xlu0 %v1368, 32
    %v2359 = vpop.permute.xlu0 %2358
    %2360 = vrot.lane.b32.xlu0 %v1369, 32
    %v2361 = vpop.permute.xlu0 %2360
    %2362 = vrot.lane.b32.xlu0 %v1370, 32
    %v2363 = vpop.permute.xlu0 %2362
    %2364 = vrot.lane.b32.xlu0 %v1371, 32
    %v2365 = vpop.permute.xlu0 %2364
    %v2370 = vmul.f32 %v2354, %v2359
    %v2371 = vmul.f32 %v2355, %v2361
    %v2372 = vmul.f32 %v2356, %v2363
    %v2373 = vmul.f32 %v2357, %v2365
    %2378 = vrot.lane.b32.xlu0 %v2350, 32
    %v2379 = vpop.permute.xlu0 %2378
    %2380 = vrot.lane.b32.xlu0 %v2351, 32
    %v2381 = vpop.permute.xlu0 %2380
    %2382 = vrot.lane.b32.xlu0 %v2352, 32
    %v2383 = vpop.permute.xlu0 %2382
    %2384 = vrot.lane.b32.xlu0 %v2353, 32
    %v2385 = vpop.permute.xlu0 %2384
    %v2390 = vmul.f32 %v2303, %v2379
    %v2391 = vmul.f32 %v2305, %v2381
    %v2392 = vmul.f32 %v2307, %v2383
    %v2393 = vmul.f32 %v2309, %v2385
    %v2394 = vadd.f32 %v2370, %v2390
    %v2395 = vadd.f32 %v2371, %v2391
    %v2396 = vadd.f32 %v2372, %v2392
    %v2397 = vadd.f32 %v2373, %v2393
    %v2398 = vmul.f32 %v2394, %v2394
    %v2399 = vmul.f32 %v2395, %v2395
    %v2400 = vmul.f32 %v2396, %v2396
    %v2401 = vmul.f32 %v2397, %v2397
    %2406 = vrot.lane.b32.xlu0 %v2398, 96
    %v2407 = vpop.permute.xlu0 %2406
    %2408 = vrot.lane.b32.xlu0 %v2399, 96
    %v2409 = vpop.permute.xlu0 %2408
    %2410 = vrot.lane.b32.xlu0 %v2400, 96
    %v2411 = vpop.permute.xlu0 %2410
    %2412 = vrot.lane.b32.xlu0 %v2401, 96
    %v2413 = vpop.permute.xlu0 %2412
    %v2418 = vsel %vm295, %v2407, 0.0
    %2419 = vadd.xlane.f32.xlu0 %v2418
    %v2420 = vpop.xlane.xlu0 %2419
    %v2421 = vsel %vm295, %v2409, 0.0
    %2422 = vadd.xlane.f32.xlu0 %v2421
    %v2423 = vpop.xlane.xlu0 %2422
    %v2424 = vsel %vm295, %v2411, 0.0
    %2425 = vadd.xlane.f32.xlu0 %v2424
    %v2426 = vpop.xlane.xlu0 %2425
    %v2427 = vsel %vm295, %v2413, 0.0
    %2428 = vadd.xlane.f32.xlu0 %v2427
    %v2429 = vpop.xlane.xlu0 %2428
    %v2430 = vmax.f32 %v2420, 1e-24
    %v2431 = vmax.f32 %v2423, 1e-24
    %v2432 = vmax.f32 %v2426, 1e-24
    %v2433 = vmax.f32 %v2429, 1e-24
    %v2434 = vrsqrt.pop %v2430
    %v2435 = vrsqrt.pop %v2431
    %v2436 = vrsqrt.pop %v2432
    %v2437 = vrsqrt.pop %v2433
    %v2438 = vmul.f32 %v2394, %v2434
    %v2439 = vmul.f32 %v2395, %v2435
    %v2440 = vmul.f32 %v2396, %v2436
    %v2441 = vmul.f32 %v2397, %v2437
    %2446 = vrot.lane.b32.xlu0 %v2438, 96
    %v2447 = vpop.permute.xlu0 %2446
    %2448 = vrot.lane.b32.xlu0 %v2439, 96
    %v2449 = vpop.permute.xlu0 %2448
    %2450 = vrot.lane.b32.xlu0 %v2440, 96
    %v2451 = vpop.permute.xlu0 %2450
    %2452 = vrot.lane.b32.xlu0 %v2441, 96
    %v2453 = vpop.permute.xlu0 %2452
    %v2458 = vadd.f32 %v1368, %v2447
    %v2459 = vadd.f32 %v1369, %v2449
    %v2460 = vadd.f32 %v1370, %v2451
    %v2461 = vadd.f32 %v1371, %v2453
    %v2463 = vsel %vm295, %v2458, 0
    %v2466 = vsel %vm295, %v2459, 0
    %v2469 = vsel %vm295, %v2460, 0
    %v2472 = vsel %vm295, %v2461, 0
    %2474 = vmatprep.subr.mxu0 0.0
    %2475 = vmatpush1.msra.mxu0 %v1223
    %2476 = vmatprep.subr.mxu0 0.0
    %2477 = vmatpush1.msra.mxu0 %v1224
    %2478 = vmatprep.subr.mxu0 0.0
    %2479 = vmatpush1.msra.mxu0 %v1225
    %2480 = vmatprep.subr.mxu0 0.0
    %2481 = vmatpush1.msra.mxu0 %v1226
    %2482 = vmatprep.subr.mxu0 0.0
    %2483 = vmatpush1.msra.mxu0 0.0
    %2484 = vmatprep.subr.mxu0 0.0
    %2485 = vmatpush1.msra.mxu0 0.0
    %2486 = vmatprep.subr.mxu0 0.0
    %2487 = vmatpush1.msra.mxu0 0.0
    %2488 = vmatprep.subr.mxu0 0.0
    %2489 = vmatpush1.msra.mxu0 0.0
    %2490 = vmatprep.subr.mxu0 0.0
    %2491 = vmatpush1.msra.mxu0 0.0
    %2492 = vmatprep.subr.mxu0 0.0
    %2493 = vmatpush1.msra.mxu0 0.0
    %2494 = vmatprep.subr.mxu0 0.0
    %2495 = vmatpush1.msra.mxu0 0.0
    %2496 = vmatprep.subr.mxu0 0.0
    %2497 = vmatpush1.msra.mxu0 0.0
    %2498 = vmatprep.subr.mxu0 0.0
    %2499 = vmatpush1.msra.mxu0 0.0
    %2500 = vmatprep.subr.mxu0 0.0
    %2501 = vmatpush1.msra.mxu0 0.0
    %2502 = vmatprep.subr.mxu0 0.0
    %2503 = vmatpush1.msra.mxu0 0.0
    %2504 = vmatprep.subr.mxu0 0.0
    %2505 = vmatpush1.msra.mxu0 0.0
    %2506 = vmatprep.subr.mxu0 0.0
    %2507 = vmatpush1.msra.mxu0 0.0
    %2508 = vmatprep.subr.mxu0 0.0
    %2509 = vmatpush1.msra.mxu0 0.0
    %2510 = vmatprep.subr.mxu0 0.0
    %2511 = vmatpush1.msra.mxu0 0.0
    %2512 = vmatprep.subr.mxu0 0.0
    %2513 = vmatpush1.msra.mxu0 0.0
    %2514 = vmatprep.subr.mxu0 0.0
    %2515 = vmatpush1.msra.mxu0 0.0
    %2516 = vmatprep.subr.mxu0 0.0
    %2517 = vmatpush1.msra.mxu0 0.0
    %2518 = vmatprep.subr.mxu0 0.0
    %2519 = vmatpush1.msra.mxu0 0.0
    %2520 = vmatprep.subr.mxu0 0.0
    %2521 = vmatpush1.msra.mxu0 0.0
    %2522 = vmatprep.subr.mxu0 0.0
    %2523 = vmatpush1.msra.mxu0 0.0
    %2524 = vmatprep.subr.mxu0 0.0
    %2525 = vmatpush1.msra.mxu0 0.0
    %2526 = vmatprep.subr.mxu0 0.0
    %2527 = vmatpush1.msra.mxu0 0.0
    %2528 = vmatprep.subr.mxu0 0.0
    %2529 = vmatpush1.msra.mxu0 0.0
    %2530 = vmatprep.subr.mxu0 0.0
    %2531 = vmatpush1.msra.mxu0 0.0
    %2532 = vmatprep.subr.mxu0 0.0
    %2533 = vmatpush1.msra.mxu0 0.0
    %2534 = vmatprep.subr.mxu0 0.0
    %2535 = vmatpush1.msra.mxu0 0.0
    %2536 = vmatprep.subr.mxu0 0.0
    %2537 = vmatpush1.msra.mxu0 0.0
    %2538 = vmatprep.mubr.f32.mxu0 0.0
    %2539 = vmatmul.mubr.f32.gmra.mrb[0].mxu0 %v2463
    %v2540 = vpop.f32.mrb[0].mxu0
    %v2541 = vadd.f32 0.0, %v2540
    %v2542 = vpop.f32.mrb[0].mxu0
    %2543 = vmatprep.mubr.f32.mxu0 0.0
    %2544 = vmatmul.mubr.f32.gmra.mrb[0].mxu0 %v2466
    %v2545 = vpop.f32.mrb[0].mxu0
    %v2546 = vadd.f32 0.0, %v2545
    %v2547 = vpop.f32.mrb[0].mxu0
    %2548 = vmatprep.mubr.f32.mxu0 0.0
    %2549 = vmatmul.mubr.f32.gmra.mrb[0].mxu0 %v2469
    %v2550 = vpop.f32.mrb[0].mxu0
    %v2551 = vadd.f32 0.0, %v2550
    %v2552 = vpop.f32.mrb[0].mxu0
    %2553 = vmatprep.mubr.f32.mxu0 0.0
    %2554 = vmatmul.mubr.f32.gmra.mrb[0].mxu0 %v2472
    %v2555 = vpop.f32.mrb[0].mxu0
    %v2556 = vadd.f32 0.0, %v2555
    %v2557 = vpop.f32.mrb[0].mxu0
    %2558 = vdwg.mxu0
    %v2559 = vmul.f32 %v2541, %v1588
    %v2560 = vmul.f32 %v2546, %v1588
    %v2561 = vmul.f32 %v2551, %v1597
    %v2562 = vmul.f32 %v2556, %v1597
    %v2563 = vsel %vm295, %v2559, 0.0
    %2564 = vadd.xlane.f32.xlu0 %v2563
    %v2565 = vpop.xlane.xlu0 %2564
    %v2566 = vsel %vm295, %v2560, 0.0
    %2567 = vadd.xlane.f32.xlu0 %v2566
    %v2568 = vpop.xlane.xlu0 %2567
    %v2569 = vsel %vm295, %v2561, 0.0
    %2570 = vadd.xlane.f32.xlu0 %v2569
    %v2571 = vpop.xlane.xlu0 %2570
    %v2572 = vsel %vm295, %v2562, 0.0
    %2573 = vadd.xlane.f32.xlu0 %v2572
    %v2574 = vpop.xlane.xlu0 %2573
    %v2575 = vmul.f32 %v2565, 0.17677669
    %v2576 = vmul.f32 %v2568, 0.17677669
    %v2577 = vmul.f32 %v2571, 0.17677669
    %v2578 = vmul.f32 %v2574, 0.17677669
    %v2579 = vsub.f32 1.0, %v2575
    %v2580 = vsub.f32 1.0, %v2576
    %v2581 = vsub.f32 1.0, %v2577
    %v2582 = vsub.f32 1.0, %v2578
    %v2583 = vmul.f32 %v2579, %v2458
    %v2584 = vmul.f32 %v2580, %v2459
    %v2585 = vmul.f32 %v2581, %v2460
    %v2586 = vmul.f32 %v2582, %v2461
    %v2587 = vmul.f32 %v2575, %v1588
    %v2588 = vmul.f32 %v2576, %v1588
    %v2589 = vmul.f32 %v2577, %v1597
    %v2590 = vmul.f32 %v2578, %v1597
    %v2591 = vadd.f32 %v2583, %v2587
    %v2592 = vadd.f32 %v2584, %v2588
    %v2593 = vadd.f32 %v2585, %v2589
    %v2594 = vadd.f32 %v2586, %v2590
    %v2596 = vsel %vm295, %v2591, 0
    %v2599 = vsel %vm295, %v2592, 0
    %v2602 = vsel %vm295, %v2593, 0
    %v2605 = vsel %vm295, %v2594, 0
    %2607 = vmatprep.subr.mxu0 0.0
    %2608 = vmatpush1.msra.mxu0 %v1372
    %2609 = vmatprep.subr.mxu0 0.0
    %2610 = vmatpush1.msra.mxu0 %v1373
    %2611 = vmatprep.subr.mxu0 0.0
    %2612 = vmatpush1.msra.mxu0 %v1374
    %2613 = vmatprep.subr.mxu0 0.0
    %2614 = vmatpush1.msra.mxu0 %v1375
    %2615 = vmatprep.subr.mxu0 0.0
    %2616 = vmatpush1.msra.mxu0 0.0
    %2617 = vmatprep.subr.mxu0 0.0
    %2618 = vmatpush1.msra.mxu0 0.0
    %2619 = vmatprep.subr.mxu0 0.0
    %2620 = vmatpush1.msra.mxu0 0.0
    %2621 = vmatprep.subr.mxu0 0.0
    %2622 = vmatpush1.msra.mxu0 0.0
    %2623 = vmatprep.subr.mxu0 0.0
    %2624 = vmatpush1.msra.mxu0 0.0
    %2625 = vmatprep.subr.mxu0 0.0
    %2626 = vmatpush1.msra.mxu0 0.0
    %2627 = vmatprep.subr.mxu0 0.0
    %2628 = vmatpush1.msra.mxu0 0.0
    %2629 = vmatprep.subr.mxu0 0.0
    %2630 = vmatpush1.msra.mxu0 0.0
    %2631 = vmatprep.subr.mxu0 0.0
    %2632 = vmatpush1.msra.mxu0 0.0
    %2633 = vmatprep.subr.mxu0 0.0
    %2634 = vmatpush1.msra.mxu0 0.0
    %2635 = vmatprep.subr.mxu0 0.0
    %2636 = vmatpush1.msra.mxu0 0.0
    %2637 = vmatprep.subr.mxu0 0.0
    %2638 = vmatpush1.msra.mxu0 0.0
    %2639 = vmatprep.subr.mxu0 0.0
    %2640 = vmatpush1.msra.mxu0 0.0
    %2641 = vmatprep.subr.mxu0 0.0
    %2642 = vmatpush1.msra.mxu0 0.0
    %2643 = vmatprep.subr.mxu0 0.0
    %2644 = vmatpush1.msra.mxu0 0.0
    %2645 = vmatprep.subr.mxu0 0.0
    %2646 = vmatpush1.msra.mxu0 0.0
    %2647 = vmatprep.subr.mxu0 0.0
    %2648 = vmatpush1.msra.mxu0 0.0
    %2649 = vmatprep.subr.mxu0 0.0
    %2650 = vmatpush1.msra.mxu0 0.0
    %2651 = vmatprep.subr.mxu0 0.0
    %2652 = vmatpush1.msra.mxu0 0.0
    %2653 = vmatprep.subr.mxu0 0.0
    %2654 = vmatpush1.msra.mxu0 0.0
    %2655 = vmatprep.subr.mxu0 0.0
    %2656 = vmatpush1.msra.mxu0 0.0
    %2657 = vmatprep.subr.mxu0 0.0
    %2658 = vmatpush1.msra.mxu0 0.0
    %2659 = vmatprep.subr.mxu0 0.0
    %2660 = vmatpush1.msra.mxu0 0.0
    %2661 = vmatprep.subr.mxu0 0.0
    %2662 = vmatpush1.msra.mxu0 0.0
    %2663 = vmatprep.subr.mxu0 0.0
    %2664 = vmatpush1.msra.mxu0 0.0
    %2665 = vmatprep.subr.mxu0 0.0
    %2666 = vmatpush1.msra.mxu0 0.0
    %2667 = vmatprep.subr.mxu0 0.0
    %2668 = vmatpush1.msra.mxu0 0.0
    %2669 = vmatprep.subr.mxu0 0.0
    %2670 = vmatpush1.msra.mxu0 0.0
    %2671 = vmatprep.mubr.f32.mxu0 0.0
    %2672 = vmatmul.mubr.f32.gmra.mrb[0].mxu0 %v2596
    %v2673 = vpop.f32.mrb[0].mxu0
    %v2674 = vadd.f32 0.0, %v2673
    %v2675 = vpop.f32.mrb[0].mxu0
    %2676 = vmatprep.mubr.f32.mxu0 0.0
    %2677 = vmatmul.mubr.f32.gmra.mrb[0].mxu0 %v2599
    %v2678 = vpop.f32.mrb[0].mxu0
    %v2679 = vadd.f32 0.0, %v2678
    %v2680 = vpop.f32.mrb[0].mxu0
    %2681 = vmatprep.mubr.f32.mxu0 0.0
    %2682 = vmatmul.mubr.f32.gmra.mrb[0].mxu0 %v2602
    %v2683 = vpop.f32.mrb[0].mxu0
    %v2684 = vadd.f32 0.0, %v2683
    %v2685 = vpop.f32.mrb[0].mxu0
    %2686 = vmatprep.mubr.f32.mxu0 0.0
    %2687 = vmatmul.mubr.f32.gmra.mrb[0].mxu0 %v2605
    %v2688 = vpop.f32.mrb[0].mxu0
    %v2689 = vadd.f32 0.0, %v2688
    %v2690 = vpop.f32.mrb[0].mxu0
    %2691 = vdwg.mxu0
    %v2692 = vmul.f32 %v2674, %v1588
    %v2693 = vmul.f32 %v2679, %v1588
    %v2694 = vmul.f32 %v2684, %v1597
    %v2695 = vmul.f32 %v2689, %v1597
    %v2696 = vsel %vm295, %v2692, 0.0
    %2697 = vadd.xlane.f32.xlu0 %v2696
    %v2698 = vpop.xlane.xlu0 %2697
    %v2699 = vsel %vm295, %v2693, 0.0
    %2700 = vadd.xlane.f32.xlu0 %v2699
    %v2701 = vpop.xlane.xlu0 %2700
    %v2702 = vsel %vm295, %v2694, 0.0
    %2703 = vadd.xlane.f32.xlu0 %v2702
    %v2704 = vpop.xlane.xlu0 %2703
    %v2705 = vsel %vm295, %v2695, 0.0
    %2706 = vadd.xlane.f32.xlu0 %v2705
    %v2707 = vpop.xlane.xlu0 %2706
    %v2708 = vmul.f32 %v2698, 0.17677669
    %v2709 = vmul.f32 %v2701, 0.17677669
    %v2710 = vmul.f32 %v2704, 0.17677669
    %v2711 = vmul.f32 %v2707, 0.17677669
    %v2712 = vsel %vm1493, -inf, %v2708
    %v2713 = vsel %vm1494, -inf, %v2709
    %v2714 = vsel %vm1495, -inf, %v2710
    %v2715 = vsel %vm1496, -inf, %v2711
    %v2716 = vsel %vm1501, %v2712, -inf
    %v2717 = vsel %vm1501, %v2713, -inf
    %v2718 = vmax.f32 %v2716, %v2717
    %v2719 = vrot.slane %v2718, 4
    %v2720 = vmax.f32 %v2718, %v2719
    %v2721 = vrot.slane %v2720, 2
    %v2722 = vmax.f32 %v2720, %v2721
    %v2723 = vrot.slane %v2722, 1
    %v2724 = vmax.f32 %v2722, %v2723
    %v2725 = vsel %vm1501, %v2714, -inf
    %v2726 = vsel %vm1501, %v2715, -inf
    %v2727 = vmax.f32 %v2725, %v2726
    %v2728 = vrot.slane %v2727, 4
    %v2729 = vmax.f32 %v2727, %v2728
    %v2730 = vrot.slane %v2729, 2
    %v2731 = vmax.f32 %v2729, %v2730
    %v2732 = vrot.slane %v2731, 1
    %v2733 = vmax.f32 %v2731, %v2732
    %v2734 = vsub.f32 %v2712, %v2724
    %v2735 = vsub.f32 %v2713, %v2724
    %v2736 = vsub.f32 %v2714, %v2733
    %v2737 = vsub.f32 %v2715, %v2733
    %v2738 = vmul.f32 %v2734, 1.442695
    %v2739 = vpow.pop %v2738
    %v2740 = vmul.f32 %v2735, 1.442695
    %v2741 = vpow.pop %v2740
    %v2742 = vmul.f32 %v2736, 1.442695
    %v2743 = vpow.pop %v2742
    %v2744 = vmul.f32 %v2737, 1.442695
    %v2745 = vpow.pop %v2744
    %v2746 = vsel %vm1501, %v2739, 0.0
    %v2747 = vsel %vm1501, %v2741, 0.0
    %v2748 = vadd.f32 %v2746, %v2747
    %v2749 = vrot.slane %v2748, 4
    %v2750 = vadd.f32 %v2748, %v2749
    %v2751 = vrot.slane %v2750, 2
    %v2752 = vadd.f32 %v2750, %v2751
    %v2753 = vrot.slane %v2752, 1
    %v2754 = vadd.f32 %v2752, %v2753
    %v2755 = vsel %vm1501, %v2743, 0.0
    %v2756 = vsel %vm1501, %v2745, 0.0
    %v2757 = vadd.f32 %v2755, %v2756
    %v2758 = vrot.slane %v2757, 4
    %v2759 = vadd.f32 %v2757, %v2758
    %v2760 = vrot.slane %v2759, 2
    %v2761 = vadd.f32 %v2759, %v2760
    %v2762 = vrot.slane %v2761, 1
    %v2763 = vadd.f32 %v2761, %v2762
    %v2764 = vrcp.pop %v2754
    %v2765 = vmul.f32 %v2739, %v2764
    %v2766 = vmul.f32 %v2741, %v2764
    %v2767 = vrcp.pop %v2763
    %v2768 = vmul.f32 %v2743, %v2767
    %v2769 = vmul.f32 %v2745, %v2767
    %2771 = vset.pattern.permute.xlu0 0
    %2772 = vperm.xlu0 %2771, %v2765
    %v2773 = vpop.permute.xlu0 %2772
    %2776 = vset.pattern.permute.xlu0 0
    %2777 = vperm.xlu0 %2776, %v2766
    %v2778 = vpop.permute.xlu0 %2777
    %2781 = vset.pattern.permute.xlu0 0
    %2782 = vperm.xlu0 %2781, %v2768
    %v2783 = vpop.permute.xlu0 %2782
    %2786 = vset.pattern.permute.xlu0 0
    %2787 = vperm.xlu0 %2786, %v2769
    %v2788 = vpop.permute.xlu0 %2787
    %v2790 = vmul.f32 %v2773, %v2591
    %v2791 = vmul.f32 %v2778, %v2592
    %v2792 = vmul.f32 %v2783, %v2593
    %v2793 = vmul.f32 %v2788, %v2594
    %v2794 = vsel %vm295, %v2790, 0.0
    %v2795 = vsel %vm295, %v2791, 0.0
    %v2796 = vadd.f32 %v2794, %v2795
    %v2797 = vrot.slane %v2796, 4
    %v2798 = vadd.f32 %v2796, %v2797
    %v2799 = vrot.slane %v2798, 2
    %v2800 = vadd.f32 %v2798, %v2799
    %v2801 = vrot.slane %v2800, 1
    %v2802 = vadd.f32 %v2800, %v2801
    %v2803 = vsel %vm295, %v2792, 0.0
    %v2804 = vsel %vm295, %v2793, 0.0
    %v2805 = vadd.f32 %v2803, %v2804
    %v2806 = vrot.slane %v2805, 4
    %v2807 = vadd.f32 %v2805, %v2806
    %v2808 = vrot.slane %v2807, 2
    %v2809 = vadd.f32 %v2807, %v2808
    %v2810 = vrot.slane %v2809, 1
    %v2811 = vadd.f32 %v2809, %v2810
    %v2812 = vld [vmem:[#allocation23] sm:$0xff]
    %v2813 = vld [vmem:[#allocation23 + $0x8] sm:$0xff]
    %v2814 = vld [vmem:[#allocation23 + $0x10] sm:$0xff]
    %v2815 = vld [vmem:[#allocation23 + $0x18] sm:$0xff]
    %v2816 = vld [vmem:[#allocation25] sm:$0xff]
    %v2817 = vld [vmem:[#allocation25 + $0x8] sm:$0xff]
    %v2818 = vld [vmem:[#allocation25 + $0x10] sm:$0xff]
    %v2819 = vld [vmem:[#allocation25 + $0x18] sm:$0xff]
    %2820 = vmatprep.subr.mxu0 0.0
    %2821 = vmatpush1.msra.mxu0 %v2816
    %2822 = vmatprep.subr.mxu0 0.0
    %2823 = vmatpush1.msra.mxu0 %v2817
    %2824 = vmatprep.subr.mxu0 0.0
    %2825 = vmatpush1.msra.mxu0 %v2818
    %2826 = vmatprep.subr.mxu0 0.0
    %2827 = vmatpush1.msra.mxu0 %v2819
    %2828 = vmatprep.subr.mxu0 0.0
    %2829 = vmatpush1.msra.mxu0 0.0
    %2830 = vmatprep.subr.mxu0 0.0
    %2831 = vmatpush1.msra.mxu0 0.0
    %2832 = vmatprep.subr.mxu0 0.0
    %2833 = vmatpush1.msra.mxu0 0.0
    %2834 = vmatprep.subr.mxu0 0.0
    %2835 = vmatpush1.msra.mxu0 0.0
    %2836 = vmatprep.subr.mxu0 0.0
    %2837 = vmatpush1.msra.mxu0 0.0
    %2838 = vmatprep.subr.mxu0 0.0
    %2839 = vmatpush1.msra.mxu0 0.0
    %2840 = vmatprep.subr.mxu0 0.0
    %2841 = vmatpush1.msra.mxu0 0.0
    %2842 = vmatprep.subr.mxu0 0.0
    %2843 = vmatpush1.msra.mxu0 0.0
    %2844 = vmatprep.subr.mxu0 0.0
    %2845 = vmatpush1.msra.mxu0 0.0
    %2846 = vmatprep.subr.mxu0 0.0
    %2847 = vmatpush1.msra.mxu0 0.0
    %2848 = vmatprep.subr.mxu0 0.0
    %2849 = vmatpush1.msra.mxu0 0.0
    %2850 = vmatprep.subr.mxu0 0.0
    %2851 = vmatpush1.msra.mxu0 0.0
    %2852 = vmatprep.subr.mxu0 0.0
    %2853 = vmatpush1.msra.mxu0 0.0
    %2854 = vmatprep.subr.mxu0 0.0
    %2855 = vmatpush1.msra.mxu0 0.0
    %2856 = vmatprep.subr.mxu0 0.0
    %2857 = vmatpush1.msra.mxu0 0.0
    %2858 = vmatprep.subr.mxu0 0.0
    %2859 = vmatpush1.msra.mxu0 0.0
    %2860 = vmatprep.subr.mxu0 0.0
    %2861 = vmatpush1.msra.mxu0 0.0
    %2862 = vmatprep.subr.mxu0 0.0
    %2863 = vmatpush1.msra.mxu0 0.0
    %2864 = vmatprep.subr.mxu0 0.0
    %2865 = vmatpush1.msra.mxu0 0.0
    %2866 = vmatprep.subr.mxu0 0.0
    %2867 = vmatpush1.msra.mxu0 0.0
    %2868 = vmatprep.subr.mxu0 0.0
    %2869 = vmatpush1.msra.mxu0 0.0
    %2870 = vmatprep.subr.mxu0 0.0
    %2871 = vmatpush1.msra.mxu0 0.0
    %2872 = vmatprep.subr.mxu0 0.0
    %2873 = vmatpush1.msra.mxu0 0.0
    %2874 = vmatprep.subr.mxu0 0.0
    %2875 = vmatpush1.msra.mxu0 0.0
    %2876 = vmatprep.subr.mxu0 0.0
    %2877 = vmatpush1.msra.mxu0 0.0
    %2878 = vmatprep.subr.mxu0 0.0
    %2879 = vmatpush1.msra.mxu0 0.0
    %2880 = vmatprep.subr.mxu0 0.0
    %2881 = vmatpush1.msra.mxu0 0.0
    %2882 = vmatprep.subr.mxu0 0.0
    %2883 = vmatpush1.msra.mxu0 0.0
    %2884 = vmatprep.mubr.f32.mxu0 0.0
    %2885 = vmatmul.mubr.f32.gmra.mrb[0].mxu0 %v2596
    %v2886 = vpop.f32.mrb[0].mxu0
    %v2887 = vadd.f32 0.0, %v2886
    %v2888 = vpop.f32.mrb[0].mxu0
    %2889 = vmatprep.mubr.f32.mxu0 0.0
    %2890 = vmatmul.mubr.f32.gmra.mrb[0].mxu0 %v2599
    %v2891 = vpop.f32.mrb[0].mxu0
    %v2892 = vadd.f32 0.0, %v2891
    %v2893 = vpop.f32.mrb[0].mxu0
    %2894 = vmatprep.mubr.f32.mxu0 0.0
    %2895 = vmatmul.mubr.f32.gmra.mrb[0].mxu0 %v2602
    %v2896 = vpop.f32.mrb[0].mxu0
    %v2897 = vadd.f32 0.0, %v2896
    %v2898 = vpop.f32.mrb[0].mxu0
    %2899 = vmatprep.mubr.f32.mxu0 0.0
    %2900 = vmatmul.mubr.f32.gmra.mrb[0].mxu0 %v2605
    %v2901 = vpop.f32.mrb[0].mxu0
    %v2902 = vadd.f32 0.0, %v2901
    %v2903 = vpop.f32.mrb[0].mxu0
    %2904 = vdwg.mxu0
    %2905 = vmatprep.subr.mxu0 0.0
    %2906 = vmatpush1.msra.mxu0 %v2812
    %2907 = vmatprep.subr.mxu0 0.0
    %2908 = vmatpush1.msra.mxu0 %v2813
    %2909 = vmatprep.subr.mxu0 0.0
    %2910 = vmatpush1.msra.mxu0 %v2814
    %2911 = vmatprep.subr.mxu0 0.0
    %2912 = vmatpush1.msra.mxu0 %v2815
    %2913 = vmatprep.subr.mxu0 0.0
    %2914 = vmatpush1.msra.mxu0 0.0
    %2915 = vmatprep.subr.mxu0 0.0
    %2916 = vmatpush1.msra.mxu0 0.0
    %2917 = vmatprep.subr.mxu0 0.0
    %2918 = vmatpush1.msra.mxu0 0.0
    %2919 = vmatprep.subr.mxu0 0.0
    %2920 = vmatpush1.msra.mxu0 0.0
    %2921 = vmatprep.subr.mxu0 0.0
    %2922 = vmatpush1.msra.mxu0 0.0
    %2923 = vmatprep.subr.mxu0 0.0
    %2924 = vmatpush1.msra.mxu0 0.0
    %2925 = vmatprep.subr.mxu0 0.0
    %2926 = vmatpush1.msra.mxu0 0.0
    %2927 = vmatprep.subr.mxu0 0.0
    %2928 = vmatpush1.msra.mxu0 0.0
    %2929 = vmatprep.subr.mxu0 0.0
    %2930 = vmatpush1.msra.mxu0 0.0
    %2931 = vmatprep.subr.mxu0 0.0
    %2932 = vmatpush1.msra.mxu0 0.0
    %2933 = vmatprep.subr.mxu0 0.0
    %2934 = vmatpush1.msra.mxu0 0.0
    %2935 = vmatprep.subr.mxu0 0.0
    %2936 = vmatpush1.msra.mxu0 0.0
    %2937 = vmatprep.subr.mxu0 0.0
    %2938 = vmatpush1.msra.mxu0 0.0
    %2939 = vmatprep.subr.mxu0 0.0
    %2940 = vmatpush1.msra.mxu0 0.0
    %2941 = vmatprep.subr.mxu0 0.0
    %2942 = vmatpush1.msra.mxu0 0.0
    %2943 = vmatprep.subr.mxu0 0.0
    %2944 = vmatpush1.msra.mxu0 0.0
    %2945 = vmatprep.subr.mxu0 0.0
    %2946 = vmatpush1.msra.mxu0 0.0
    %2947 = vmatprep.subr.mxu0 0.0
    %2948 = vmatpush1.msra.mxu0 0.0
    %2949 = vmatprep.subr.mxu0 0.0
    %2950 = vmatpush1.msra.mxu0 0.0
    %2951 = vmatprep.subr.mxu0 0.0
    %2952 = vmatpush1.msra.mxu0 0.0
    %2953 = vmatprep.subr.mxu0 0.0
    %2954 = vmatpush1.msra.mxu0 0.0
    %2955 = vmatprep.subr.mxu0 0.0
    %2956 = vmatpush1.msra.mxu0 0.0
    %2957 = vmatprep.subr.mxu0 0.0
    %2958 = vmatpush1.msra.mxu0 0.0
    %2959 = vmatprep.subr.mxu0 0.0
    %2960 = vmatpush1.msra.mxu0 0.0
    %2961 = vmatprep.subr.mxu0 0.0
    %2962 = vmatpush1.msra.mxu0 0.0
    %2963 = vmatprep.subr.mxu0 0.0
    %2964 = vmatpush1.msra.mxu0 0.0
    %2965 = vmatprep.subr.mxu0 0.0
    %2966 = vmatpush1.msra.mxu0 0.0
    %2967 = vmatprep.subr.mxu0 0.0
    %2968 = vmatpush1.msra.mxu0 0.0
    %2969 = vmatprep.mubr.f32.mxu0 0.0
    %2970 = vmatmul.mubr.f32.gmra.mrb[0].mxu0 %v297
    %v2971 = vpop.f32.mrb[0].mxu0
    %v2972 = vadd.f32 %v2887, %v2971
    %v2973 = vpop.f32.mrb[0].mxu0
    %2974 = vmatprep.mubr.f32.mxu0 0.0
    %2975 = vmatmul.mubr.f32.gmra.mrb[0].mxu0 %v300
    %v2976 = vpop.f32.mrb[0].mxu0
    %v2977 = vadd.f32 %v2892, %v2976
    %v2978 = vpop.f32.mrb[0].mxu0
    %2979 = vmatprep.mubr.f32.mxu0 0.0
    %2980 = vmatmul.mubr.f32.gmra.mrb[0].mxu0 %v303
    %v2981 = vpop.f32.mrb[0].mxu0
    %v2982 = vadd.f32 %v2897, %v2981
    %v2983 = vpop.f32.mrb[0].mxu0
    %2984 = vmatprep.mubr.f32.mxu0 0.0
    %2985 = vmatmul.mubr.f32.gmra.mrb[0].mxu0 %v306
    %v2986 = vpop.f32.mrb[0].mxu0
    %v2987 = vadd.f32 %v2902, %v2986
    %v2988 = vpop.f32.mrb[0].mxu0
    %2989 = vdwg.mxu0
    %v2990 = vld [vmem:[#allocation26] sm:$0x1]
    %v2992 = vlaneseq
    %v2993 = vshrl.u32 %v2992, 7
    %v2994 = vsub.s32 0, %v2993
    %v2995 = vrot.slane %v2990, %v2994
    %v2997 = vadd.f32 %v2972, %v2995
    %v2998 = vadd.f32 %v2977, %v2995
    %v2999 = vadd.f32 %v2982, %v2995
    %v3000 = vadd.f32 %v2987, %v2995
    %v3001 = vxor.u32 %v2997, 2147483648
    %v3002 = vxor.u32 %v2998, 2147483648
    %v3003 = vxor.u32 %v2999, 2147483648
    %v3004 = vxor.u32 %v3000, 2147483648
    %v3005 = vmul.f32 %v3001, 1.442695
    %v3006 = vpow.pop %v3005
    %v3007 = vmul.f32 %v3002, 1.442695
    %v3008 = vpow.pop %v3007
    %v3009 = vmul.f32 %v3003, 1.442695
    %v3010 = vpow.pop %v3009
    %v3011 = vmul.f32 %v3004, 1.442695
    %v3012 = vpow.pop %v3011
    %v3013 = vadd.f32 %v3006, 1.0
    %v3014 = vadd.f32 %v3008, 1.0
    %v3015 = vadd.f32 %v3010, 1.0
    %v3016 = vadd.f32 %v3012, 1.0
    %v3017 = vrcp.pop %v3013
    %v3018 = vmul.f32 1.0, %v3017
    %v3019 = vrcp.pop %v3014
    %v3020 = vmul.f32 1.0, %v3019
    %v3021 = vrcp.pop %v3015
    %v3022 = vmul.f32 1.0, %v3021
    %v3023 = vrcp.pop %v3016
    %v3024 = vmul.f32 1.0, %v3023
    %v3025 = vmul.f32 %v3018, %v274
    %v3026 = vmul.f32 %v3020, %v275
    %v3027 = vmul.f32 %v3022, %v276
    %v3028 = vmul.f32 %v3024, %v277
    %v3029 = vsub.f32 1.0, %v3018
    %v3030 = vsub.f32 1.0, %v3020
    %v3031 = vsub.f32 1.0, %v3022
    %v3032 = vsub.f32 1.0, %v3024
    %v3033 = vmul.f32 %v3029, %v2591
    %v3034 = vmul.f32 %v3030, %v2592
    %v3035 = vmul.f32 %v3031, %v2593
    %v3036 = vmul.f32 %v3032, %v2594
    %v3037 = vadd.f32 %v3025, %v3033
    %v3038 = vadd.f32 %v3026, %v3034
    %v3039 = vadd.f32 %v3027, %v3035
    %v3040 = vadd.f32 %v3028, %v3036
    %3041 = vst.msk [vmem:[#allocation28] sm:$0xff] %vm295, %v3037
    %3042 = vst.msk [vmem:[#allocation28 + $0x8] sm:$0xff] %vm295, %v3038
    %3043 = vst.msk [vmem:[#allocation28 + $0x10] sm:$0xff] %vm295, %v3039
    %3044 = vst.msk [vmem:[#allocation28 + $0x18] sm:$0xff] %vm295, %v3040
    %vm3045 = vcmask 253952
    %3046 = vst.msk [vmem:[#allocation29] sm:$0x1] %vm3045, %v2802
    %3047 = vst.msk [vmem:[#allocation29 + $0x1] sm:$0x1] %vm3045, %v2811
    // Predicated region
    $region130: #{tpu_custom_call.1} parent=1 // pred_check
      _
    $region131: #{tpu_custom_call.1} parent=1 // pred_check_branch
      %3049 = sbr.rel (0) target = $region133
    $region132: #{tpu_custom_call.1} parent=1 // pred_region
      %s3051 = ssub.s32 512, 512
      %3052 = vsyncadd [#allocation4], %s3051
      %s3053 = sshll.u32 [#allocation28], 4
      %s3054 = int_to_ptr.vmem [resolvable:$true] %s3053
      %3059 = dma.vmem_to_hbm [thread:$0]  %s3054, 512, %s16, [#allocation4], 128, 128, 8
    $region133: #{tpu_custom_call.1} parent=1 // pred_fallthru
      _
    // Predicated region
    $region134: #{tpu_custom_call.1} parent=1 // pred_check
      _
    $region135: #{tpu_custom_call.1} parent=1 // pred_check_branch
      %3061 = sbr.rel (0) target = $region137
    $region136: #{tpu_custom_call.1} parent=1 // pred_region
      %s3063 = ssub.s32 32, 32
      %3064 = vsyncadd [#allocation30], %s3063
      %s3065 = sshll.u32 [#allocation29], 4
      %s3066 = int_to_ptr.vmem [resolvable:$true] %s3065
      %3071 = dma.vmem_to_hbm [thread:$0]  %s3066, 32, %s17, [#allocation30], 16, 16, 1
    $region137: #{tpu_custom_call.1} parent=1 // pred_fallthru
      _
    // Predicated region
    $region138: #{tpu_custom_call.1} parent=1 // pred_check
      _
    $region139: #{tpu_custom_call.1} parent=1 // pred_check_branch
      %3073 = sbr.rel (0) target = $region141
    $region140: #{tpu_custom_call.1} parent=1 // pred_region
      %3074 = dma.done [#allocation4], 512
    $region141: #{tpu_custom_call.1} parent=1 // pred_fallthru
      _
    // Predicated region
    $region142: #{tpu_custom_call.1} parent=1 // pred_check
      _
    $region143: #{tpu_custom_call.1} parent=1 // pred_check_branch
      %3076 = sbr.rel (0) target = $region145
    $region144: #{tpu_custom_call.1} parent=1 // pred_region
      %3077 = dma.done [#allocation30], 32
    $region145: #{tpu_custom_call.1} parent=1 // pred_fallthru
      _
    %3078 = vsyncpa [#allocation3], 1
    %3079 = vsyncpa [#allocation6], 1
    %3080 = vsyncpa [#allocation9], 1
    %3081 = vsyncpa [#allocation12], 1
    %3082 = vsyncpa [#allocation15], 1
    %3083 = vsyncpa [#allocation18], 1
    %3084 = vsyncpa [#allocation21], 1
    %3085 = vsyncpa [#allocation24], 1
    %3086 = vsyncpa [#allocation27], 1
    %3087 = vsyncpa [#allocation4], 1
    %3088 = vsyncpa [#allocation30], 1

</llo_original>
